<compile_context>
chip_gen: v7x
topology: tpu7x:2x2x1
jax: 0.10.0
libtpu: 0.0.40
codegen_flags: <defaults>
</compile_context>

<pallas_src>
import functools

import numpy as np

import jax
import jax.numpy as jnp
from jax.experimental import pallas as pl
from jax.experimental.pallas import tpu as pltpu


CP = 128          # padded channel width (lane-dense activations)

IN_CH = 4
STEM = 16
C_HI = 16
C_LO = 32
NUM_CLASSES = 5


def _round_up(x, m):
    return ((x + m - 1) // m) * m


# ----------------------------------------------------------------------------
# Tiled fused matmul kernel:  out = relu((A @ B) + shift [+ residual])
# A, B are bf16 on the MXU; accumulation in f32 VMEM scratch.
# ----------------------------------------------------------------------------
def _mm_kernel(a_ref, b_ref, shift_ref, o_ref, acc_ref, *, relu):
    k = pl.program_id(2)

    @pl.when(k == 0)
    def _():
        acc_ref[...] = jnp.zeros_like(acc_ref)

    acc_ref[...] += jnp.dot(a_ref[...], b_ref[...],
                            preferred_element_type=jnp.float32)

    @pl.when(k == pl.num_programs(2) - 1)
    def _():
        out = acc_ref[...] + shift_ref[...]
        if relu:
            out = jnp.maximum(out, 0.0)
        o_ref[...] = out.astype(o_ref.dtype)


def _mm_res_kernel(a_ref, b_ref, shift_ref, res_ref, o_ref, acc_ref, *, relu):
    k = pl.program_id(2)

    @pl.when(k == 0)
    def _():
        acc_ref[...] = jnp.zeros_like(acc_ref)

    acc_ref[...] += jnp.dot(a_ref[...], b_ref[...],
                            preferred_element_type=jnp.float32)

    @pl.when(k == pl.num_programs(2) - 1)
    def _():
        out = acc_ref[...] + shift_ref[...] + res_ref[...]
        if relu:
            out = jnp.maximum(out, 0.0)
        o_ref[...] = out.astype(o_ref.dtype)


def fused_matmul(a, b, shift=None, residual=None, relu=False):
    """relu((a @ b) + shift [+ residual]); bf16 MXU inputs, f32 accumulate."""
    M, K = a.shape
    Kb, N = b.shape
    assert K == Kb

    # Modest tiles: fit comfortably in v7x's 64 MiB VMEM with double-buffering,
    # N tile of 128 matches v5e's 4x128 MXU (our N is always the padded 128).
    TM = int(min(256, _round_up(M, 8)))
    TN = int(min(128, _round_up(N, 128)))
    TK = int(min(512, _round_up(K, 128)))
    Mp, Np, Kp = _round_up(M, TM), _round_up(N, TN), _round_up(K, TK)

    a_p = jnp.pad(a.astype(jnp.bfloat16), ((0, Mp - M), (0, Kp - K)))
    b_p = jnp.pad(b.astype(jnp.bfloat16), ((0, Kp - K), (0, Np - N)))

    shift_p = jnp.zeros((1, Np), jnp.float32)
    if shift is not None:
        shift = shift.astype(jnp.float32).reshape(-1)
        shift_p = shift_p.at[0, :shift.shape[0]].set(shift)

    in_specs = [
        pl.BlockSpec((TM, TK), lambda i, j, k: (i, k)),
        pl.BlockSpec((TK, TN), lambda i, j, k: (k, j)),
        pl.BlockSpec((1, TN), lambda i, j, k: (0, j)),
    ]
    args = [a_p, b_p, shift_p]

    if residual is not None:
        res_p = jnp.pad(residual.astype(jnp.float32),
                        ((0, Mp - M), (0, Np - N)))
        in_specs.append(pl.BlockSpec((TM, TN), lambda i, j, k: (i, j)))
        args.append(res_p)
        kernel = functools.partial(_mm_res_kernel, relu=relu)
    else:
        kernel = functools.partial(_mm_kernel, relu=relu)

    grid = (Mp // TM, Np // TN, Kp // TK)
    bytes_accessed = int(a_p.size * 2 + b_p.size * 2 * grid[0] + Mp * Np * 4)

    out = pl.pallas_call(
        kernel,
        out_shape=jax.ShapeDtypeStruct((Mp, Np), jnp.float32),
        grid_spec=pltpu.PrefetchScalarGridSpec(
            num_scalar_prefetch=0,
            grid=grid,
            in_specs=in_specs,
            out_specs=pl.BlockSpec((TM, TN), lambda i, j, k: (i, j)),
            scratch_shapes=[pltpu.VMEM((TM, TN), jnp.float32)],
        ),
        compiler_params=pltpu.CompilerParams(
            dimension_semantics=("parallel", "parallel", "arbitrary")),
        cost_estimate=pl.CostEstimate(
            flops=2 * Mp * Np * Kp, transcendentals=0,
            bytes_accessed=bytes_accessed),
    )(*args)

    if Mp != M or Np != N:
        out = out[:M, :N]
    return out


# ----------------------------------------------------------------------------
# Bilinear upsample (align_corners=True) kernel over NHWC, C padded to 128.
# Grid = (N, out_h); source rows gathered via scalar-prefetched indices,
# width interpolation via a tiny dense matrix on the MXU; optional fused
# residual + ReLU epilogue.
# ----------------------------------------------------------------------------
def _upsample_kernel(ih0_ref, ih1_ref, row0_ref, row1_ref, wh_ref, ww_ref,
                     o_ref, *, relu):
    w = wh_ref[0, :, 0:1]                                     # (1, 1) f32
    blended = row0_ref[0, 0] * (1.0 - w) + row1_ref[0, 0] * w  # (W, CP)
    out = jnp.dot(ww_ref[...], blended,
                  preferred_element_type=jnp.float32)          # (OW, CP)
    if relu:
        out = jnp.maximum(out, 0.0)
    o_ref[0, 0] = out


def _upsample_res_kernel(ih0_ref, ih1_ref, row0_ref, row1_ref, wh_ref, ww_ref,
                         res_ref, o_ref, *, relu):
    w = wh_ref[0, :, 0:1]
    blended = row0_ref[0, 0] * (1.0 - w) + row1_ref[0, 0] * w
    out = jnp.dot(ww_ref[...], blended,
                  preferred_element_type=jnp.float32)
    out = out + res_ref[0, 0]
    if relu:
        out = jnp.maximum(out, 0.0)
    o_ref[0, 0] = out


def _interp_coeffs(out_size, in_size):
    # F.upsample(..., mode='bilinear', align_corners=True) coefficients.
    if in_size == 1 or out_size == 1:
        i0 = np.zeros((out_size,), np.int32)
        i1 = np.zeros((out_size,), np.int32)
        w = np.zeros((out_size,), np.float32)
        return i0, i1, w
    src = np.arange(out_size, dtype=np.float64) * (in_size - 1) / (out_size - 1)
    i0 = np.clip(np.floor(src), 0, in_size - 1).astype(np.int32)
    i1 = np.clip(i0 + 1, 0, in_size - 1).astype(np.int32)
    w = (src - i0).astype(np.float32)
    return i0, i1, w


def _interp_matrix(out_size, in_size):
    i0, i1, w = _interp_coeffs(out_size, in_size)
    m = np.zeros((out_size, in_size), np.float32)
    rows = np.arange(out_size)
    m[rows, i0] += (1.0 - w)
    m[rows, i1] += w
    return m


def bilinear_upsample(x, out_h, out_w, residual=None, relu=False):
    """Exact align_corners=True bilinear resize of NHWC x (C padded to 128)."""
    N, H, Wi, C = x.shape
    ih0, ih1, wh = _interp_coeffs(out_h, H)
    ww = _interp_matrix(out_w, Wi)                     # (out_w, Wi)

    wh_b = jnp.asarray(np.ascontiguousarray(
        np.broadcast_to(wh[:, None, None], (out_h, 1, 128))))
    ww_j = jnp.asarray(ww)

    in_specs = [
        pl.BlockSpec((1, 1, Wi, C), lambda n, oh, i0, i1: (n, i0[oh], 0, 0)),
        pl.BlockSpec((1, 1, Wi, C), lambda n, oh, i0, i1: (n, i1[oh], 0, 0)),
        pl.BlockSpec((1, 1, 128),   lambda n, oh, i0, i1: (oh, 0, 0)),
        pl.BlockSpec((out_w, Wi),   lambda n, oh, i0, i1: (0, 0)),
    ]
    args = [x, x, wh_b, ww_j]

    if residual is not None:
        in_specs.append(
            pl.BlockSpec((1, 1, out_w, C), lambda n, oh, i0, i1: (n, oh, 0, 0)))
        args.append(residual)
        kernel = functools.partial(_upsample_res_kernel, relu=relu)
    else:
        kernel = functools.partial(_upsample_kernel, relu=relu)

    return pl.pallas_call(
        kernel,
        out_shape=jax.ShapeDtypeStruct((N, out_h, out_w, C), jnp.float32),
        grid_spec=pltpu.PrefetchScalarGridSpec(
            num_scalar_prefetch=2,
            grid=(N, out_h),
            in_specs=in_specs,
            out_specs=pl.BlockSpec((1, 1, out_w, C),
                                   lambda n, oh, i0, i1: (n, oh, 0, 0)),
        ),
        compiler_params=pltpu.CompilerParams(
            dimension_semantics=("parallel", "arbitrary")),
    )(jnp.asarray(ih0), jnp.asarray(ih1), *args)


# ----------------------------------------------------------------------------
# Conv glue (NHWC, channels padded to CP). BN scale folded into weights.
# ----------------------------------------------------------------------------
def im2col_nhwc(x, kh, kw, stride, pad):
    # x: (N, H, W, C) -> (N*Ho*Wo, kh*kw*C); tap-major, then channel.
    N, H, W, C = x.shape
    xp = jnp.pad(x, ((0, 0), (pad, pad), (pad, pad), (0, 0)))
    Ho = (H + 2 * pad - kh) // stride + 1
    Wo = (W + 2 * pad - kw) // stride + 1
    cols = []
    for i in range(kh):
        for j in range(kw):
            cols.append(xp[:, i:i + stride * Ho:stride,
                           j:j + stride * Wo:stride, :])
    patches = jnp.stack(cols, axis=3)                  # (N, Ho, Wo, kh*kw, C)
    return patches.reshape(N * Ho * Wo, kh * kw * C), Ho, Wo


def _fold_weight(w, scale, cin_p, cout_p):
    # w: (Cout, Cin, kh, kw) -> (kh*kw*cin_p, cout_p) with BN scale folded in.
    Cout, Cin, kh, kw = w.shape
    if scale is not None:
        w = w * scale[:, None, None, None]
    wt = jnp.transpose(w, (2, 3, 1, 0))                # (kh, kw, Cin, Cout)
    wt = jnp.pad(wt, ((0, 0), (0, 0), (0, cin_p - Cin), (0, cout_p - Cout)))
    return wt.reshape(kh * kw * cin_p, cout_p)


def conv_bn_relu(x, w, scale, shift, stride=1, pad=1, relu=True, residual=None):
    # x: NHWC with channels padded to CP; returns NHWC with CP channels.
    N, H, Wd, cin_p = x.shape
    Cout, Cin, kh, kw = w.shape
    wm = _fold_weight(w, scale, cin_p, CP)
    shift_p = None
    if shift is not None:
        shift_p = jnp.pad(shift.astype(jnp.float32), (0, CP - Cout))
    if kh == 1 and kw == 1 and stride == 1 and pad == 0:
        cols, Ho, Wo = x.reshape(N * H * Wd, cin_p), H, Wd
    else:
        cols, Ho, Wo = im2col_nhwc(x, kh, kw, stride, pad)
    res2 = None if residual is None else residual.reshape(N * Ho * Wo, CP)
    out = fused_matmul(cols, wm, shift=shift_p, residual=res2, relu=relu)
    return out.reshape(N, Ho, Wo, CP)


# ----------------------------------------------------------------------------
# Deterministic synthetic parameters (HRNet-style compact backbone)
# ----------------------------------------------------------------------------
def init_params(key):
    p = {}
    keys = iter(jax.random.split(key, 64))

    def conv(name, cout, cin, k):
        p[name + "_w"] = 0.1 * jax.random.normal(next(keys), (cout, cin, k, k),
                                                 jnp.float32)

    def bn(name, c):
        p[name + "_s"] = 1.0 + 0.01 * jax.random.normal(next(keys), (c,),
                                                        jnp.float32)
        p[name + "_b"] = 0.01 * jax.random.normal(next(keys), (c,), jnp.float32)

    conv("conv1", STEM, IN_CH, 3); bn("bn1", STEM)
    conv("conv2", STEM, STEM, 3); bn("bn2", STEM)
    conv("b1", C_HI, STEM, 3); bn("b1", C_HI)
    conv("t2", C_LO, STEM, 3); bn("t2", C_LO)
    conv("b1b", C_HI, C_HI, 3); bn("b1b", C_HI)
    conv("b2b", C_LO, C_LO, 3); bn("b2b", C_LO)
    conv("f21", C_HI, C_LO, 1); bn("f21", C_HI)   # lo -> hi (1x1 + upsample)
    conv("f12", C_LO, C_HI, 3); bn("f12", C_LO)   # hi -> lo (3x3 stride 2)
    conv("head1", 32, C_HI + C_LO, 1); bn("head1", 32)
    conv("cls", NUM_CLASSES, 32, 1)
    p["cls_b"] = 0.01 * jax.random.normal(next(keys), (NUM_CLASSES,),
                                          jnp.float32)
    return p


# ----------------------------------------------------------------------------
# hrnet_v3 forward (NCHW in / NCHW out; NHWC + padded channels internally)
# ----------------------------------------------------------------------------
def hrnet_v3_forward(x, p):
    size = x.shape[2:]                                  # (H, W) of the input
    # NCHW -> NHWC, pad channels to CP (lane-dense everywhere downstream).
    xh = jnp.transpose(x, (0, 2, 3, 1))
    xh = jnp.pad(xh, ((0, 0), (0, 0), (0, 0), (0, CP - xh.shape[3])))

    # --- stem (1/4 resolution) ---
    y = conv_bn_relu(xh, p["conv1_w"], p["bn1_s"], p["bn1_b"], stride=2, pad=1)
    y = conv_bn_relu(y, p["conv2_w"], p["bn2_s"], p["bn2_b"], stride=2, pad=1)

    # --- two-branch stage ---
    hi = conv_bn_relu(y, p["b1_w"], p["b1_s"], p["b1_b"], stride=1, pad=1)
    lo = conv_bn_relu(y, p["t2_w"], p["t2_s"], p["t2_b"], stride=2, pad=1)
    hi = conv_bn_relu(hi, p["b1b_w"], p["b1b_s"], p["b1b_b"], stride=1, pad=1)
    lo = conv_bn_relu(lo, p["b2b_w"], p["b2b_s"], p["b2b_b"], stride=1, pad=1)

    # --- cross-resolution fusion (residual add + ReLU fused into epilogues) ---
    lo2hi = conv_bn_relu(lo, p["f21_w"], p["f21_s"], p["f21_b"],
                         stride=1, pad=0, relu=False)
    hi_f = bilinear_upsample(lo2hi, hi.shape[1], hi.shape[2],
                             residual=hi, relu=True)          # relu(hi + up(lo2hi))
    lo_f = conv_bn_relu(hi, p["f12_w"], p["f12_s"], p["f12_b"],
                        stride=2, pad=1, relu=True, residual=lo)  # relu(lo + conv(hi))

    # --- segmentation head at 1/4 resolution ---
    lo_up = bilinear_upsample(lo_f, hi_f.shape[1], hi_f.shape[2])
    # head 1x1 conv on concat([hi_f, lo_up]) split into two fused matmuls
    w_hi = p["head1_w"][:, :C_HI]
    w_lo = p["head1_w"][:, C_HI:]
    t = conv_bn_relu(hi_f, w_hi, p["head1_s"], p["head1_b"],
                     stride=1, pad=0, relu=False)
    feat = conv_bn_relu(lo_up, w_lo, p["head1_s"], None,
                        stride=1, pad=0, relu=True, residual=t)
    pred = conv_bn_relu(feat, p["cls_w"], None, p["cls_b"],
                        stride=1, pad=0, relu=False)

    # --- hrnet_v3.forward: F.upsample(pred, size=size, mode='bilinear',
    #                                  align_corners=True) ---
    pred = bilinear_upsample(pred, size[0], size[1])

    # back to NCHW, drop channel padding
    pred = pred[..., :NUM_CLASSES]
    return jnp.transpose(pred, (0, 3, 1, 2))


# ----------------------------------------------------------------------------
if __name__ == "__main__":
    key = jax.random.PRNGKey(0)
    k_param, k_x = jax.random.split(key)
    params = init_params(k_param)
    x = jax.random.normal(k_x, (2, IN_CH, 16, 16), jnp.float32)   # NCHW

    fwd = jax.jit(hrnet_v3_forward)
    out = jax.block_until_ready(fwd(x, params))

    assert out.shape == (2, NUM_CLASSES, 16, 16), out.shape
    assert out.dtype == jnp.float32
    assert bool(jnp.all(jnp.isfinite(out)))
    print("KERNEL_OK")
</pallas_src>

<mosaic_0001>
module attributes {stable_mosaic.version = 11 : i64} {
  func.func @_mm_kernel(%arg0: i32, %arg1: i32, %arg2: i32, %arg3: memref<128x512xbf16, #tpu.memory_space<vmem>>, %arg4: memref<512x128xbf16, #tpu.memory_space<vmem>>, %arg5: memref<1x128xf32, #tpu.memory_space<vmem>>, %arg6: memref<128x128xf32, #tpu.memory_space<vmem>>, %arg7: memref<128x128xf32, #tpu.memory_space<vmem>>) attributes {dimension_semantics = [#tpu.dimension_semantics<parallel>, #tpu.dimension_semantics<parallel>, #tpu.dimension_semantics<arbitrary>], iteration_bounds = array<i64: 1, 1, 3>, scalar_prefetch = 0 : i64, scratch_operands = 1 : i64, tpu.core_type = #tpu.core_type<tc>, window_params = [{transform_indices = @transform_0, window_bounds = array<i64: 128, 512>}, {transform_indices = @transform_1, window_bounds = array<i64: 512, 128>}, {transform_indices = @transform_2, window_bounds = array<i64: 1, 128>}, {transform_indices = @transform_3, window_bounds = array<i64: 128, 128>}]} {
    %c0_i32 = arith.constant 0 : i32
    %0 = arith.cmpi eq, %arg2, %c0_i32 : i32
    %1 = arith.extui %0 : i1 to i32
    %c0_i32_0 = arith.constant 0 : i32
    %2 = arith.cmpi ne, %1, %c0_i32_0 : i32
    scf.if %2 {
      %cst_9 = arith.constant 0.000000e+00 : f32
      %12 = vector.broadcast %cst_9 : f32 to vector<128x128xf32>
      %c0_10 = arith.constant 0 : index
      %c0_11 = arith.constant 0 : index
      %13 = vector.load %arg7[%c0_10, %c0_11] : memref<128x128xf32, #tpu.memory_space<vmem>>, vector<128x128xf32>
      tpu.vector_store %arg7[%c0_10, %c0_11], %12 {strides = array<i32>} : memref<128x128xf32, #tpu.memory_space<vmem>>, vector<128x128xf32>,
    } else {
    }
    %c0 = arith.constant 0 : index
    %c0_1 = arith.constant 0 : index
    %3 = vector.load %arg7[%c0, %c0_1] : memref<128x128xf32, #tpu.memory_space<vmem>>, vector<128x128xf32>
    %c0_2 = arith.constant 0 : index
    %c0_3 = arith.constant 0 : index
    %4 = vector.load %arg3[%c0_2, %c0_3] : memref<128x512xbf16, #tpu.memory_space<vmem>>, vector<128x512xbf16>
    %c0_4 = arith.constant 0 : index
    %c0_5 = arith.constant 0 : index
    %5 = vector.load %arg4[%c0_4, %c0_5] : memref<512x128xbf16, #tpu.memory_space<vmem>>, vector<512x128xbf16>
    %cst = arith.constant dense<0.000000e+00> : vector<128x128xf32>
    %6 = tpu.matmul %4, %5, %cst {dimension_numbers = #tpu.dot_dimension_numbers<[1], [0], [0], [1], [0, 0, 1, 1], [], []>} : vector<128x512xbf16>, vector<512x128xbf16>, vector<128x128xf32> -> vector<128x128xf32>
    %7 = arith.addf %3, %6 : vector<128x128xf32>
    %c0_6 = arith.constant 0 : index
    %c0_7 = arith.constant 0 : index
    %8 = vector.load %arg7[%c0_6, %c0_7] : memref<128x128xf32, #tpu.memory_space<vmem>>, vector<128x128xf32>
    tpu.vector_store %arg7[%c0_6, %c0_7], %7 {strides = array<i32>} : memref<128x128xf32, #tpu.memory_space<vmem>>, vector<128x128xf32>,
    %c2_i32 = arith.constant 2 : i32
    %9 = arith.cmpi eq, %arg2, %c2_i32 : i32
    %10 = arith.extui %9 : i1 to i32
    %c0_i32_8 = arith.constant 0 : i32
    %11 = arith.cmpi ne, %10, %c0_i32_8 : i32
    scf.if %11 {
      %c0_9 = arith.constant 0 : index
      %c0_10 = arith.constant 0 : index
      %12 = vector.load %arg7[%c0_9, %c0_10] : memref<128x128xf32, #tpu.memory_space<vmem>>, vector<128x128xf32>
      %c0_11 = arith.constant 0 : index
      %c0_12 = arith.constant 0 : index
      %13 = vector.load %arg5[%c0_11, %c0_12] : memref<1x128xf32, #tpu.memory_space<vmem>>, vector<1x128xf32>
      %14 = vector.broadcast %13 : vector<1x128xf32> to vector<128x128xf32>
      %15 = arith.addf %12, %14 : vector<128x128xf32>
      %cst_13 = arith.constant 0.000000e+00 : f32
      %16 = vector.broadcast %cst_13 : f32 to vector<128x128xf32>
      %17 = arith.maximumf %15, %16 : vector<128x128xf32>
      %c0_14 = arith.constant 0 : index
      %c0_15 = arith.constant 0 : index
      %18 = vector.load %arg6[%c0_14, %c0_15] : memref<128x128xf32, #tpu.memory_space<vmem>>, vector<128x128xf32>
      tpu.vector_store %arg6[%c0_14, %c0_15], %17 {strides = array<i32>} : memref<128x128xf32, #tpu.memory_space<vmem>>, vector<128x128xf32>,
    } else {
    }
    return
  }
  func.func @transform_0(%arg0: i32, %arg1: i32, %arg2: i32) -> (i32, i32) {
    %c0_i32 = arith.constant 0 : i32
    return %arg0, %arg2 : i32, i32
  }
  func.func @transform_1(%arg0: i32, %arg1: i32, %arg2: i32) -> (i32, i32) {
    %c0_i32 = arith.constant 0 : i32
    return %arg2, %arg1 : i32, i32
  }
  func.func @transform_2(%arg0: i32, %arg1: i32, %arg2: i32) -> (i32, i32) {
    %c0_i32 = arith.constant 0 : i32
    %c0_i32_0 = arith.constant 0 : i32
    return %c0_i32, %arg1 : i32, i32
  }
  func.func @transform_3(%arg0: i32, %arg1: i32, %arg2: i32) -> (i32, i32) {
    %c0_i32 = arith.constant 0 : i32
    return %arg0, %arg1 : i32, i32
  }
}

module attributes {stable_mosaic.version = 11 : i64} {
  func.func @_mm_kernel(%arg0: i32, %arg1: i32, %arg2: i32, %arg3: memref<32x512xbf16, #tpu.memory_space<vmem>>, %arg4: memref<512x128xbf16, #tpu.memory_space<vmem>>, %arg5: memref<1x128xf32, #tpu.memory_space<vmem>>, %arg6: memref<32x128xf32, #tpu.memory_space<vmem>>, %arg7: memref<32x128xf32, #tpu.memory_space<vmem>>) attributes {dimension_semantics = [#tpu.dimension_semantics<parallel>, #tpu.dimension_semantics<parallel>, #tpu.dimension_semantics<arbitrary>], iteration_bounds = array<i64: 1, 1, 3>, scalar_prefetch = 0 : i64, scratch_operands = 1 : i64, tpu.core_type = #tpu.core_type<tc>, window_params = [{transform_indices = @transform_0, window_bounds = array<i64: 32, 512>}, {transform_indices = @transform_1, window_bounds = array<i64: 512, 128>}, {transform_indices = @transform_2, window_bounds = array<i64: 1, 128>}, {transform_indices = @transform_3, window_bounds = array<i64: 32, 128>}]} {
    %c0_i32 = arith.constant 0 : i32
    %0 = arith.cmpi eq, %arg2, %c0_i32 : i32
    %1 = arith.extui %0 : i1 to i32
    %c0_i32_0 = arith.constant 0 : i32
    %2 = arith.cmpi ne, %1, %c0_i32_0 : i32
    scf.if %2 {
      %cst_9 = arith.constant 0.000000e+00 : f32
      %12 = vector.broadcast %cst_9 : f32 to vector<32x128xf32>
      %c0_10 = arith.constant 0 : index
      %c0_11 = arith.constant 0 : index
      %13 = vector.load %arg7[%c0_10, %c0_11] : memref<32x128xf32, #tpu.memory_space<vmem>>, vector<32x128xf32>
      tpu.vector_store %arg7[%c0_10, %c0_11], %12 {strides = array<i32>} : memref<32x128xf32, #tpu.memory_space<vmem>>, vector<32x128xf32>,
    } else {
    }
    %c0 = arith.constant 0 : index
    %c0_1 = arith.constant 0 : index
    %3 = vector.load %arg7[%c0, %c0_1] : memref<32x128xf32, #tpu.memory_space<vmem>>, vector<32x128xf32>
    %c0_2 = arith.constant 0 : index
    %c0_3 = arith.constant 0 : index
    %4 = vector.load %arg3[%c0_2, %c0_3] : memref<32x512xbf16, #tpu.memory_space<vmem>>, vector<32x512xbf16>
    %c0_4 = arith.constant 0 : index
    %c0_5 = arith.constant 0 : index
    %5 = vector.load %arg4[%c0_4, %c0_5] : memref<512x128xbf16, #tpu.memory_space<vmem>>, vector<512x128xbf16>
    %cst = arith.constant dense<0.000000e+00> : vector<32x128xf32>
    %6 = tpu.matmul %4, %5, %cst {dimension_numbers = #tpu.dot_dimension_numbers<[1], [0], [0], [1], [0, 0, 1, 1], [], []>} : vector<32x512xbf16>, vector<512x128xbf16>, vector<32x128xf32> -> vector<32x128xf32>
    %7 = arith.addf %3, %6 : vector<32x128xf32>
    %c0_6 = arith.constant 0 : index
    %c0_7 = arith.constant 0 : index
    %8 = vector.load %arg7[%c0_6, %c0_7] : memref<32x128xf32, #tpu.memory_space<vmem>>, vector<32x128xf32>
    tpu.vector_store %arg7[%c0_6, %c0_7], %7 {strides = array<i32>} : memref<32x128xf32, #tpu.memory_space<vmem>>, vector<32x128xf32>,
    %c2_i32 = arith.constant 2 : i32
    %9 = arith.cmpi eq, %arg2, %c2_i32 : i32
    %10 = arith.extui %9 : i1 to i32
    %c0_i32_8 = arith.constant 0 : i32
    %11 = arith.cmpi ne, %10, %c0_i32_8 : i32
    scf.if %11 {
      %c0_9 = arith.constant 0 : index
      %c0_10 = arith.constant 0 : index
      %12 = vector.load %arg7[%c0_9, %c0_10] : memref<32x128xf32, #tpu.memory_space<vmem>>, vector<32x128xf32>
      %c0_11 = arith.constant 0 : index
      %c0_12 = arith.constant 0 : index
      %13 = vector.load %arg5[%c0_11, %c0_12] : memref<1x128xf32, #tpu.memory_space<vmem>>, vector<1x128xf32>
      %14 = vector.broadcast %13 : vector<1x128xf32> to vector<32x128xf32>
      %15 = arith.addf %12, %14 : vector<32x128xf32>
      %cst_13 = arith.constant 0.000000e+00 : f32
      %16 = vector.broadcast %cst_13 : f32 to vector<32x128xf32>
      %17 = arith.maximumf %15, %16 : vector<32x128xf32>
      %c0_14 = arith.constant 0 : index
      %c0_15 = arith.constant 0 : index
      %18 = vector.load %arg6[%c0_14, %c0_15] : memref<32x128xf32, #tpu.memory_space<vmem>>, vector<32x128xf32>
      tpu.vector_store %arg6[%c0_14, %c0_15], %17 {strides = array<i32>} : memref<32x128xf32, #tpu.memory_space<vmem>>, vector<32x128xf32>,
    } else {
    }
    return
  }
  func.func @transform_0(%arg0: i32, %arg1: i32, %arg2: i32) -> (i32, i32) {
    %c0_i32 = arith.constant 0 : i32
    return %arg0, %arg2 : i32, i32
  }
  func.func @transform_1(%arg0: i32, %arg1: i32, %arg2: i32) -> (i32, i32) {
    %c0_i32 = arith.constant 0 : i32
    return %arg2, %arg1 : i32, i32
  }
  func.func @transform_2(%arg0: i32, %arg1: i32, %arg2: i32) -> (i32, i32) {
    %c0_i32 = arith.constant 0 : i32
    %c0_i32_0 = arith.constant 0 : i32
    return %c0_i32, %arg1 : i32, i32
  }
  func.func @transform_3(%arg0: i32, %arg1: i32, %arg2: i32) -> (i32, i32) {
    %c0_i32 = arith.constant 0 : i32
    return %arg0, %arg1 : i32, i32
  }
}

module attributes {stable_mosaic.version = 11 : i64} {
  func.func @_mm_kernel(%arg0: i32, %arg1: i32, %arg2: i32, %arg3: memref<8x512xbf16, #tpu.memory_space<vmem>>, %arg4: memref<512x128xbf16, #tpu.memory_space<vmem>>, %arg5: memref<1x128xf32, #tpu.memory_space<vmem>>, %arg6: memref<8x128xf32, #tpu.memory_space<vmem>>, %arg7: memref<8x128xf32, #tpu.memory_space<vmem>>) attributes {dimension_semantics = [#tpu.dimension_semantics<parallel>, #tpu.dimension_semantics<parallel>, #tpu.dimension_semantics<arbitrary>], iteration_bounds = array<i64: 1, 1, 3>, scalar_prefetch = 0 : i64, scratch_operands = 1 : i64, tpu.core_type = #tpu.core_type<tc>, window_params = [{transform_indices = @transform_0, window_bounds = array<i64: 8, 512>}, {transform_indices = @transform_1, window_bounds = array<i64: 512, 128>}, {transform_indices = @transform_2, window_bounds = array<i64: 1, 128>}, {transform_indices = @transform_3, window_bounds = array<i64: 8, 128>}]} {
    %c0_i32 = arith.constant 0 : i32
    %0 = arith.cmpi eq, %arg2, %c0_i32 : i32
    %1 = arith.extui %0 : i1 to i32
    %c0_i32_0 = arith.constant 0 : i32
    %2 = arith.cmpi ne, %1, %c0_i32_0 : i32
    scf.if %2 {
      %cst_9 = arith.constant 0.000000e+00 : f32
      %12 = vector.broadcast %cst_9 : f32 to vector<8x128xf32>
      %c0_10 = arith.constant 0 : index
      %c0_11 = arith.constant 0 : index
      %13 = vector.load %arg7[%c0_10, %c0_11] : memref<8x128xf32, #tpu.memory_space<vmem>>, vector<8x128xf32>
      tpu.vector_store %arg7[%c0_10, %c0_11], %12 {strides = array<i32>} : memref<8x128xf32, #tpu.memory_space<vmem>>, vector<8x128xf32>,
    } else {
    }
    %c0 = arith.constant 0 : index
    %c0_1 = arith.constant 0 : index
    %3 = vector.load %arg7[%c0, %c0_1] : memref<8x128xf32, #tpu.memory_space<vmem>>, vector<8x128xf32>
    %c0_2 = arith.constant 0 : index
    %c0_3 = arith.constant 0 : index
    %4 = vector.load %arg3[%c0_2, %c0_3] : memref<8x512xbf16, #tpu.memory_space<vmem>>, vector<8x512xbf16>
    %c0_4 = arith.constant 0 : index
    %c0_5 = arith.constant 0 : index
    %5 = vector.load %arg4[%c0_4, %c0_5] : memref<512x128xbf16, #tpu.memory_space<vmem>>, vector<512x128xbf16>
    %cst = arith.constant dense<0.000000e+00> : vector<8x128xf32>
    %6 = tpu.matmul %4, %5, %cst {dimension_numbers = #tpu.dot_dimension_numbers<[1], [0], [0], [1], [0, 0, 1, 1], [], []>} : vector<8x512xbf16>, vector<512x128xbf16>, vector<8x128xf32> -> vector<8x128xf32>
    %7 = arith.addf %3, %6 : vector<8x128xf32>
    %c0_6 = arith.constant 0 : index
    %c0_7 = arith.constant 0 : index
    %8 = vector.load %arg7[%c0_6, %c0_7] : memref<8x128xf32, #tpu.memory_space<vmem>>, vector<8x128xf32>
    tpu.vector_store %arg7[%c0_6, %c0_7], %7 {strides = array<i32>} : memref<8x128xf32, #tpu.memory_space<vmem>>, vector<8x128xf32>,
    %c2_i32 = arith.constant 2 : i32
    %9 = arith.cmpi eq, %arg2, %c2_i32 : i32
    %10 = arith.extui %9 : i1 to i32
    %c0_i32_8 = arith.constant 0 : i32
    %11 = arith.cmpi ne, %10, %c0_i32_8 : i32
    scf.if %11 {
      %c0_9 = arith.constant 0 : index
      %c0_10 = arith.constant 0 : index
      %12 = vector.load %arg7[%c0_9, %c0_10] : memref<8x128xf32, #tpu.memory_space<vmem>>, vector<8x128xf32>
      %c0_11 = arith.constant 0 : index
      %c0_12 = arith.constant 0 : index
      %13 = vector.load %arg5[%c0_11, %c0_12] : memref<1x128xf32, #tpu.memory_space<vmem>>, vector<1x128xf32>
      %14 = vector.broadcast %13 : vector<1x128xf32> to vector<8x128xf32>
      %15 = arith.addf %12, %14 : vector<8x128xf32>
      %cst_13 = arith.constant 0.000000e+00 : f32
      %16 = vector.broadcast %cst_13 : f32 to vector<8x128xf32>
      %17 = arith.maximumf %15, %16 : vector<8x128xf32>
      %c0_14 = arith.constant 0 : index
      %c0_15 = arith.constant 0 : index
      %18 = vector.load %arg6[%c0_14, %c0_15] : memref<8x128xf32, #tpu.memory_space<vmem>>, vector<8x128xf32>
      tpu.vector_store %arg6[%c0_14, %c0_15], %17 {strides = array<i32>} : memref<8x128xf32, #tpu.memory_space<vmem>>, vector<8x128xf32>,
    } else {
    }
    return
  }
  func.func @transform_0(%arg0: i32, %arg1: i32, %arg2: i32) -> (i32, i32) {
    %c0_i32 = arith.constant 0 : i32
    return %arg0, %arg2 : i32, i32
  }
  func.func @transform_1(%arg0: i32, %arg1: i32, %arg2: i32) -> (i32, i32) {
    %c0_i32 = arith.constant 0 : i32
    return %arg2, %arg1 : i32, i32
  }
  func.func @transform_2(%arg0: i32, %arg1: i32, %arg2: i32) -> (i32, i32) {
    %c0_i32 = arith.constant 0 : i32
    %c0_i32_0 = arith.constant 0 : i32
    return %c0_i32, %arg1 : i32, i32
  }
  func.func @transform_3(%arg0: i32, %arg1: i32, %arg2: i32) -> (i32, i32) {
    %c0_i32 = arith.constant 0 : i32
    return %arg0, %arg1 : i32, i32
  }
}

module attributes {stable_mosaic.version = 11 : i64} {
  func.func @_mm_kernel(%arg0: i32, %arg1: i32, %arg2: i32, %arg3: memref<8x128xbf16, #tpu.memory_space<vmem>>, %arg4: memref<128x128xbf16, #tpu.memory_space<vmem>>, %arg5: memref<1x128xf32, #tpu.memory_space<vmem>>, %arg6: memref<8x128xf32, #tpu.memory_space<vmem>>, %arg7: memref<8x128xf32, #tpu.memory_space<vmem>>) attributes {dimension_semantics = [#tpu.dimension_semantics<parallel>, #tpu.dimension_semantics<parallel>, #tpu.dimension_semantics<arbitrary>], iteration_bounds = array<i64: 1, 1, 1>, scalar_prefetch = 0 : i64, scratch_operands = 1 : i64, tpu.core_type = #tpu.core_type<tc>, window_params = [{transform_indices = @transform_0, window_bounds = array<i64: 8, 128>}, {transform_indices = @transform_1, window_bounds = array<i64: 128, 128>}, {transform_indices = @transform_2, window_bounds = array<i64: 1, 128>}, {transform_indices = @transform_3, window_bounds = array<i64: 8, 128>}]} {
    %c0_i32 = arith.constant 0 : i32
    %0 = arith.cmpi eq, %arg2, %c0_i32 : i32
    %1 = arith.extui %0 : i1 to i32
    %c0_i32_0 = arith.constant 0 : i32
    %2 = arith.cmpi ne, %1, %c0_i32_0 : i32
    scf.if %2 {
      %cst_10 = arith.constant 0.000000e+00 : f32
      %12 = vector.broadcast %cst_10 : f32 to vector<8x128xf32>
      %c0_11 = arith.constant 0 : index
      %c0_12 = arith.constant 0 : index
      %13 = vector.load %arg7[%c0_11, %c0_12] : memref<8x128xf32, #tpu.memory_space<vmem>>, vector<8x128xf32>
      tpu.vector_store %arg7[%c0_11, %c0_12], %12 {strides = array<i32>} : memref<8x128xf32, #tpu.memory_space<vmem>>, vector<8x128xf32>,
    } else {
    }
    %c0 = arith.constant 0 : index
    %c0_1 = arith.constant 0 : index
    %3 = vector.load %arg7[%c0, %c0_1] : memref<8x128xf32, #tpu.memory_space<vmem>>, vector<8x128xf32>
    %c0_2 = arith.constant 0 : index
    %c0_3 = arith.constant 0 : index
    %4 = vector.load %arg3[%c0_2, %c0_3] : memref<8x128xbf16, #tpu.memory_space<vmem>>, vector<8x128xbf16>
    %c0_4 = arith.constant 0 : index
    %c0_5 = arith.constant 0 : index
    %5 = vector.load %arg4[%c0_4, %c0_5] : memref<128x128xbf16, #tpu.memory_space<vmem>>, vector<128x128xbf16>
    %cst = arith.constant dense<0.000000e+00> : vector<8x128xf32>
    %6 = tpu.matmul %4, %5, %cst {dimension_numbers = #tpu.dot_dimension_numbers<[1], [0], [0], [1], [0, 0, 1, 1], [], []>} : vector<8x128xbf16>, vector<128x128xbf16>, vector<8x128xf32> -> vector<8x128xf32>
    %7 = arith.addf %3, %6 : vector<8x128xf32>
    %c0_6 = arith.constant 0 : index
    %c0_7 = arith.constant 0 : index
    %8 = vector.load %arg7[%c0_6, %c0_7] : memref<8x128xf32, #tpu.memory_space<vmem>>, vector<8x128xf32>
    tpu.vector_store %arg7[%c0_6, %c0_7], %7 {strides = array<i32>} : memref<8x128xf32, #tpu.memory_space<vmem>>, vector<8x128xf32>,
    %c0_i32_8 = arith.constant 0 : i32
    %9 = arith.cmpi eq, %arg2, %c0_i32_8 : i32
    %10 = arith.extui %9 : i1 to i32
    %c0_i32_9 = arith.constant 0 : i32
    %11 = arith.cmpi ne, %10, %c0_i32_9 : i32
    scf.if %11 {
      %c0_10 = arith.constant 0 : index
      %c0_11 = arith.constant 0 : index
      %12 = vector.load %arg7[%c0_10, %c0_11] : memref<8x128xf32, #tpu.memory_space<vmem>>, vector<8x128xf32>
      %c0_12 = arith.constant 0 : index
      %c0_13 = arith.constant 0 : index
      %13 = vector.load %arg5[%c0_12, %c0_13] : memref<1x128xf32, #tpu.memory_space<vmem>>, vector<1x128xf32>
      %14 = vector.broadcast %13 : vector<1x128xf32> to vector<8x128xf32>
      %15 = arith.addf %12, %14 : vector<8x128xf32>
      %c0_14 = arith.constant 0 : index
      %c0_15 = arith.constant 0 : index
      %16 = vector.load %arg6[%c0_14, %c0_15] : memref<8x128xf32, #tpu.memory_space<vmem>>, vector<8x128xf32>
      tpu.vector_store %arg6[%c0_14, %c0_15], %15 {strides = array<i32>} : memref<8x128xf32, #tpu.memory_space<vmem>>, vector<8x128xf32>,
    } else {
    }
    return
  }
  func.func @transform_0(%arg0: i32, %arg1: i32, %arg2: i32) -> (i32, i32) {
    %c0_i32 = arith.constant 0 : i32
    return %arg0, %arg2 : i32, i32
  }
  func.func @transform_1(%arg0: i32, %arg1: i32, %arg2: i32) -> (i32, i32) {
    %c0_i32 = arith.constant 0 : i32
    return %arg2, %arg1 : i32, i32
  }
  func.func @transform_2(%arg0: i32, %arg1: i32, %arg2: i32) -> (i32, i32) {
    %c0_i32 = arith.constant 0 : i32
    %c0_i32_0 = arith.constant 0 : i32
    return %c0_i32, %arg1 : i32, i32
  }
  func.func @transform_3(%arg0: i32, %arg1: i32, %arg2: i32) -> (i32, i32) {
    %c0_i32 = arith.constant 0 : i32
    return %arg0, %arg1 : i32, i32
  }
}

module attributes {stable_mosaic.version = 11 : i64} {
  func.func @_upsample_res_kernel(%arg0: i32, %arg1: i32, %arg2: memref<4xi32, #tpu.memory_space<smem>>, %arg3: memref<4xi32, #tpu.memory_space<smem>>, %arg4: memref<1x1x2x128xf32, #tpu.memory_space<vmem>>, %arg5: memref<1x1x2x128xf32, #tpu.memory_space<vmem>>, %arg6: memref<1x1x128xf32, #tpu.memory_space<vmem>>, %arg7: memref<4x2xf32, #tpu.memory_space<vmem>>, %arg8: memref<1x1x4x128xf32, #tpu.memory_space<vmem>>, %arg9: memref<1x1x4x128xf32, #tpu.memory_space<vmem>>) attributes {dimension_semantics = [#tpu.dimension_semantics<parallel>, #tpu.dimension_semantics<arbitrary>], iteration_bounds = array<i64: 2, 4>, scalar_prefetch = 2 : i64, scratch_operands = 0 : i64, tpu.core_type = #tpu.core_type<tc>, window_params = [{transform_indices = @transform_0, window_bounds = array<i64: 1, 1, 2, 128>}, {transform_indices = @transform_1, window_bounds = array<i64: 1, 1, 2, 128>}, {transform_indices = @transform_2, window_bounds = array<i64: 1, 1, 128>}, {pipeline_mode = #tpu.pipeline_mode<synchronous>, transform_indices = @transform_3, window_bounds = array<i64: 4, 2>}, {transform_indices = @transform_4, window_bounds = array<i64: 1, 1, 4, 128>}, {transform_indices = @transform_5, window_bounds = array<i64: 1, 1, 4, 128>}]} {
    %c0 = arith.constant 0 : index
    %c0_0 = arith.constant 0 : index
    %c0_1 = arith.constant 0 : index
    %0 = vector.load %arg6[%c0, %c0_0, %c0_1] : memref<1x1x128xf32, #tpu.memory_space<vmem>>, vector<1x1x1xf32>
    %1 = vector.shape_cast %0 : vector<1x1x1xf32> to vector<1x1xf32>
    %c0_2 = arith.constant 0 : index
    %c0_3 = arith.constant 0 : index
    %c0_4 = arith.constant 0 : index
    %c0_5 = arith.constant 0 : index
    %2 = vector.load %arg4[%c0_2, %c0_3, %c0_4, %c0_5] : memref<1x1x2x128xf32, #tpu.memory_space<vmem>>, vector<1x1x2x128xf32>
    %3 = vector.shape_cast %2 : vector<1x1x2x128xf32> to vector<2x128xf32>
    %cst = arith.constant 1.000000e+00 : f32
    %4 = vector.broadcast %cst : f32 to vector<1x1xf32>
    %5 = arith.subf %4, %1 : vector<1x1xf32>
    %6 = vector.broadcast %5 : vector<1x1xf32> to vector<2x128xf32>
    %7 = arith.mulf %3, %6 : vector<2x128xf32>
    %c0_6 = arith.constant 0 : index
    %c0_7 = arith.constant 0 : index
    %c0_8 = arith.constant 0 : index
    %c0_9 = arith.constant 0 : index
    %8 = vector.load %arg5[%c0_6, %c0_7, %c0_8, %c0_9] : memref<1x1x2x128xf32, #tpu.memory_space<vmem>>, vector<1x1x2x128xf32>
    %9 = vector.shape_cast %8 : vector<1x1x2x128xf32> to vector<2x128xf32>
    %10 = vector.broadcast %1 : vector<1x1xf32> to vector<2x128xf32>
    %11 = arith.mulf %9, %10 : vector<2x128xf32>
    %12 = arith.addf %7, %11 : vector<2x128xf32>
    %c0_10 = arith.constant 0 : index
    %c0_11 = arith.constant 0 : index
    %13 = vector.load %arg7[%c0_10, %c0_11] : memref<4x2xf32, #tpu.memory_space<vmem>>, vector<4x2xf32>
    %cst_12 = arith.constant dense<0.000000e+00> : vector<4x128xf32>
    %14 = tpu.matmul %13, %12, %cst_12 {dimension_numbers = #tpu.dot_dimension_numbers<[1], [0], [0], [1], [0, 0, 1, 1], [], []>} : vector<4x2xf32>, vector<2x128xf32>, vector<4x128xf32> -> vector<4x128xf32>
    %c0_13 = arith.constant 0 : index
    %c0_14 = arith.constant 0 : index
    %c0_15 = arith.constant 0 : index
    %c0_16 = arith.constant 0 : index
    %15 = vector.load %arg8[%c0_13, %c0_14, %c0_15, %c0_16] : memref<1x1x4x128xf32, #tpu.memory_space<vmem>>, vector<1x1x4x128xf32>
    %16 = vector.shape_cast %15 : vector<1x1x4x128xf32> to vector<4x128xf32>
    %17 = arith.addf %14, %16 : vector<4x128xf32>
    %cst_17 = arith.constant 0.000000e+00 : f32
    %18 = vector.broadcast %cst_17 : f32 to vector<4x128xf32>
    %19 = arith.maximumf %17, %18 : vector<4x128xf32>
    %c0_18 = arith.constant 0 : index
    %c0_19 = arith.constant 0 : index
    %c0_20 = arith.constant 0 : index
    %c0_21 = arith.constant 0 : index
    %20 = vector.load %arg9[%c0_18, %c0_19, %c0_20, %c0_21] : memref<1x1x4x128xf32, #tpu.memory_space<vmem>>, vector<1x1x4x128xf32>
    %21 = vector.shape_cast %20 : vector<1x1x4x128xf32> to vector<4x128xf32>
    %22 = vector.shape_cast %19 : vector<4x128xf32> to vector<1x1x4x128xf32>
    tpu.vector_store %arg9[%c0_18, %c0_19, %c0_20, %c0_21], %22 {strides = array<i32>} : memref<1x1x4x128xf32, #tpu.memory_space<vmem>>, vector<1x1x4x128xf32>,
    return
  }
  func.func @transform_0(%arg0: i32, %arg1: i32, %arg2: memref<4xi32, #tpu.memory_space<smem>>, %arg3: memref<4xi32, #tpu.memory_space<smem>>) -> (i32, i32, i32, i32) {
    %0 = arith.index_cast %arg1 : i32 to index
    %1 = memref.load %arg2[%0] : memref<4xi32, #tpu.memory_space<smem>>
    %c0_i32 = arith.constant 0 : i32
    %c0_i32_0 = arith.constant 0 : i32
    %c0_i32_1 = arith.constant 0 : i32
    return %arg0, %1, %c0_i32, %c0_i32_0 : i32, i32, i32, i32
  }
  func.func @transform_1(%arg0: i32, %arg1: i32, %arg2: memref<4xi32, #tpu.memory_space<smem>>, %arg3: memref<4xi32, #tpu.memory_space<smem>>) -> (i32, i32, i32, i32) {
    %0 = arith.index_cast %arg1 : i32 to index
    %1 = memref.load %arg3[%0] : memref<4xi32, #tpu.memory_space<smem>>
    %c0_i32 = arith.constant 0 : i32
    %c0_i32_0 = arith.constant 0 : i32
    %c0_i32_1 = arith.constant 0 : i32
    return %arg0, %1, %c0_i32, %c0_i32_0 : i32, i32, i32, i32
  }
  func.func @transform_2(%arg0: i32, %arg1: i32, %arg2: memref<4xi32, #tpu.memory_space<smem>>, %arg3: memref<4xi32, #tpu.memory_space<smem>>) -> (i32, i32, i32) {
    %c0_i32 = arith.constant 0 : i32
    %c0_i32_0 = arith.constant 0 : i32
    %c0_i32_1 = arith.constant 0 : i32
    return %arg1, %c0_i32, %c0_i32_0 : i32, i32, i32
  }
  func.func @transform_3(%arg0: i32, %arg1: i32, %arg2: memref<4xi32, #tpu.memory_space<smem>>, %arg3: memref<4xi32, #tpu.memory_space<smem>>) -> (i32, i32) {
    %c0_i32 = arith.constant 0 : i32
    %c0_i32_0 = arith.constant 0 : i32
    %c0_i32_1 = arith.constant 0 : i32
    return %c0_i32, %c0_i32_0 : i32, i32
  }
  func.func @transform_4(%arg0: i32, %arg1: i32, %arg2: memref<4xi32, #tpu.memory_space<smem>>, %arg3: memref<4xi32, #tpu.memory_space<smem>>) -> (i32, i32, i32, i32) {
    %c0_i32 = arith.constant 0 : i32
    %c0_i32_0 = arith.constant 0 : i32
    %c0_i32_1 = arith.constant 0 : i32
    return %arg0, %arg1, %c0_i32, %c0_i32_0 : i32, i32, i32, i32
  }
  func.func @transform_5(%arg0: i32, %arg1: i32, %arg2: memref<4xi32, #tpu.memory_space<smem>>, %arg3: memref<4xi32, #tpu.memory_space<smem>>) -> (i32, i32, i32, i32) {
    %c0_i32 = arith.constant 0 : i32
    %c0_i32_0 = arith.constant 0 : i32
    %c0_i32_1 = arith.constant 0 : i32
    return %arg0, %arg1, %c0_i32, %c0_i32_0 : i32, i32, i32, i32
  }
}

module attributes {stable_mosaic.version = 11 : i64} {
  func.func @_mm_kernel(%arg0: i32, %arg1: i32, %arg2: i32, %arg3: memref<32x128xbf16, #tpu.memory_space<vmem>>, %arg4: memref<128x128xbf16, #tpu.memory_space<vmem>>, %arg5: memref<1x128xf32, #tpu.memory_space<vmem>>, %arg6: memref<32x128xf32, #tpu.memory_space<vmem>>, %arg7: memref<32x128xf32, #tpu.memory_space<vmem>>) attributes {dimension_semantics = [#tpu.dimension_semantics<parallel>, #tpu.dimension_semantics<parallel>, #tpu.dimension_semantics<arbitrary>], iteration_bounds = array<i64: 1, 1, 1>, scalar_prefetch = 0 : i64, scratch_operands = 1 : i64, tpu.core_type = #tpu.core_type<tc>, window_params = [{transform_indices = @transform_0, window_bounds = array<i64: 32, 128>}, {transform_indices = @transform_1, window_bounds = array<i64: 128, 128>}, {transform_indices = @transform_2, window_bounds = array<i64: 1, 128>}, {transform_indices = @transform_3, window_bounds = array<i64: 32, 128>}]} {
    %c0_i32 = arith.constant 0 : i32
    %0 = arith.cmpi eq, %arg2, %c0_i32 : i32
    %1 = arith.extui %0 : i1 to i32
    %c0_i32_0 = arith.constant 0 : i32
    %2 = arith.cmpi ne, %1, %c0_i32_0 : i32
    scf.if %2 {
      %cst_10 = arith.constant 0.000000e+00 : f32
      %12 = vector.broadcast %cst_10 : f32 to vector<32x128xf32>
      %c0_11 = arith.constant 0 : index
      %c0_12 = arith.constant 0 : index
      %13 = vector.load %arg7[%c0_11, %c0_12] : memref<32x128xf32, #tpu.memory_space<vmem>>, vector<32x128xf32>
      tpu.vector_store %arg7[%c0_11, %c0_12], %12 {strides = array<i32>} : memref<32x128xf32, #tpu.memory_space<vmem>>, vector<32x128xf32>,
    } else {
    }
    %c0 = arith.constant 0 : index
    %c0_1 = arith.constant 0 : index
    %3 = vector.load %arg7[%c0, %c0_1] : memref<32x128xf32, #tpu.memory_space<vmem>>, vector<32x128xf32>
    %c0_2 = arith.constant 0 : index
    %c0_3 = arith.constant 0 : index
    %4 = vector.load %arg3[%c0_2, %c0_3] : memref<32x128xbf16, #tpu.memory_space<vmem>>, vector<32x128xbf16>
    %c0_4 = arith.constant 0 : index
    %c0_5 = arith.constant 0 : index
    %5 = vector.load %arg4[%c0_4, %c0_5] : memref<128x128xbf16, #tpu.memory_space<vmem>>, vector<128x128xbf16>
    %cst = arith.constant dense<0.000000e+00> : vector<32x128xf32>
    %6 = tpu.matmul %4, %5, %cst {dimension_numbers = #tpu.dot_dimension_numbers<[1], [0], [0], [1], [0, 0, 1, 1], [], []>} : vector<32x128xbf16>, vector<128x128xbf16>, vector<32x128xf32> -> vector<32x128xf32>
    %7 = arith.addf %3, %6 : vector<32x128xf32>
    %c0_6 = arith.constant 0 : index
    %c0_7 = arith.constant 0 : index
    %8 = vector.load %arg7[%c0_6, %c0_7] : memref<32x128xf32, #tpu.memory_space<vmem>>, vector<32x128xf32>
    tpu.vector_store %arg7[%c0_6, %c0_7], %7 {strides = array<i32>} : memref<32x128xf32, #tpu.memory_space<vmem>>, vector<32x128xf32>,
    %c0_i32_8 = arith.constant 0 : i32
    %9 = arith.cmpi eq, %arg2, %c0_i32_8 : i32
    %10 = arith.extui %9 : i1 to i32
    %c0_i32_9 = arith.constant 0 : i32
    %11 = arith.cmpi ne, %10, %c0_i32_9 : i32
    scf.if %11 {
      %c0_10 = arith.constant 0 : index
      %c0_11 = arith.constant 0 : index
      %12 = vector.load %arg7[%c0_10, %c0_11] : memref<32x128xf32, #tpu.memory_space<vmem>>, vector<32x128xf32>
      %c0_12 = arith.constant 0 : index
      %c0_13 = arith.constant 0 : index
      %13 = vector.load %arg5[%c0_12, %c0_13] : memref<1x128xf32, #tpu.memory_space<vmem>>, vector<1x128xf32>
      %14 = vector.broadcast %13 : vector<1x128xf32> to vector<32x128xf32>
      %15 = arith.addf %12, %14 : vector<32x128xf32>
      %c0_14 = arith.constant 0 : index
      %c0_15 = arith.constant 0 : index
      %16 = vector.load %arg6[%c0_14, %c0_15] : memref<32x128xf32, #tpu.memory_space<vmem>>, vector<32x128xf32>
      tpu.vector_store %arg6[%c0_14, %c0_15], %15 {strides = array<i32>} : memref<32x128xf32, #tpu.memory_space<vmem>>, vector<32x128xf32>,
    } else {
    }
    return
  }
  func.func @transform_0(%arg0: i32, %arg1: i32, %arg2: i32) -> (i32, i32) {
    %c0_i32 = arith.constant 0 : i32
    return %arg0, %arg2 : i32, i32
  }
  func.func @transform_1(%arg0: i32, %arg1: i32, %arg2: i32) -> (i32, i32) {
    %c0_i32 = arith.constant 0 : i32
    return %arg2, %arg1 : i32, i32
  }
  func.func @transform_2(%arg0: i32, %arg1: i32, %arg2: i32) -> (i32, i32) {
    %c0_i32 = arith.constant 0 : i32
    %c0_i32_0 = arith.constant 0 : i32
    return %c0_i32, %arg1 : i32, i32
  }
  func.func @transform_3(%arg0: i32, %arg1: i32, %arg2: i32) -> (i32, i32) {
    %c0_i32 = arith.constant 0 : i32
    return %arg0, %arg1 : i32, i32
  }
}

module attributes {stable_mosaic.version = 11 : i64} {
  func.func @_mm_res_kernel(%arg0: i32, %arg1: i32, %arg2: i32, %arg3: memref<8x512xbf16, #tpu.memory_space<vmem>>, %arg4: memref<512x128xbf16, #tpu.memory_space<vmem>>, %arg5: memref<1x128xf32, #tpu.memory_space<vmem>>, %arg6: memref<8x128xf32, #tpu.memory_space<vmem>>, %arg7: memref<8x128xf32, #tpu.memory_space<vmem>>, %arg8: memref<8x128xf32, #tpu.memory_space<vmem>>) attributes {dimension_semantics = [#tpu.dimension_semantics<parallel>, #tpu.dimension_semantics<parallel>, #tpu.dimension_semantics<arbitrary>], iteration_bounds = array<i64: 1, 1, 3>, scalar_prefetch = 0 : i64, scratch_operands = 1 : i64, tpu.core_type = #tpu.core_type<tc>, window_params = [{transform_indices = @transform_0, window_bounds = array<i64: 8, 512>}, {transform_indices = @transform_1, window_bounds = array<i64: 512, 128>}, {transform_indices = @transform_2, window_bounds = array<i64: 1, 128>}, {transform_indices = @transform_3, window_bounds = array<i64: 8, 128>}, {transform_indices = @transform_4, window_bounds = array<i64: 8, 128>}]} {
    %c0_i32 = arith.constant 0 : i32
    %0 = arith.cmpi eq, %arg2, %c0_i32 : i32
    %1 = arith.extui %0 : i1 to i32
    %c0_i32_0 = arith.constant 0 : i32
    %2 = arith.cmpi ne, %1, %c0_i32_0 : i32
    scf.if %2 {
      %cst_9 = arith.constant 0.000000e+00 : f32
      %12 = vector.broadcast %cst_9 : f32 to vector<8x128xf32>
      %c0_10 = arith.constant 0 : index
      %c0_11 = arith.constant 0 : index
      %13 = vector.load %arg8[%c0_10, %c0_11] : memref<8x128xf32, #tpu.memory_space<vmem>>, vector<8x128xf32>
      tpu.vector_store %arg8[%c0_10, %c0_11], %12 {strides = array<i32>} : memref<8x128xf32, #tpu.memory_space<vmem>>, vector<8x128xf32>,
    } else {
    }
    %c0 = arith.constant 0 : index
    %c0_1 = arith.constant 0 : index
    %3 = vector.load %arg8[%c0, %c0_1] : memref<8x128xf32, #tpu.memory_space<vmem>>, vector<8x128xf32>
    %c0_2 = arith.constant 0 : index
    %c0_3 = arith.constant 0 : index
    %4 = vector.load %arg3[%c0_2, %c0_3] : memref<8x512xbf16, #tpu.memory_space<vmem>>, vector<8x512xbf16>
    %c0_4 = arith.constant 0 : index
    %c0_5 = arith.constant 0 : index
    %5 = vector.load %arg4[%c0_4, %c0_5] : memref<512x128xbf16, #tpu.memory_space<vmem>>, vector<512x128xbf16>
    %cst = arith.constant dense<0.000000e+00> : vector<8x128xf32>
    %6 = tpu.matmul %4, %5, %cst {dimension_numbers = #tpu.dot_dimension_numbers<[1], [0], [0], [1], [0, 0, 1, 1], [], []>} : vector<8x512xbf16>, vector<512x128xbf16>, vector<8x128xf32> -> vector<8x128xf32>
    %7 = arith.addf %3, %6 : vector<8x128xf32>
    %c0_6 = arith.constant 0 : index
    %c0_7 = arith.constant 0 : index
    %8 = vector.load %arg8[%c0_6, %c0_7] : memref<8x128xf32, #tpu.memory_space<vmem>>, vector<8x128xf32>
    tpu.vector_store %arg8[%c0_6, %c0_7], %7 {strides = array<i32>} : memref<8x128xf32, #tpu.memory_space<vmem>>, vector<8x128xf32>,
    %c2_i32 = arith.constant 2 : i32
    %9 = arith.cmpi eq, %arg2, %c2_i32 : i32
    %10 = arith.extui %9 : i1 to i32
    %c0_i32_8 = arith.constant 0 : i32
    %11 = arith.cmpi ne, %10, %c0_i32_8 : i32
    scf.if %11 {
      %c0_9 = arith.constant 0 : index
      %c0_10 = arith.constant 0 : index
      %12 = vector.load %arg8[%c0_9, %c0_10] : memref<8x128xf32, #tpu.memory_space<vmem>>, vector<8x128xf32>
      %c0_11 = arith.constant 0 : index
      %c0_12 = arith.constant 0 : index
      %13 = vector.load %arg5[%c0_11, %c0_12] : memref<1x128xf32, #tpu.memory_space<vmem>>, vector<1x128xf32>
      %14 = vector.broadcast %13 : vector<1x128xf32> to vector<8x128xf32>
      %15 = arith.addf %12, %14 : vector<8x128xf32>
      %c0_13 = arith.constant 0 : index
      %c0_14 = arith.constant 0 : index
      %16 = vector.load %arg6[%c0_13, %c0_14] : memref<8x128xf32, #tpu.memory_space<vmem>>, vector<8x128xf32>
      %17 = arith.addf %15, %16 : vector<8x128xf32>
      %cst_15 = arith.constant 0.000000e+00 : f32
      %18 = vector.broadcast %cst_15 : f32 to vector<8x128xf32>
      %19 = arith.maximumf %17, %18 : vector<8x128xf32>
      %c0_16 = arith.constant 0 : index
      %c0_17 = arith.constant 0 : index
      %20 = vector.load %arg7[%c0_16, %c0_17] : memref<8x128xf32, #tpu.memory_space<vmem>>, vector<8x128xf32>
      tpu.vector_store %arg7[%c0_16, %c0_17], %19 {strides = array<i32>} : memref<8x128xf32, #tpu.memory_space<vmem>>, vector<8x128xf32>,
    } else {
    }
    return
  }
  func.func @transform_0(%arg0: i32, %arg1: i32, %arg2: i32) -> (i32, i32) {
    %c0_i32 = arith.constant 0 : i32
    return %arg0, %arg2 : i32, i32
  }
  func.func @transform_1(%arg0: i32, %arg1: i32, %arg2: i32) -> (i32, i32) {
    %c0_i32 = arith.constant 0 : i32
    return %arg2, %arg1 : i32, i32
  }
  func.func @transform_2(%arg0: i32, %arg1: i32, %arg2: i32) -> (i32, i32) {
    %c0_i32 = arith.constant 0 : i32
    %c0_i32_0 = arith.constant 0 : i32
    return %c0_i32, %arg1 : i32, i32
  }
  func.func @transform_3(%arg0: i32, %arg1: i32, %arg2: i32) -> (i32, i32) {
    %c0_i32 = arith.constant 0 : i32
    return %arg0, %arg1 : i32, i32
  }
  func.func @transform_4(%arg0: i32, %arg1: i32, %arg2: i32) -> (i32, i32) {
    %c0_i32 = arith.constant 0 : i32
    return %arg0, %arg1 : i32, i32
  }
}

module attributes {stable_mosaic.version = 11 : i64} {
  func.func @_upsample_kernel(%arg0: i32, %arg1: i32, %arg2: memref<4xi32, #tpu.memory_space<smem>>, %arg3: memref<4xi32, #tpu.memory_space<smem>>, %arg4: memref<1x1x2x128xf32, #tpu.memory_space<vmem>>, %arg5: memref<1x1x2x128xf32, #tpu.memory_space<vmem>>, %arg6: memref<1x1x128xf32, #tpu.memory_space<vmem>>, %arg7: memref<4x2xf32, #tpu.memory_space<vmem>>, %arg8: memref<1x1x4x128xf32, #tpu.memory_space<vmem>>) attributes {dimension_semantics = [#tpu.dimension_semantics<parallel>, #tpu.dimension_semantics<arbitrary>], iteration_bounds = array<i64: 2, 4>, scalar_prefetch = 2 : i64, scratch_operands = 0 : i64, tpu.core_type = #tpu.core_type<tc>, window_params = [{transform_indices = @transform_0, window_bounds = array<i64: 1, 1, 2, 128>}, {transform_indices = @transform_1, window_bounds = array<i64: 1, 1, 2, 128>}, {transform_indices = @transform_2, window_bounds = array<i64: 1, 1, 128>}, {pipeline_mode = #tpu.pipeline_mode<synchronous>, transform_indices = @transform_3, window_bounds = array<i64: 4, 2>}, {transform_indices = @transform_4, window_bounds = array<i64: 1, 1, 4, 128>}]} {
    %c0 = arith.constant 0 : index
    %c0_0 = arith.constant 0 : index
    %c0_1 = arith.constant 0 : index
    %0 = vector.load %arg6[%c0, %c0_0, %c0_1] : memref<1x1x128xf32, #tpu.memory_space<vmem>>, vector<1x1x1xf32>
    %1 = vector.shape_cast %0 : vector<1x1x1xf32> to vector<1x1xf32>
    %c0_2 = arith.constant 0 : index
    %c0_3 = arith.constant 0 : index
    %c0_4 = arith.constant 0 : index
    %c0_5 = arith.constant 0 : index
    %2 = vector.load %arg4[%c0_2, %c0_3, %c0_4, %c0_5] : memref<1x1x2x128xf32, #tpu.memory_space<vmem>>, vector<1x1x2x128xf32>
    %3 = vector.shape_cast %2 : vector<1x1x2x128xf32> to vector<2x128xf32>
    %cst = arith.constant 1.000000e+00 : f32
    %4 = vector.broadcast %cst : f32 to vector<1x1xf32>
    %5 = arith.subf %4, %1 : vector<1x1xf32>
    %6 = vector.broadcast %5 : vector<1x1xf32> to vector<2x128xf32>
    %7 = arith.mulf %3, %6 : vector<2x128xf32>
    %c0_6 = arith.constant 0 : index
    %c0_7 = arith.constant 0 : index
    %c0_8 = arith.constant 0 : index
    %c0_9 = arith.constant 0 : index
    %8 = vector.load %arg5[%c0_6, %c0_7, %c0_8, %c0_9] : memref<1x1x2x128xf32, #tpu.memory_space<vmem>>, vector<1x1x2x128xf32>
    %9 = vector.shape_cast %8 : vector<1x1x2x128xf32> to vector<2x128xf32>
    %10 = vector.broadcast %1 : vector<1x1xf32> to vector<2x128xf32>
    %11 = arith.mulf %9, %10 : vector<2x128xf32>
    %12 = arith.addf %7, %11 : vector<2x128xf32>
    %c0_10 = arith.constant 0 : index
    %c0_11 = arith.constant 0 : index
    %13 = vector.load %arg7[%c0_10, %c0_11] : memref<4x2xf32, #tpu.memory_space<vmem>>, vector<4x2xf32>
    %cst_12 = arith.constant dense<0.000000e+00> : vector<4x128xf32>
    %14 = tpu.matmul %13, %12, %cst_12 {dimension_numbers = #tpu.dot_dimension_numbers<[1], [0], [0], [1], [0, 0, 1, 1], [], []>} : vector<4x2xf32>, vector<2x128xf32>, vector<4x128xf32> -> vector<4x128xf32>
    %c0_13 = arith.constant 0 : index
    %c0_14 = arith.constant 0 : index
    %c0_15 = arith.constant 0 : index
    %c0_16 = arith.constant 0 : index
    %15 = vector.load %arg8[%c0_13, %c0_14, %c0_15, %c0_16] : memref<1x1x4x128xf32, #tpu.memory_space<vmem>>, vector<1x1x4x128xf32>
    %16 = vector.shape_cast %15 : vector<1x1x4x128xf32> to vector<4x128xf32>
    %17 = vector.shape_cast %14 : vector<4x128xf32> to vector<1x1x4x128xf32>
    tpu.vector_store %arg8[%c0_13, %c0_14, %c0_15, %c0_16], %17 {strides = array<i32>} : memref<1x1x4x128xf32, #tpu.memory_space<vmem>>, vector<1x1x4x128xf32>,
    return
  }
  func.func @transform_0(%arg0: i32, %arg1: i32, %arg2: memref<4xi32, #tpu.memory_space<smem>>, %arg3: memref<4xi32, #tpu.memory_space<smem>>) -> (i32, i32, i32, i32) {
    %0 = arith.index_cast %arg1 : i32 to index
    %1 = memref.load %arg2[%0] : memref<4xi32, #tpu.memory_space<smem>>
    %c0_i32 = arith.constant 0 : i32
    %c0_i32_0 = arith.constant 0 : i32
    %c0_i32_1 = arith.constant 0 : i32
    return %arg0, %1, %c0_i32, %c0_i32_0 : i32, i32, i32, i32
  }
  func.func @transform_1(%arg0: i32, %arg1: i32, %arg2: memref<4xi32, #tpu.memory_space<smem>>, %arg3: memref<4xi32, #tpu.memory_space<smem>>) -> (i32, i32, i32, i32) {
    %0 = arith.index_cast %arg1 : i32 to index
    %1 = memref.load %arg3[%0] : memref<4xi32, #tpu.memory_space<smem>>
    %c0_i32 = arith.constant 0 : i32
    %c0_i32_0 = arith.constant 0 : i32
    %c0_i32_1 = arith.constant 0 : i32
    return %arg0, %1, %c0_i32, %c0_i32_0 : i32, i32, i32, i32
  }
  func.func @transform_2(%arg0: i32, %arg1: i32, %arg2: memref<4xi32, #tpu.memory_space<smem>>, %arg3: memref<4xi32, #tpu.memory_space<smem>>) -> (i32, i32, i32) {
    %c0_i32 = arith.constant 0 : i32
    %c0_i32_0 = arith.constant 0 : i32
    %c0_i32_1 = arith.constant 0 : i32
    return %arg1, %c0_i32, %c0_i32_0 : i32, i32, i32
  }
  func.func @transform_3(%arg0: i32, %arg1: i32, %arg2: memref<4xi32, #tpu.memory_space<smem>>, %arg3: memref<4xi32, #tpu.memory_space<smem>>) -> (i32, i32) {
    %c0_i32 = arith.constant 0 : i32
    %c0_i32_0 = arith.constant 0 : i32
    %c0_i32_1 = arith.constant 0 : i32
    return %c0_i32, %c0_i32_0 : i32, i32
  }
  func.func @transform_4(%arg0: i32, %arg1: i32, %arg2: memref<4xi32, #tpu.memory_space<smem>>, %arg3: memref<4xi32, #tpu.memory_space<smem>>) -> (i32, i32, i32, i32) {
    %c0_i32 = arith.constant 0 : i32
    %c0_i32_0 = arith.constant 0 : i32
    %c0_i32_1 = arith.constant 0 : i32
    return %arg0, %arg1, %c0_i32, %c0_i32_0 : i32, i32, i32, i32
  }
}

module attributes {stable_mosaic.version = 11 : i64} {
  func.func @_mm_res_kernel(%arg0: i32, %arg1: i32, %arg2: i32, %arg3: memref<32x128xbf16, #tpu.memory_space<vmem>>, %arg4: memref<128x128xbf16, #tpu.memory_space<vmem>>, %arg5: memref<1x128xf32, #tpu.memory_space<vmem>>, %arg6: memref<32x128xf32, #tpu.memory_space<vmem>>, %arg7: memref<32x128xf32, #tpu.memory_space<vmem>>, %arg8: memref<32x128xf32, #tpu.memory_space<vmem>>) attributes {dimension_semantics = [#tpu.dimension_semantics<parallel>, #tpu.dimension_semantics<parallel>, #tpu.dimension_semantics<arbitrary>], iteration_bounds = array<i64: 1, 1, 1>, scalar_prefetch = 0 : i64, scratch_operands = 1 : i64, tpu.core_type = #tpu.core_type<tc>, window_params = [{transform_indices = @transform_0, window_bounds = array<i64: 32, 128>}, {transform_indices = @transform_1, window_bounds = array<i64: 128, 128>}, {transform_indices = @transform_2, window_bounds = array<i64: 1, 128>}, {transform_indices = @transform_3, window_bounds = array<i64: 32, 128>}, {transform_indices = @transform_4, window_bounds = array<i64: 32, 128>}]} {
    %c0_i32 = arith.constant 0 : i32
    %0 = arith.cmpi eq, %arg2, %c0_i32 : i32
    %1 = arith.extui %0 : i1 to i32
    %c0_i32_0 = arith.constant 0 : i32
    %2 = arith.cmpi ne, %1, %c0_i32_0 : i32
    scf.if %2 {
      %cst_10 = arith.constant 0.000000e+00 : f32
      %12 = vector.broadcast %cst_10 : f32 to vector<32x128xf32>
      %c0_11 = arith.constant 0 : index
      %c0_12 = arith.constant 0 : index
      %13 = vector.load %arg8[%c0_11, %c0_12] : memref<32x128xf32, #tpu.memory_space<vmem>>, vector<32x128xf32>
      tpu.vector_store %arg8[%c0_11, %c0_12], %12 {strides = array<i32>} : memref<32x128xf32, #tpu.memory_space<vmem>>, vector<32x128xf32>,
    } else {
    }
    %c0 = arith.constant 0 : index
    %c0_1 = arith.constant 0 : index
    %3 = vector.load %arg8[%c0, %c0_1] : memref<32x128xf32, #tpu.memory_space<vmem>>, vector<32x128xf32>
    %c0_2 = arith.constant 0 : index
    %c0_3 = arith.constant 0 : index
    %4 = vector.load %arg3[%c0_2, %c0_3] : memref<32x128xbf16, #tpu.memory_space<vmem>>, vector<32x128xbf16>
    %c0_4 = arith.constant 0 : index
    %c0_5 = arith.constant 0 : index
    %5 = vector.load %arg4[%c0_4, %c0_5] : memref<128x128xbf16, #tpu.memory_space<vmem>>, vector<128x128xbf16>
    %cst = arith.constant dense<0.000000e+00> : vector<32x128xf32>
    %6 = tpu.matmul %4, %5, %cst {dimension_numbers = #tpu.dot_dimension_numbers<[1], [0], [0], [1], [0, 0, 1, 1], [], []>} : vector<32x128xbf16>, vector<128x128xbf16>, vector<32x128xf32> -> vector<32x128xf32>
    %7 = arith.addf %3, %6 : vector<32x128xf32>
    %c0_6 = arith.constant 0 : index
    %c0_7 = arith.constant 0 : index
    %8 = vector.load %arg8[%c0_6, %c0_7] : memref<32x128xf32, #tpu.memory_space<vmem>>, vector<32x128xf32>
    tpu.vector_store %arg8[%c0_6, %c0_7], %7 {strides = array<i32>} : memref<32x128xf32, #tpu.memory_space<vmem>>, vector<32x128xf32>,
    %c0_i32_8 = arith.constant 0 : i32
    %9 = arith.cmpi eq, %arg2, %c0_i32_8 : i32
    %10 = arith.extui %9 : i1 to i32
    %c0_i32_9 = arith.constant 0 : i32
    %11 = arith.cmpi ne, %10, %c0_i32_9 : i32
    scf.if %11 {
      %c0_10 = arith.constant 0 : index
      %c0_11 = arith.constant 0 : index
      %12 = vector.load %arg8[%c0_10, %c0_11] : memref<32x128xf32, #tpu.memory_space<vmem>>, vector<32x128xf32>
      %c0_12 = arith.constant 0 : index
      %c0_13 = arith.constant 0 : index
      %13 = vector.load %arg5[%c0_12, %c0_13] : memref<1x128xf32, #tpu.memory_space<vmem>>, vector<1x128xf32>
      %14 = vector.broadcast %13 : vector<1x128xf32> to vector<32x128xf32>
      %15 = arith.addf %12, %14 : vector<32x128xf32>
      %c0_14 = arith.constant 0 : index
      %c0_15 = arith.constant 0 : index
      %16 = vector.load %arg6[%c0_14, %c0_15] : memref<32x128xf32, #tpu.memory_space<vmem>>, vector<32x128xf32>
      %17 = arith.addf %15, %16 : vector<32x128xf32>
      %cst_16 = arith.constant 0.000000e+00 : f32
      %18 = vector.broadcast %cst_16 : f32 to vector<32x128xf32>
      %19 = arith.maximumf %17, %18 : vector<32x128xf32>
      %c0_17 = arith.constant 0 : index
      %c0_18 = arith.constant 0 : index
      %20 = vector.load %arg7[%c0_17, %c0_18] : memref<32x128xf32, #tpu.memory_space<vmem>>, vector<32x128xf32>
      tpu.vector_store %arg7[%c0_17, %c0_18], %19 {strides = array<i32>} : memref<32x128xf32, #tpu.memory_space<vmem>>, vector<32x128xf32>,
    } else {
    }
    return
  }
  func.func @transform_0(%arg0: i32, %arg1: i32, %arg2: i32) -> (i32, i32) {
    %c0_i32 = arith.constant 0 : i32
    return %arg0, %arg2 : i32, i32
  }
  func.func @transform_1(%arg0: i32, %arg1: i32, %arg2: i32) -> (i32, i32) {
    %c0_i32 = arith.constant 0 : i32
    return %arg2, %arg1 : i32, i32
  }
  func.func @transform_2(%arg0: i32, %arg1: i32, %arg2: i32) -> (i32, i32) {
    %c0_i32 = arith.constant 0 : i32
    %c0_i32_0 = arith.constant 0 : i32
    return %c0_i32, %arg1 : i32, i32
  }
  func.func @transform_3(%arg0: i32, %arg1: i32, %arg2: i32) -> (i32, i32) {
    %c0_i32 = arith.constant 0 : i32
    return %arg0, %arg1 : i32, i32
  }
  func.func @transform_4(%arg0: i32, %arg1: i32, %arg2: i32) -> (i32, i32) {
    %c0_i32 = arith.constant 0 : i32
    return %arg0, %arg1 : i32, i32
  }
}

module attributes {stable_mosaic.version = 11 : i64} {
  func.func @_upsample_kernel(%arg0: i32, %arg1: i32, %arg2: memref<16xi32, #tpu.memory_space<smem>>, %arg3: memref<16xi32, #tpu.memory_space<smem>>, %arg4: memref<1x1x4x128xf32, #tpu.memory_space<vmem>>, %arg5: memref<1x1x4x128xf32, #tpu.memory_space<vmem>>, %arg6: memref<1x1x128xf32, #tpu.memory_space<vmem>>, %arg7: memref<16x4xf32, #tpu.memory_space<vmem>>, %arg8: memref<1x1x16x128xf32, #tpu.memory_space<vmem>>) attributes {dimension_semantics = [#tpu.dimension_semantics<parallel>, #tpu.dimension_semantics<arbitrary>], iteration_bounds = array<i64: 2, 16>, scalar_prefetch = 2 : i64, scratch_operands = 0 : i64, tpu.core_type = #tpu.core_type<tc>, window_params = [{transform_indices = @transform_0, window_bounds = array<i64: 1, 1, 4, 128>}, {transform_indices = @transform_1, window_bounds = array<i64: 1, 1, 4, 128>}, {transform_indices = @transform_2, window_bounds = array<i64: 1, 1, 128>}, {pipeline_mode = #tpu.pipeline_mode<synchronous>, transform_indices = @transform_3, window_bounds = array<i64: 16, 4>}, {transform_indices = @transform_4, window_bounds = array<i64: 1, 1, 16, 128>}]} {
    %c0 = arith.constant 0 : index
    %c0_0 = arith.constant 0 : index
    %c0_1 = arith.constant 0 : index
    %0 = vector.load %arg6[%c0, %c0_0, %c0_1] : memref<1x1x128xf32, #tpu.memory_space<vmem>>, vector<1x1x1xf32>
    %1 = vector.shape_cast %0 : vector<1x1x1xf32> to vector<1x1xf32>
    %c0_2 = arith.constant 0 : index
    %c0_3 = arith.constant 0 : index
    %c0_4 = arith.constant 0 : index
    %c0_5 = arith.constant 0 : index
    %2 = vector.load %arg4[%c0_2, %c0_3, %c0_4, %c0_5] : memref<1x1x4x128xf32, #tpu.memory_space<vmem>>, vector<1x1x4x128xf32>
    %3 = vector.shape_cast %2 : vector<1x1x4x128xf32> to vector<4x128xf32>
    %cst = arith.constant 1.000000e+00 : f32
    %4 = vector.broadcast %cst : f32 to vector<1x1xf32>
    %5 = arith.subf %4, %1 : vector<1x1xf32>
    %6 = vector.broadcast %5 : vector<1x1xf32> to vector<4x128xf32>
    %7 = arith.mulf %3, %6 : vector<4x128xf32>
    %c0_6 = arith.constant 0 : index
    %c0_7 = arith.constant 0 : index
    %c0_8 = arith.constant 0 : index
    %c0_9 = arith.constant 0 : index
    %8 = vector.load %arg5[%c0_6, %c0_7, %c0_8, %c0_9] : memref<1x1x4x128xf32, #tpu.memory_space<vmem>>, vector<1x1x4x128xf32>
    %9 = vector.shape_cast %8 : vector<1x1x4x128xf32> to vector<4x128xf32>
    %10 = vector.broadcast %1 : vector<1x1xf32> to vector<4x128xf32>
    %11 = arith.mulf %9, %10 : vector<4x128xf32>
    %12 = arith.addf %7, %11 : vector<4x128xf32>
    %c0_10 = arith.constant 0 : index
    %c0_11 = arith.constant 0 : index
    %13 = vector.load %arg7[%c0_10, %c0_11] : memref<16x4xf32, #tpu.memory_space<vmem>>, vector<16x4xf32>
    %cst_12 = arith.constant dense<0.000000e+00> : vector<16x128xf32>
    %14 = tpu.matmul %13, %12, %cst_12 {dimension_numbers = #tpu.dot_dimension_numbers<[1], [0], [0], [1], [0, 0, 1, 1], [], []>} : vector<16x4xf32>, vector<4x128xf32>, vector<16x128xf32> -> vector<16x128xf32>
    %c0_13 = arith.constant 0 : index
    %c0_14 = arith.constant 0 : index
    %c0_15 = arith.constant 0 : index
    %c0_16 = arith.constant 0 : index
    %15 = vector.load %arg8[%c0_13, %c0_14, %c0_15, %c0_16] : memref<1x1x16x128xf32, #tpu.memory_space<vmem>>, vector<1x1x16x128xf32>
    %16 = vector.shape_cast %15 : vector<1x1x16x128xf32> to vector<16x128xf32>
    %17 = vector.shape_cast %14 : vector<16x128xf32> to vector<1x1x16x128xf32>
    tpu.vector_store %arg8[%c0_13, %c0_14, %c0_15, %c0_16], %17 {strides = array<i32>} : memref<1x1x16x128xf32, #tpu.memory_space<vmem>>, vector<1x1x16x128xf32>,
    return
  }
  func.func @transform_0(%arg0: i32, %arg1: i32, %arg2: memref<16xi32, #tpu.memory_space<smem>>, %arg3: memref<16xi32, #tpu.memory_space<smem>>) -> (i32, i32, i32, i32) {
    %0 = arith.index_cast %arg1 : i32 to index
    %1 = memref.load %arg2[%0] : memref<16xi32, #tpu.memory_space<smem>>
    %c0_i32 = arith.constant 0 : i32
    %c0_i32_0 = arith.constant 0 : i32
    %c0_i32_1 = arith.constant 0 : i32
    return %arg0, %1, %c0_i32, %c0_i32_0 : i32, i32, i32, i32
  }
  func.func @transform_1(%arg0: i32, %arg1: i32, %arg2: memref<16xi32, #tpu.memory_space<smem>>, %arg3: memref<16xi32, #tpu.memory_space<smem>>) -> (i32, i32, i32, i32) {
    %0 = arith.index_cast %arg1 : i32 to index
    %1 = memref.load %arg3[%0] : memref<16xi32, #tpu.memory_space<smem>>
    %c0_i32 = arith.constant 0 : i32
    %c0_i32_0 = arith.constant 0 : i32
    %c0_i32_1 = arith.constant 0 : i32
    return %arg0, %1, %c0_i32, %c0_i32_0 : i32, i32, i32, i32
  }
  func.func @transform_2(%arg0: i32, %arg1: i32, %arg2: memref<16xi32, #tpu.memory_space<smem>>, %arg3: memref<16xi32, #tpu.memory_space<smem>>) -> (i32, i32, i32) {
    %c0_i32 = arith.constant 0 : i32
    %c0_i32_0 = arith.constant 0 : i32
    %c0_i32_1 = arith.constant 0 : i32
    return %arg1, %c0_i32, %c0_i32_0 : i32, i32, i32
  }
  func.func @transform_3(%arg0: i32, %arg1: i32, %arg2: memref<16xi32, #tpu.memory_space<smem>>, %arg3: memref<16xi32, #tpu.memory_space<smem>>) -> (i32, i32) {
    %c0_i32 = arith.constant 0 : i32
    %c0_i32_0 = arith.constant 0 : i32
    %c0_i32_1 = arith.constant 0 : i32
    return %c0_i32, %c0_i32_0 : i32, i32
  }
  func.func @transform_4(%arg0: i32, %arg1: i32, %arg2: memref<16xi32, #tpu.memory_space<smem>>, %arg3: memref<16xi32, #tpu.memory_space<smem>>) -> (i32, i32, i32, i32) {
    %c0_i32 = arith.constant 0 : i32
    %c0_i32_0 = arith.constant 0 : i32
    %c0_i32_1 = arith.constant 0 : i32
    return %arg0, %arg1, %c0_i32, %c0_i32_0 : i32, i32, i32, i32
  }
}

</mosaic_0001>

<llo_original>
// kernel: hrnet_v3_forward.14
$region0: #{hrnet_v3_forward.14}
  #allocation0 [shape = 'u32[]', space=smem, size = 0x4, offset = 0x4, fixed_abs, tag = 'smem constant byte address 0x4 - core index']
  #allocation1 [shape = 'u32[144,128]{1,0:T(1,128)}', space=vmem, size = 0x12000, scoped, tag = 'internal scratch']
  #allocation2 [shape = 'f32[128,128]{1,0:T(8,128)}', space=vmem, size = 0x10000, scoped, tag = 'scratch operand']
  %s0 = inlined_call_operand.vmem [shape: bf16[128,1536], index: 0, kind: input, shape index: {}]
  %s1 = inlined_call_operand.vmem [shape: bf16[1536,128], index: 1, kind: input, shape index: {}]
  %s2 = inlined_call_operand.vmem [shape: f32[1,128], index: 2, kind: input, shape index: {}]
  %s3 = inlined_call_operand.vmem [shape: f32[128,128], index: 3, kind: output, shape index: {}]
  %s4 = sld [smem:[#allocation0]]
  $region76: #{hrnet_v3_forward.14} parent=0
    _
  %s6 = ssub.s32 1, %s4
  %s7 = scalar_select 0, %s6, %s4
  $region1: #{hrnet_v3_forward.14} parent=0
    #allocation3 [shape = 'u8[262144]{0}', space=vmem, size = 0x40000, scoped, tag = 'input window, operand 0']
    loop: start=0, step=1, limit=5
    $region2: #{hrnet_v3_forward.14} parent=1 // loop_pre_header
      _
    $region3: #{hrnet_v3_forward.14} parent=1 // loop_header
      %s9 = sphi 0, %s13
      %p10 = scmp.ge.s32.totalorder %s9, 5
      %s16 = sphi 0, %s35
      %s17 = sphi 0, %s31
      %s18 = sphi 0, %s27
      %s19 = sphi 0, %s16
      %s20 = sphi 0, %s17
      %s21 = sphi 0, %s18
      %s22 = sphi 0, %s19
      %s23 = sphi 0, %s20
      %s24 = sphi 0, %s21
      %s40 = sphi 0, %s42
      %s43 = sphi 0, %s40
      %s44 = sphi 0, %s43
      %s60 = sphi 0, %s44
      %s68 = sphi 0, %s70
      %s71 = sphi 0, %s68
      %s72 = sphi 0, %s71
      %s88 = sphi 0, %s72
      %s94 = sphi 0, %s96
      %s97 = sphi 0, %s94
      %s98 = sphi 0, %s97
      %s114 = sphi 0, %s98
      %s122 = sphi 0, %s124
      %s125 = sphi 0, %s122
      %s126 = sphi 0, %s125
      %s142 = sphi 0, %s126
    $region4: #{hrnet_v3_forward.14} parent=1 // loop_header_branch
      %12 = sbr.rel (%p10) target = $region8
    $region5: #{hrnet_v3_forward.14} parent=1 // loop_body
      %s14 = ssub.s32 %s9, 1
      %s15 = ssub.s32 %s9, 2
      %s25 = sadd.s32 1, %s18
      %p26 = scmp.ge.s32.totalorder %s25, 3
      %s27 = scalar_select %p26, 0, %s25
      %s28 = sadd.s32 1, %s17
      %s29 = scalar_select %p26, %s28, %s17
      %p30 = scmp.ge.s32.totalorder %s29, 1
      %s31 = scalar_select %p30, 0, %s29
      %s32 = sadd.s32 1, %s16
      %s33 = scalar_select %p30, %s32, %s16
      %p34 = scmp.ge.s32.totalorder %s33, 1
      %s35 = scalar_select %p34, 0, %s33
      %s36 = ssub.s32 %s16, %s35
      %s37 = ssub.s32 %s18, %s27
      %s38 = sor.u32 %s36, %s37
      %p39 = scmp.eq.s32.totalorder %s38, 0
      %s41 = sadd.s32 %s40, 1
      %s42 = scalar_select %p39, %s40, %s41
      %p45 = pneg %p39
      %p46 = scmp.eq.s32.totalorder %s9, 2
      %p47 = por %p45, %p46
      %p48 = scmp.ne.s32.totalorder %s40, %s43
      %p49 = scmp.eq.s32.totalorder %s9, 0
      %p50 = por %p48, %p49
      %p51 = scmp.ne.s32.totalorder %s40, %s43
      %p52 = scmp.eq.s32.totalorder %s14, 2
      %p53 = por %p51, %p52
      %p54 = scmp.ne.s32.totalorder %s43, %s44
      %p55 = scmp.eq.s32.totalorder %s14, 0
      %p56 = por %p54, %p55
      %p57 = scmp.ne.s32.totalorder %s43, %s44
      %p58 = scmp.eq.s32.totalorder %s15, 2
      %p59 = por %p57, %p58
      %p61 = scmp.ne.s32.totalorder %s44, %s60
      %p62 = scmp.eq.s32.totalorder %s15, 0
      %p63 = por %p61, %p62
      %s64 = ssub.s32 %s18, %s27
      %s65 = ssub.s32 %s17, %s31
      %s66 = sor.u32 %s64, %s65
      %p67 = scmp.eq.s32.totalorder %s66, 0
      %s69 = sadd.s32 %s68, 1
      %s70 = scalar_select %p67, %s68, %s69
      %p73 = pneg %p67
      %p74 = scmp.eq.s32.totalorder %s9, 2
      %p75 = por %p73, %p74
      %p76 = scmp.ne.s32.totalorder %s68, %s71
      %p77 = scmp.eq.s32.totalorder %s9, 0
      %p78 = por %p76, %p77
      %p79 = scmp.ne.s32.totalorder %s68, %s71
      %p80 = scmp.eq.s32.totalorder %s14, 2
      %p81 = por %p79, %p80
      %p82 = scmp.ne.s32.totalorder %s71, %s72
      %p83 = scmp.eq.s32.totalorder %s14, 0
      %p84 = por %p82, %p83
      %p85 = scmp.ne.s32.totalorder %s71, %s72
      %p86 = scmp.eq.s32.totalorder %s15, 2
      %p87 = por %p85, %p86
      %p89 = scmp.ne.s32.totalorder %s72, %s88
      %p90 = scmp.eq.s32.totalorder %s15, 0
      %p91 = por %p89, %p90
      %s92 = ssub.s32 %s17, %s31
      %p93 = scmp.eq.s32.totalorder %s92, 0
      %s95 = sadd.s32 %s94, 1
      %s96 = scalar_select %p93, %s94, %s95
      %p99 = pneg %p93
      %p100 = scmp.eq.s32.totalorder %s9, 2
      %p101 = por %p99, %p100
      %p102 = scmp.ne.s32.totalorder %s94, %s97
      %p103 = scmp.eq.s32.totalorder %s9, 0
      %p104 = por %p102, %p103
      %p105 = scmp.ne.s32.totalorder %s94, %s97
      %p106 = scmp.eq.s32.totalorder %s14, 2
      %p107 = por %p105, %p106
      %p108 = scmp.ne.s32.totalorder %s97, %s98
      %p109 = scmp.eq.s32.totalorder %s14, 0
      %p110 = por %p108, %p109
      %p111 = scmp.ne.s32.totalorder %s97, %s98
      %p112 = scmp.eq.s32.totalorder %s15, 2
      %p113 = por %p111, %p112
      %p115 = scmp.ne.s32.totalorder %s98, %s114
      %p116 = scmp.eq.s32.totalorder %s15, 0
      %p117 = por %p115, %p116
      %s118 = ssub.s32 %s16, %s35
      %s119 = ssub.s32 %s17, %s31
      %s120 = sor.u32 %s118, %s119
      %p121 = scmp.eq.s32.totalorder %s120, 0
      %s123 = sadd.s32 %s122, 1
      %s124 = scalar_select %p121, %s122, %s123
      %p127 = pneg %p121
      %p128 = scmp.eq.s32.totalorder %s9, 2
      %p129 = por %p127, %p128
      %p130 = scmp.ne.s32.totalorder %s122, %s125
      %p131 = scmp.eq.s32.totalorder %s9, 0
      %p132 = por %p130, %p131
      %p133 = scmp.ne.s32.totalorder %s122, %s125
      %p134 = scmp.eq.s32.totalorder %s14, 2
      %p135 = por %p133, %p134
      %p136 = scmp.ne.s32.totalorder %s125, %s126
      %p137 = scmp.eq.s32.totalorder %s14, 0
      %p138 = por %p136, %p137
      %p139 = scmp.ne.s32.totalorder %s125, %s126
      %p140 = scmp.eq.s32.totalorder %s15, 2
      %p141 = por %p139, %p140
      %p143 = scmp.ne.s32.totalorder %s126, %s142
      %p144 = scmp.eq.s32.totalorder %s15, 0
      %p145 = por %p143, %p144
      %p146 = scmp.le.s32.totalorder 1, %s9
      %p147 = scmp.lt.s32.totalorder %s9, 4
      %p148 = pnand %p146, %p147
      %p149 = pneg %p148
      // Predicated region
      $region9: #{hrnet_v3_forward.14} parent=5 // pred_check
        _
      $region10: #{hrnet_v3_forward.14} parent=5 // pred_check_branch
        %151 = sbr.rel (%p148) target = $region12
      $region11: #{hrnet_v3_forward.14} parent=5 // pred_region
        %s152 = ssub.s32 %s9, 1
        // Predicated region
        $region13: #{hrnet_v3_forward.14} parent=11 // pred_check
          %p153 = pneg %p110
        $region14: #{hrnet_v3_forward.14} parent=11 // pred_check_branch
          %155 = sbr.rel (%p153) target = $region16
        $region15: #{hrnet_v3_forward.14} parent=11 // pred_region
          %p156 = scmp.lt.s32.totalorder %s20, 0
          %s157 = scalar_select %p156, %s20, 0
          %s158 = scalar_lea.vmem %s2, %s157
        $region16: #{hrnet_v3_forward.14} parent=11 // pred_fallthru
          _
      $region12: #{hrnet_v3_forward.14} parent=5 // pred_fallthru
        _
      %p159 = scmp.lt.s32.totalorder %s9, 3
      // Predicated region
      $region17: #{hrnet_v3_forward.14} parent=5 // pred_check
        %p160 = pneg %p159
      $region18: #{hrnet_v3_forward.14} parent=5 // pred_check_branch
        %162 = sbr.rel (%p160) target = $region20
      $region19: #{hrnet_v3_forward.14} parent=5 // pred_region
        // Predicated region
        $region21: #{hrnet_v3_forward.14} parent=19 // pred_check
          %p163 = pneg %p50
        $region22: #{hrnet_v3_forward.14} parent=19 // pred_check_branch
          %165 = sbr.rel (%p163) target = $region24
        $region23: #{hrnet_v3_forward.14} parent=19 // pred_region
          %s166 = sand.u32 %s40, 1
          %s167 = sand.u32 %s40, 1
          %s168 = smul.addr %s167, 256
          %s169 = scalar_lea.vmem [#allocation3], %s168
          %s170 = smul.u32 16, %s16
          %s171 = smul.u32 4, %s18
          %s172 = smul.addr %s170, 12
          %s173 = sadd.s32 %s171, %s172
          %s174 = smul.addr %s173, 4
          %s175 = scalar_lea.vmem %s0, %s174
          // Predicated region
          $region25: #{hrnet_v3_forward.14} parent=23 // pred_check
            _
          $region26: #{hrnet_v3_forward.14} parent=23 // pred_check_branch
            %177 = sbr.rel (0) target = $region28
          $region27: #{hrnet_v3_forward.14} parent=23 // pred_region
            // Predicated region
            $region29: #{hrnet_v3_forward.14} parent=27 // pred_check
              _
            $region30: #{hrnet_v3_forward.14} parent=27 // pred_check_branch
              %179 = sbr.rel (0) target = $region32
            $region31: #{hrnet_v3_forward.14} parent=27 // pred_region
              loop: start=0, step=1, limit=1
              $region33: #{hrnet_v3_forward.14} parent=31 // loop_pre_header
                _
              $region34: #{hrnet_v3_forward.14} parent=31 // loop_header
                %s181 = sphi 0, %s185
                %p182 = scmp.ge.s32.totalorder %s181, 1
                %s186 = sphi %s175, %s175
                %s187 = sphi %s169, %s169
              $region35: #{hrnet_v3_forward.14} parent=31 // loop_header_branch
                %184 = sbr.rel (%p182) target = $region39
              $region36: #{hrnet_v3_forward.14} parent=31 // loop_body
                %v188 = vld [vmem:[%s186] sm:$0xff]
                %189 = vst [vmem:[%s187] sm:$0xff] %v188
                %v190 = vld [vmem:[%s186 + $0x8] sm:$0xff]
                %191 = vst [vmem:[%s187 + $0x8] sm:$0xff] %v190
                %v192 = vld [vmem:[%s186 + $0x30] sm:$0xff]
                %193 = vst [vmem:[%s187 + $0x10] sm:$0xff] %v192
                %v194 = vld [vmem:[%s186 + $0x38] sm:$0xff]
                %195 = vst [vmem:[%s187 + $0x18] sm:$0xff] %v194
                %v196 = vld [vmem:[%s186 + $0x60] sm:$0xff]
                %197 = vst [vmem:[%s187 + $0x20] sm:$0xff] %v196
                %v198 = vld [vmem:[%s186 + $0x68] sm:$0xff]
                %199 = vst [vmem:[%s187 + $0x28] sm:$0xff] %v198
                %v200 = vld [vmem:[%s186 + $0x90] sm:$0xff]
                %201 = vst [vmem:[%s187 + $0x30] sm:$0xff] %v200
                %v202 = vld [vmem:[%s186 + $0x98] sm:$0xff]
                %203 = vst [vmem:[%s187 + $0x38] sm:$0xff] %v202
                %v204 = vld [vmem:[%s186 + $0xc0] sm:$0xff]
                %205 = vst [vmem:[%s187 + $0x40] sm:$0xff] %v204
                %v206 = vld [vmem:[%s186 + $0xc8] sm:$0xff]
                %207 = vst [vmem:[%s187 + $0x48] sm:$0xff] %v206
                %v208 = vld [vmem:[%s186 + $0xf0] sm:$0xff]
                %209 = vst [vmem:[%s187 + $0x50] sm:$0xff] %v208
                %v210 = vld [vmem:[%s186 + $0xf8] sm:$0xff]
                %211 = vst [vmem:[%s187 + $0x58] sm:$0xff] %v210
                %v212 = vld [vmem:[%s186 + $0x120] sm:$0xff]
                %213 = vst [vmem:[%s187 + $0x60] sm:$0xff] %v212
                %v214 = vld [vmem:[%s186 + $0x128] sm:$0xff]
                %215 = vst [vmem:[%s187 + $0x68] sm:$0xff] %v214
                %v216 = vld [vmem:[%s186 + $0x150] sm:$0xff]
                %217 = vst [vmem:[%s187 + $0x70] sm:$0xff] %v216
                %v218 = vld [vmem:[%s186 + $0x158] sm:$0xff]
                %219 = vst [vmem:[%s187 + $0x78] sm:$0xff] %v218
                %v220 = vld [vmem:[%s186 + $0x180] sm:$0xff]
                %221 = vst [vmem:[%s187 + $0x80] sm:$0xff] %v220
                %v222 = vld [vmem:[%s186 + $0x188] sm:$0xff]
                %223 = vst [vmem:[%s187 + $0x88] sm:$0xff] %v222
                %v224 = vld [vmem:[%s186 + $0x1b0] sm:$0xff]
                %225 = vst [vmem:[%s187 + $0x90] sm:$0xff] %v224
                %v226 = vld [vmem:[%s186 + $0x1b8] sm:$0xff]
                %227 = vst [vmem:[%s187 + $0x98] sm:$0xff] %v226
                %v228 = vld [vmem:[%s186 + $0x1e0] sm:$0xff]
                %229 = vst [vmem:[%s187 + $0xa0] sm:$0xff] %v228
                %v230 = vld [vmem:[%s186 + $0x1e8] sm:$0xff]
                %231 = vst [vmem:[%s187 + $0xa8] sm:$0xff] %v230
                %v232 = vld [vmem:[%s186 + $0x210] sm:$0xff]
                %233 = vst [vmem:[%s187 + $0xb0] sm:$0xff] %v232
                %v234 = vld [vmem:[%s186 + $0x218] sm:$0xff]
                %235 = vst [vmem:[%s187 + $0xb8] sm:$0xff] %v234
                %v236 = vld [vmem:[%s186 + $0x240] sm:$0xff]
                %237 = vst [vmem:[%s187 + $0xc0] sm:$0xff] %v236
                %v238 = vld [vmem:[%s186 + $0x248] sm:$0xff]
                %239 = vst [vmem:[%s187 + $0xc8] sm:$0xff] %v238
                %v240 = vld [vmem:[%s186 + $0x270] sm:$0xff]
                %241 = vst [vmem:[%s187 + $0xd0] sm:$0xff] %v240
                %v242 = vld [vmem:[%s186 + $0x278] sm:$0xff]
                %243 = vst [vmem:[%s187 + $0xd8] sm:$0xff] %v242
                %v244 = vld [vmem:[%s186 + $0x2a0] sm:$0xff]
                %245 = vst [vmem:[%s187 + $0xe0] sm:$0xff] %v244
                %v246 = vld [vmem:[%s186 + $0x2a8] sm:$0xff]
                %247 = vst [vmem:[%s187 + $0xe8] sm:$0xff] %v246
                %v248 = vld [vmem:[%s186 + $0x2d0] sm:$0xff]
                %249 = vst [vmem:[%s187 + $0xf0] sm:$0xff] %v248
                %v250 = vld [vmem:[%s186 + $0x2d8] sm:$0xff]
                %251 = vst [vmem:[%s187 + $0xf8] sm:$0xff] %v250
              $region37: #{hrnet_v3_forward.14} parent=31 // loop_footer
                %s185 = sadd.s32 1, %s181
              $region38: #{hrnet_v3_forward.14} parent=31 // loop_footer_branch
                %180 = sbr.rel target = $region34
              $region39: #{hrnet_v3_forward.14} parent=31 // loop_exit
                _
            $region32: #{hrnet_v3_forward.14} parent=27 // pred_fallthru
              _
            // Predicated region
            $region40: #{hrnet_v3_forward.14} parent=27 // pred_check
              _
            $region41: #{hrnet_v3_forward.14} parent=27 // pred_check_branch
              %253 = sbr.rel target = $region43
            $region42: #{hrnet_v3_forward.14} parent=27 // pred_region
              _
            $region43: #{hrnet_v3_forward.14} parent=27 // pred_fallthru
              _
          $region28: #{hrnet_v3_forward.14} parent=23 // pred_fallthru
            _
          %254 = vnop
        $region24: #{hrnet_v3_forward.14} parent=19 // pred_fallthru
          _
        // Predicated region
        $region44: #{hrnet_v3_forward.14} parent=19 // pred_check
          %p255 = pneg %p78
        $region45: #{hrnet_v3_forward.14} parent=19 // pred_check_branch
          %257 = sbr.rel (%p255) target = $region47
        $region46: #{hrnet_v3_forward.14} parent=19 // pred_region
          %s258 = smul.u32 64, %s18
          %p259 = scmp.lt.s32.totalorder %s258, 191
          %s260 = scalar_select %p259, %s258, 191
          %p261 = scmp.lt.s32.totalorder %s17, 0
          %s262 = scalar_select %p261, %s17, 0
          %s263 = sadd.s32 %s262, %s260
          %s264 = smul.addr %s263, 4
          %s265 = scalar_lea.vmem %s1, %s264
          %s266 = smul.u32 64, %s18
        $region47: #{hrnet_v3_forward.14} parent=19 // pred_fallthru
          _
      $region20: #{hrnet_v3_forward.14} parent=5 // pred_fallthru
        _
      %p267 = scmp.le.s32.totalorder 1, %s9
      %p268 = scmp.lt.s32.totalorder %s9, 4
      %p269 = pnand %p267, %p268
      %p270 = pneg %p269
      // Predicated region
      $region48: #{hrnet_v3_forward.14} parent=5 // pred_check
        _
      $region49: #{hrnet_v3_forward.14} parent=5 // pred_check_branch
        %272 = sbr.rel (%p269) target = $region51
      $region50: #{hrnet_v3_forward.14} parent=5 // pred_region
        %s273 = ssub.s32 %s9, 1
        %s274 = sand.u32 %s43, 1
        %s275 = sand.u32 %s43, 1
        %s276 = smul.addr %s275, 256
        %s277 = scalar_lea.vmem [#allocation3], %s276
        // Predicated region
        $region52: #{hrnet_v3_forward.14} parent=50 // pred_check
          %p278 = pneg %p56
        $region53: #{hrnet_v3_forward.14} parent=50 // pred_check_branch
          %280 = sbr.rel (%p278) target = $region55
        $region54: #{hrnet_v3_forward.14} parent=50 // pred_region
          _
        $region55: #{hrnet_v3_forward.14} parent=50 // pred_fallthru
          _
        %s281 = sand.u32 %s43, 1
        %s282 = sand.u32 %s43, 1
        %s283 = smul.addr %s282, 256
        %s284 = scalar_lea.vmem [#allocation3], %s283
        %p285 = pneg %p56
        %p286 = pneg %p53
        %s287 = smul.u32 64, %s21
        %p288 = scmp.lt.s32.totalorder %s287, 191
        %s289 = scalar_select %p288, %s287, 191
        %p290 = scmp.lt.s32.totalorder %s20, 0
        %s291 = scalar_select %p290, %s20, 0
        %s292 = sadd.s32 %s291, %s289
        %s293 = smul.addr %s292, 4
        %s294 = scalar_lea.vmem %s1, %s293
        %p295 = pneg %p84
        %p296 = pneg %p81
        %p297 = scmp.lt.s32.totalorder %s20, 0
        %s298 = scalar_select %p297, %s20, 0
        %s299 = scalar_lea.vmem %s2, %s298
        %p300 = pneg %p110
        %p301 = pneg %p107
        %p302 = pneg %p138
        %p303 = pneg %p135
        %s304 = smul.u32 16, %s19
        %p305 = scmp.lt.s32.totalorder %s304, 15
        %s306 = scalar_select %p305, %s304, 15
        %p307 = scmp.lt.s32.totalorder %s20, 0
        %s308 = scalar_select %p307, %s20, 0
        %s309 = sadd.s32 %s308, %s306
        %s310 = smul.addr %s309, 8
        %s311 = scalar_lea.vmem %s3, %s310
        %s312 = smul.u32 16, %s19
        %s313 = smul.u32 4, %s21
        %s314 = smul.u32 64, %s21
        %p315 = scmp.lt.s32.totalorder %s314, 191
        %s316 = scalar_select %p315, %s314, 191
        %p317 = scmp.lt.s32.totalorder %s20, 0
        %s318 = scalar_select %p317, %s20, 0
        %s319 = sadd.s32 %s318, %s316
        %s320 = smul.addr %s319, 4
        %s321 = scalar_lea.vmem %s1, %s320
        %s322 = smul.u32 64, %s21
        %p323 = scmp.lt.s32.totalorder %s20, 0
        %s324 = scalar_select %p323, %s20, 0
        %s325 = scalar_lea.vmem %s2, %s324
        %s326 = smul.u32 16, %s19
        %p327 = scmp.lt.s32.totalorder %s326, 15
        %s328 = scalar_select %p327, %s326, 15
        %p329 = scmp.lt.s32.totalorder %s20, 0
        %s330 = scalar_select %p329, %s20, 0
        %s331 = sadd.s32 %s330, %s328
        %s332 = smul.addr %s331, 8
        %s333 = scalar_lea.vmem %s3, %s332
        %s334 = smul.u32 16, %s19
        %p336 = scmp.eq.s32.totalorder %s21, 0
        // Predicated region
        $region56: #{hrnet_v3_forward.14} parent=50 // pred_check
          %p337 = pneg %p336
        $region57: #{hrnet_v3_forward.14} parent=50 // pred_check_branch
          %339 = sbr.rel (%p337) target = $region59
        $region58: #{hrnet_v3_forward.14} parent=50 // pred_region
          %340 = vst [vmem:[#allocation2] sm:$0xff] 0.0
          %341 = vst [vmem:[#allocation2 + $0x8] sm:$0xff] 0.0
          %342 = vst [vmem:[#allocation2 + $0x10] sm:$0xff] 0.0
          %343 = vst [vmem:[#allocation2 + $0x18] sm:$0xff] 0.0
          %344 = vst [vmem:[#allocation2 + $0x20] sm:$0xff] 0.0
          %345 = vst [vmem:[#allocation2 + $0x28] sm:$0xff] 0.0
          %346 = vst [vmem:[#allocation2 + $0x30] sm:$0xff] 0.0
          %347 = vst [vmem:[#allocation2 + $0x38] sm:$0xff] 0.0
          %348 = vst [vmem:[#allocation2 + $0x40] sm:$0xff] 0.0
          %349 = vst [vmem:[#allocation2 + $0x48] sm:$0xff] 0.0
          %350 = vst [vmem:[#allocation2 + $0x50] sm:$0xff] 0.0
          %351 = vst [vmem:[#allocation2 + $0x58] sm:$0xff] 0.0
          %352 = vst [vmem:[#allocation2 + $0x60] sm:$0xff] 0.0
          %353 = vst [vmem:[#allocation2 + $0x68] sm:$0xff] 0.0
          %354 = vst [vmem:[#allocation2 + $0x70] sm:$0xff] 0.0
          %355 = vst [vmem:[#allocation2 + $0x78] sm:$0xff] 0.0
        $region59: #{hrnet_v3_forward.14} parent=50 // pred_fallthru
          _
        %v356 = vld [vmem:[#allocation2] sm:$0xff]
        %v357 = vld [vmem:[#allocation2 + $0x8] sm:$0xff]
        %v358 = vld [vmem:[#allocation2 + $0x10] sm:$0xff]
        %v359 = vld [vmem:[#allocation2 + $0x18] sm:$0xff]
        %v360 = vld [vmem:[#allocation2 + $0x20] sm:$0xff]
        %v361 = vld [vmem:[#allocation2 + $0x28] sm:$0xff]
        %v362 = vld [vmem:[#allocation2 + $0x30] sm:$0xff]
        %v363 = vld [vmem:[#allocation2 + $0x38] sm:$0xff]
        %v364 = vld [vmem:[#allocation2 + $0x40] sm:$0xff]
        %v365 = vld [vmem:[#allocation2 + $0x48] sm:$0xff]
        %v366 = vld [vmem:[#allocation2 + $0x50] sm:$0xff]
        %v367 = vld [vmem:[#allocation2 + $0x58] sm:$0xff]
        %v368 = vld [vmem:[#allocation2 + $0x60] sm:$0xff]
        %v369 = vld [vmem:[#allocation2 + $0x68] sm:$0xff]
        %v370 = vld [vmem:[#allocation2 + $0x70] sm:$0xff]
        %v371 = vld [vmem:[#allocation2 + $0x78] sm:$0xff]
        %v372 = vld [vmem:[%s277] sm:$0xff]
        %v373 = vld [vmem:[%s277 + $0x8] sm:$0xff]
        %v374 = vld [vmem:[%s277 + $0x10] sm:$0xff]
        %v375 = vld [vmem:[%s277 + $0x18] sm:$0xff]
        %v376 = vld [vmem:[%s277 + $0x20] sm:$0xff]
        %v377 = vld [vmem:[%s277 + $0x28] sm:$0xff]
        %v378 = vld [vmem:[%s277 + $0x30] sm:$0xff]
        %v379 = vld [vmem:[%s277 + $0x38] sm:$0xff]
        %v380 = vld [vmem:[%s277 + $0x40] sm:$0xff]
        %v381 = vld [vmem:[%s277 + $0x48] sm:$0xff]
        %v382 = vld [vmem:[%s277 + $0x50] sm:$0xff]
        %v383 = vld [vmem:[%s277 + $0x58] sm:$0xff]
        %v384 = vld [vmem:[%s277 + $0x60] sm:$0xff]
        %v385 = vld [vmem:[%s277 + $0x68] sm:$0xff]
        %v386 = vld [vmem:[%s277 + $0x70] sm:$0xff]
        %v387 = vld [vmem:[%s277 + $0x78] sm:$0xff]
        %v388 = vld [vmem:[%s277 + $0x80] sm:$0xff]
        %v389 = vld [vmem:[%s277 + $0x88] sm:$0xff]
        %v390 = vld [vmem:[%s277 + $0x90] sm:$0xff]
        %v391 = vld [vmem:[%s277 + $0x98] sm:$0xff]
        %v392 = vld [vmem:[%s277 + $0xa0] sm:$0xff]
        %v393 = vld [vmem:[%s277 + $0xa8] sm:$0xff]
        %v394 = vld [vmem:[%s277 + $0xb0] sm:$0xff]
        %v395 = vld [vmem:[%s277 + $0xb8] sm:$0xff]
        %v396 = vld [vmem:[%s277 + $0xc0] sm:$0xff]
        %v397 = vld [vmem:[%s277 + $0xc8] sm:$0xff]
        %v398 = vld [vmem:[%s277 + $0xd0] sm:$0xff]
        %v399 = vld [vmem:[%s277 + $0xd8] sm:$0xff]
        %v400 = vld [vmem:[%s277 + $0xe0] sm:$0xff]
        %v401 = vld [vmem:[%s277 + $0xe8] sm:$0xff]
        %v402 = vld [vmem:[%s277 + $0xf0] sm:$0xff]
        %v403 = vld [vmem:[%s277 + $0xf8] sm:$0xff]
        %v404 = vld [vmem:[%s321] sm:$0xf]
        %v405 = vld [vmem:[%s321 + $0x4] sm:$0xf]
        %v406 = vld [vmem:[%s321 + $0x8] sm:$0xf]
        %v407 = vld [vmem:[%s321 + $0xc] sm:$0xf]
        %v408 = vld [vmem:[%s321 + $0x10] sm:$0xf]
        %v409 = vld [vmem:[%s321 + $0x14] sm:$0xf]
        %v410 = vld [vmem:[%s321 + $0x18] sm:$0xf]
        %v411 = vld [vmem:[%s321 + $0x1c] sm:$0xf]
        %v412 = vld [vmem:[%s321 + $0x20] sm:$0xf]
        %v413 = vld [vmem:[%s321 + $0x24] sm:$0xf]
        %v414 = vld [vmem:[%s321 + $0x28] sm:$0xf]
        %v415 = vld [vmem:[%s321 + $0x2c] sm:$0xf]
        %v416 = vld [vmem:[%s321 + $0x30] sm:$0xf]
        %v417 = vld [vmem:[%s321 + $0x34] sm:$0xf]
        %v418 = vld [vmem:[%s321 + $0x38] sm:$0xf]
        %v419 = vld [vmem:[%s321 + $0x3c] sm:$0xf]
        %v420 = vld [vmem:[%s321 + $0x40] sm:$0xf]
        %v421 = vld [vmem:[%s321 + $0x44] sm:$0xf]
        %v422 = vld [vmem:[%s321 + $0x48] sm:$0xf]
        %v423 = vld [vmem:[%s321 + $0x4c] sm:$0xf]
        %v424 = vld [vmem:[%s321 + $0x50] sm:$0xf]
        %v425 = vld [vmem:[%s321 + $0x54] sm:$0xf]
        %v426 = vld [vmem:[%s321 + $0x58] sm:$0xf]
        %v427 = vld [vmem:[%s321 + $0x5c] sm:$0xf]
        %v428 = vld [vmem:[%s321 + $0x60] sm:$0xf]
        %v429 = vld [vmem:[%s321 + $0x64] sm:$0xf]
        %v430 = vld [vmem:[%s321 + $0x68] sm:$0xf]
        %v431 = vld [vmem:[%s321 + $0x6c] sm:$0xf]
        %v432 = vld [vmem:[%s321 + $0x70] sm:$0xf]
        %v433 = vld [vmem:[%s321 + $0x74] sm:$0xf]
        %v434 = vld [vmem:[%s321 + $0x78] sm:$0xf]
        %v435 = vld [vmem:[%s321 + $0x7c] sm:$0xf]
        %v436 = vld [vmem:[%s321 + $0x80] sm:$0xf]
        %v437 = vld [vmem:[%s321 + $0x84] sm:$0xf]
        %v438 = vld [vmem:[%s321 + $0x88] sm:$0xf]
        %v439 = vld [vmem:[%s321 + $0x8c] sm:$0xf]
        %v440 = vld [vmem:[%s321 + $0x90] sm:$0xf]
        %v441 = vld [vmem:[%s321 + $0x94] sm:$0xf]
        %v442 = vld [vmem:[%s321 + $0x98] sm:$0xf]
        %v443 = vld [vmem:[%s321 + $0x9c] sm:$0xf]
        %v444 = vld [vmem:[%s321 + $0xa0] sm:$0xf]
        %v445 = vld [vmem:[%s321 + $0xa4] sm:$0xf]
        %v446 = vld [vmem:[%s321 + $0xa8] sm:$0xf]
        %v447 = vld [vmem:[%s321 + $0xac] sm:$0xf]
        %v448 = vld [vmem:[%s321 + $0xb0] sm:$0xf]
        %v449 = vld [vmem:[%s321 + $0xb4] sm:$0xf]
        %v450 = vld [vmem:[%s321 + $0xb8] sm:$0xf]
        %v451 = vld [vmem:[%s321 + $0xbc] sm:$0xf]
        %v452 = vld [vmem:[%s321 + $0xc0] sm:$0xf]
        %v453 = vld [vmem:[%s321 + $0xc4] sm:$0xf]
        %v454 = vld [vmem:[%s321 + $0xc8] sm:$0xf]
        %v455 = vld [vmem:[%s321 + $0xcc] sm:$0xf]
        %v456 = vld [vmem:[%s321 + $0xd0] sm:$0xf]
        %v457 = vld [vmem:[%s321 + $0xd4] sm:$0xf]
        %v458 = vld [vmem:[%s321 + $0xd8] sm:$0xf]
        %v459 = vld [vmem:[%s321 + $0xdc] sm:$0xf]
        %v460 = vld [vmem:[%s321 + $0xe0] sm:$0xf]
        %v461 = vld [vmem:[%s321 + $0xe4] sm:$0xf]
        %v462 = vld [vmem:[%s321 + $0xe8] sm:$0xf]
        %v463 = vld [vmem:[%s321 + $0xec] sm:$0xf]
        %v464 = vld [vmem:[%s321 + $0xf0] sm:$0xf]
        %v465 = vld [vmem:[%s321 + $0xf4] sm:$0xf]
        %v466 = vld [vmem:[%s321 + $0xf8] sm:$0xf]
        %v467 = vld [vmem:[%s321 + $0xfc] sm:$0xf]
        %v500 = vunpack.c.l.b16 %v372
        %v501 = vunpack.c.h.b16 %v372
        %v502 = vunpack.c.l.b16 %v373
        %v503 = vunpack.c.h.b16 %v373
        %v504 = vunpack.c.l.b16 %v374
        %v505 = vunpack.c.h.b16 %v374
        %v506 = vunpack.c.l.b16 %v375
        %v507 = vunpack.c.h.b16 %v375
        %v508 = vunpack.c.l.b16 %v376
        %v509 = vunpack.c.h.b16 %v376
        %v510 = vunpack.c.l.b16 %v377
        %v511 = vunpack.c.h.b16 %v377
        %v512 = vunpack.c.l.b16 %v378
        %v513 = vunpack.c.h.b16 %v378
        %v514 = vunpack.c.l.b16 %v379
        %v515 = vunpack.c.h.b16 %v379
        %v516 = vunpack.c.l.b16 %v380
        %v517 = vunpack.c.h.b16 %v380
        %v518 = vunpack.c.l.b16 %v381
        %v519 = vunpack.c.h.b16 %v381
        %v520 = vunpack.c.l.b16 %v382
        %v521 = vunpack.c.h.b16 %v382
        %v522 = vunpack.c.l.b16 %v383
        %v523 = vunpack.c.h.b16 %v383
        %v524 = vunpack.c.l.b16 %v384
        %v525 = vunpack.c.h.b16 %v384
        %v526 = vunpack.c.l.b16 %v385
        %v527 = vunpack.c.h.b16 %v385
        %v528 = vunpack.c.l.b16 %v386
        %v529 = vunpack.c.h.b16 %v386
        %v530 = vunpack.c.l.b16 %v387
        %v531 = vunpack.c.h.b16 %v387
        %v532 = vunpack.c.l.b16 %v388
        %v533 = vunpack.c.h.b16 %v388
        %v534 = vunpack.c.l.b16 %v389
        %v535 = vunpack.c.h.b16 %v389
        %v536 = vunpack.c.l.b16 %v390
        %v537 = vunpack.c.h.b16 %v390
        %v538 = vunpack.c.l.b16 %v391
        %v539 = vunpack.c.h.b16 %v391
        %v540 = vunpack.c.l.b16 %v392
        %v541 = vunpack.c.h.b16 %v392
        %v542 = vunpack.c.l.b16 %v393
        %v543 = vunpack.c.h.b16 %v393
        %v544 = vunpack.c.l.b16 %v394
        %v545 = vunpack.c.h.b16 %v394
        %v546 = vunpack.c.l.b16 %v395
        %v547 = vunpack.c.h.b16 %v395
        %v548 = vunpack.c.l.b16 %v396
        %v549 = vunpack.c.h.b16 %v396
        %v550 = vunpack.c.l.b16 %v397
        %v551 = vunpack.c.h.b16 %v397
        %v552 = vunpack.c.l.b16 %v398
        %v553 = vunpack.c.h.b16 %v398
        %v554 = vunpack.c.l.b16 %v399
        %v555 = vunpack.c.h.b16 %v399
        %v556 = vunpack.c.l.b16 %v400
        %v557 = vunpack.c.h.b16 %v400
        %v558 = vunpack.c.l.b16 %v401
        %v559 = vunpack.c.h.b16 %v401
        %v560 = vunpack.c.l.b16 %v402
        %v561 = vunpack.c.h.b16 %v402
        %v562 = vunpack.c.l.b16 %v403
        %v563 = vunpack.c.h.b16 %v403
        %v564 = vpack.c.b16 %v504, %v500
        %v565 = vpack.c.b16 %v505, %v501
        %v566 = vpack.c.b16 %v506, %v502
        %v567 = vpack.c.b16 %v507, %v503
        %v568 = vpack.c.b16 %v512, %v508
        %v569 = vpack.c.b16 %v513, %v509
        %v570 = vpack.c.b16 %v514, %v510
        %v571 = vpack.c.b16 %v515, %v511
        %v572 = vpack.c.b16 %v520, %v516
        %v573 = vpack.c.b16 %v521, %v517
        %v574 = vpack.c.b16 %v522, %v518
        %v575 = vpack.c.b16 %v523, %v519
        %v576 = vpack.c.b16 %v528, %v524
        %v577 = vpack.c.b16 %v529, %v525
        %v578 = vpack.c.b16 %v530, %v526
        %v579 = vpack.c.b16 %v531, %v527
        %v580 = vpack.c.b16 %v536, %v532
        %v581 = vpack.c.b16 %v537, %v533
        %v582 = vpack.c.b16 %v538, %v534
        %v583 = vpack.c.b16 %v539, %v535
        %v584 = vpack.c.b16 %v544, %v540
        %v585 = vpack.c.b16 %v545, %v541
        %v586 = vpack.c.b16 %v546, %v542
        %v587 = vpack.c.b16 %v547, %v543
        %v588 = vpack.c.b16 %v552, %v548
        %v589 = vpack.c.b16 %v553, %v549
        %v590 = vpack.c.b16 %v554, %v550
        %v591 = vpack.c.b16 %v555, %v551
        %v592 = vpack.c.b16 %v560, %v556
        %v593 = vpack.c.b16 %v561, %v557
        %v594 = vpack.c.b16 %v562, %v558
        %v595 = vpack.c.b16 %v563, %v559
        %v692 = vunpack.c.l.b16 %v404
        %v693 = vunpack.c.l.b16 %v405
        %v694 = vunpack.c.l.b16 %v406
        %v695 = vunpack.c.l.b16 %v407
        %v696 = vunpack.c.l.b16 %v408
        %v697 = vunpack.c.l.b16 %v409
        %v698 = vunpack.c.l.b16 %v410
        %v699 = vunpack.c.l.b16 %v411
        %v700 = vunpack.c.l.b16 %v412
        %v701 = vunpack.c.l.b16 %v413
        %v702 = vunpack.c.l.b16 %v414
        %v703 = vunpack.c.l.b16 %v415
        %v704 = vunpack.c.l.b16 %v416
        %v705 = vunpack.c.l.b16 %v417
        %v706 = vunpack.c.l.b16 %v418
        %v707 = vunpack.c.l.b16 %v419
        %v708 = vunpack.c.l.b16 %v420
        %v709 = vunpack.c.l.b16 %v421
        %v710 = vunpack.c.l.b16 %v422
        %v711 = vunpack.c.l.b16 %v423
        %v712 = vunpack.c.l.b16 %v424
        %v713 = vunpack.c.l.b16 %v425
        %v714 = vunpack.c.l.b16 %v426
        %v715 = vunpack.c.l.b16 %v427
        %v716 = vunpack.c.l.b16 %v428
        %v717 = vunpack.c.l.b16 %v429
        %v718 = vunpack.c.l.b16 %v430
        %v719 = vunpack.c.l.b16 %v431
        %v720 = vunpack.c.l.b16 %v432
        %v721 = vunpack.c.l.b16 %v433
        %v722 = vunpack.c.l.b16 %v434
        %v723 = vunpack.c.l.b16 %v435
        %v724 = vunpack.c.l.b16 %v436
        %v725 = vunpack.c.l.b16 %v437
        %v726 = vunpack.c.l.b16 %v438
        %v727 = vunpack.c.l.b16 %v439
        %v728 = vunpack.c.l.b16 %v440
        %v729 = vunpack.c.l.b16 %v441
        %v730 = vunpack.c.l.b16 %v442
        %v731 = vunpack.c.l.b16 %v443
        %v732 = vunpack.c.l.b16 %v444
        %v733 = vunpack.c.l.b16 %v445
        %v734 = vunpack.c.l.b16 %v446
        %v735 = vunpack.c.l.b16 %v447
        %v736 = vunpack.c.l.b16 %v448
        %v737 = vunpack.c.l.b16 %v449
        %v738 = vunpack.c.l.b16 %v450
        %v739 = vunpack.c.l.b16 %v451
        %v740 = vunpack.c.l.b16 %v452
        %v741 = vunpack.c.l.b16 %v453
        %v742 = vunpack.c.l.b16 %v454
        %v743 = vunpack.c.l.b16 %v455
        %v744 = vunpack.c.l.b16 %v456
        %v745 = vunpack.c.l.b16 %v457
        %v746 = vunpack.c.l.b16 %v458
        %v747 = vunpack.c.l.b16 %v459
        %v748 = vunpack.c.l.b16 %v460
        %v749 = vunpack.c.l.b16 %v461
        %v750 = vunpack.c.l.b16 %v462
        %v751 = vunpack.c.l.b16 %v463
        %v752 = vunpack.c.l.b16 %v464
        %v753 = vunpack.c.l.b16 %v465
        %v754 = vunpack.c.l.b16 %v466
        %v755 = vunpack.c.l.b16 %v467
        %v756 = vpack.c.b16 %v693, %v692
        %v757 = vpack.c.b16 %v695, %v694
        %v758 = vpack.c.b16 %v697, %v696
        %v759 = vpack.c.b16 %v699, %v698
        %v760 = vpack.c.b16 %v701, %v700
        %v761 = vpack.c.b16 %v703, %v702
        %v762 = vpack.c.b16 %v705, %v704
        %v763 = vpack.c.b16 %v707, %v706
        %v764 = vpack.c.b16 %v709, %v708
        %v765 = vpack.c.b16 %v711, %v710
        %v766 = vpack.c.b16 %v713, %v712
        %v767 = vpack.c.b16 %v715, %v714
        %v768 = vpack.c.b16 %v717, %v716
        %v769 = vpack.c.b16 %v719, %v718
        %v770 = vpack.c.b16 %v721, %v720
        %v771 = vpack.c.b16 %v723, %v722
        %v772 = vpack.c.b16 %v725, %v724
        %v773 = vpack.c.b16 %v727, %v726
        %v774 = vpack.c.b16 %v729, %v728
        %v775 = vpack.c.b16 %v731, %v730
        %v776 = vpack.c.b16 %v733, %v732
        %v777 = vpack.c.b16 %v735, %v734
        %v778 = vpack.c.b16 %v737, %v736
        %v779 = vpack.c.b16 %v739, %v738
        %v780 = vpack.c.b16 %v741, %v740
        %v781 = vpack.c.b16 %v743, %v742
        %v782 = vpack.c.b16 %v745, %v744
        %v783 = vpack.c.b16 %v747, %v746
        %v784 = vpack.c.b16 %v749, %v748
        %v785 = vpack.c.b16 %v751, %v750
        %v786 = vpack.c.b16 %v753, %v752
        %v787 = vpack.c.b16 %v755, %v754
        %820 = vmatprep.subr.bf16.mxu0 0
        %821 = vmatpush1.bf16.msra.mxu0 %v756
        %822 = vmatprep.subr.bf16.mxu0 0
        %823 = vmatpush1.bf16.msra.mxu0 %v757
        %824 = vmatprep.subr.bf16.mxu0 0
        %825 = vmatpush1.bf16.msra.mxu0 %v758
        %826 = vmatprep.subr.bf16.mxu0 0
        %827 = vmatpush1.bf16.msra.mxu0 %v759
        %828 = vmatprep.subr.bf16.mxu0 0
        %829 = vmatpush1.bf16.msra.mxu0 %v760
        %830 = vmatprep.subr.bf16.mxu0 0
        %831 = vmatpush1.bf16.msra.mxu0 %v761
        %832 = vmatprep.subr.bf16.mxu0 0
        %833 = vmatpush1.bf16.msra.mxu0 %v762
        %834 = vmatprep.subr.bf16.mxu0 0
        %835 = vmatpush1.bf16.msra.mxu0 %v763
        %836 = vmatprep.subr.bf16.mxu0 0
        %837 = vmatpush1.bf16.msra.mxu0 %v764
        %838 = vmatprep.subr.bf16.mxu0 0
        %839 = vmatpush1.bf16.msra.mxu0 %v765
        %840 = vmatprep.subr.bf16.mxu0 0
        %841 = vmatpush1.bf16.msra.mxu0 %v766
        %842 = vmatprep.subr.bf16.mxu0 0
        %843 = vmatpush1.bf16.msra.mxu0 %v767
        %844 = vmatprep.subr.bf16.mxu0 0
        %845 = vmatpush1.bf16.msra.mxu0 %v768
        %846 = vmatprep.subr.bf16.mxu0 0
        %847 = vmatpush1.bf16.msra.mxu0 %v769
        %848 = vmatprep.subr.bf16.mxu0 0
        %849 = vmatpush1.bf16.msra.mxu0 %v770
        %850 = vmatprep.subr.bf16.mxu0 0
        %851 = vmatpush1.bf16.msra.mxu0 %v771
        %852 = vmatprep.mubr.bf16.mxu0 %v565
        %853 = vmatmul.mubr.bf16.gmra.mrb[0].mxu0 %v564
        %v854 = vpop.f32.mrb[0].mxu0
        %v855 = vadd.f32 0.0, %v854
        %v856 = vpop.f32.mrb[0].mxu0
        %v857 = vpop.f32.mrb[0].mxu0
        %v858 = vadd.f32 0.0, %v857
        %v859 = vpop.f32.mrb[0].mxu0
        %860 = vmatprep.mubr.bf16.mxu0 %v569
        %861 = vmatmul.mubr.bf16.gmra.mrb[0].mxu0 %v568
        %v862 = vpop.f32.mrb[0].mxu0
        %v863 = vadd.f32 0.0, %v862
        %v864 = vpop.f32.mrb[0].mxu0
        %v865 = vpop.f32.mrb[0].mxu0
        %v866 = vadd.f32 0.0, %v865
        %v867 = vpop.f32.mrb[0].mxu0
        %868 = vmatprep.mubr.bf16.mxu0 %v573
        %869 = vmatmul.mubr.bf16.gmra.mrb[0].mxu0 %v572
        %v870 = vpop.f32.mrb[0].mxu0
        %v871 = vadd.f32 0.0, %v870
        %v872 = vpop.f32.mrb[0].mxu0
        %v873 = vpop.f32.mrb[0].mxu0
        %v874 = vadd.f32 0.0, %v873
        %v875 = vpop.f32.mrb[0].mxu0
        %876 = vmatprep.mubr.bf16.mxu0 %v577
        %877 = vmatmul.mubr.bf16.gmra.mrb[0].mxu0 %v576
        %v878 = vpop.f32.mrb[0].mxu0
        %v879 = vadd.f32 0.0, %v878
        %v880 = vpop.f32.mrb[0].mxu0
        %v881 = vpop.f32.mrb[0].mxu0
        %v882 = vadd.f32 0.0, %v881
        %v883 = vpop.f32.mrb[0].mxu0
        %884 = vmatprep.mubr.bf16.mxu0 %v581
        %885 = vmatmul.mubr.bf16.gmra.mrb[0].mxu0 %v580
        %v886 = vpop.f32.mrb[0].mxu0
        %v887 = vadd.f32 0.0, %v886
        %v888 = vpop.f32.mrb[0].mxu0
        %v889 = vpop.f32.mrb[0].mxu0
        %v890 = vadd.f32 0.0, %v889
        %v891 = vpop.f32.mrb[0].mxu0
        %892 = vmatprep.mubr.bf16.mxu0 %v585
        %893 = vmatmul.mubr.bf16.gmra.mrb[0].mxu0 %v584
        %v894 = vpop.f32.mrb[0].mxu0
        %v895 = vadd.f32 0.0, %v894
        %v896 = vpop.f32.mrb[0].mxu0
        %v897 = vpop.f32.mrb[0].mxu0
        %v898 = vadd.f32 0.0, %v897
        %v899 = vpop.f32.mrb[0].mxu0
        %900 = vmatprep.mubr.bf16.mxu0 %v589
        %901 = vmatmul.mubr.bf16.gmra.mrb[0].mxu0 %v588
        %v902 = vpop.f32.mrb[0].mxu0
        %v903 = vadd.f32 0.0, %v902
        %v904 = vpop.f32.mrb[0].mxu0
        %v905 = vpop.f32.mrb[0].mxu0
        %v906 = vadd.f32 0.0, %v905
        %v907 = vpop.f32.mrb[0].mxu0
        %908 = vmatprep.mubr.bf16.mxu0 %v593
        %909 = vmatmul.mubr.bf16.gmra.mrb[0].mxu0 %v592
        %v910 = vpop.f32.mrb[0].mxu0
        %v911 = vadd.f32 0.0, %v910
        %v912 = vpop.f32.mrb[0].mxu0
        %v913 = vpop.f32.mrb[0].mxu0
        %v914 = vadd.f32 0.0, %v913
        %v915 = vpop.f32.mrb[0].mxu0
        %916 = vdwg.mxu0
        %917 = vmatprep.subr.bf16.mxu0 0
        %918 = vmatpush1.bf16.msra.mxu0 %v772
        %919 = vmatprep.subr.bf16.mxu0 0
        %920 = vmatpush1.bf16.msra.mxu0 %v773
        %921 = vmatprep.subr.bf16.mxu0 0
        %922 = vmatpush1.bf16.msra.mxu0 %v774
        %923 = vmatprep.subr.bf16.mxu0 0
        %924 = vmatpush1.bf16.msra.mxu0 %v775
        %925 = vmatprep.subr.bf16.mxu0 0
        %926 = vmatpush1.bf16.msra.mxu0 %v776
        %927 = vmatprep.subr.bf16.mxu0 0
        %928 = vmatpush1.bf16.msra.mxu0 %v777
        %929 = vmatprep.subr.bf16.mxu0 0
        %930 = vmatpush1.bf16.msra.mxu0 %v778
        %931 = vmatprep.subr.bf16.mxu0 0
        %932 = vmatpush1.bf16.msra.mxu0 %v779
        %933 = vmatprep.subr.bf16.mxu0 0
        %934 = vmatpush1.bf16.msra.mxu0 %v780
        %935 = vmatprep.subr.bf16.mxu0 0
        %936 = vmatpush1.bf16.msra.mxu0 %v781
        %937 = vmatprep.subr.bf16.mxu0 0
        %938 = vmatpush1.bf16.msra.mxu0 %v782
        %939 = vmatprep.subr.bf16.mxu0 0
        %940 = vmatpush1.bf16.msra.mxu0 %v783
        %941 = vmatprep.subr.bf16.mxu0 0
        %942 = vmatpush1.bf16.msra.mxu0 %v784
        %943 = vmatprep.subr.bf16.mxu0 0
        %944 = vmatpush1.bf16.msra.mxu0 %v785
        %945 = vmatprep.subr.bf16.mxu0 0
        %946 = vmatpush1.bf16.msra.mxu0 %v786
        %947 = vmatprep.subr.bf16.mxu0 0
        %948 = vmatpush1.bf16.msra.mxu0 %v787
        %949 = vmatprep.mubr.bf16.mxu0 %v567
        %950 = vmatmul.mubr.bf16.gmra.mrb[0].mxu0 %v566
        %v951 = vpop.f32.mrb[0].mxu0
        %v952 = vadd.f32 %v855, %v951
        %v953 = vpop.f32.mrb[0].mxu0
        %v954 = vpop.f32.mrb[0].mxu0
        %v955 = vadd.f32 %v858, %v954
        %v956 = vpop.f32.mrb[0].mxu0
        %957 = vmatprep.mubr.bf16.mxu0 %v571
        %958 = vmatmul.mubr.bf16.gmra.mrb[0].mxu0 %v570
        %v959 = vpop.f32.mrb[0].mxu0
        %v960 = vadd.f32 %v863, %v959
        %v961 = vpop.f32.mrb[0].mxu0
        %v962 = vpop.f32.mrb[0].mxu0
        %v963 = vadd.f32 %v866, %v962
        %v964 = vpop.f32.mrb[0].mxu0
        %965 = vmatprep.mubr.bf16.mxu0 %v575
        %966 = vmatmul.mubr.bf16.gmra.mrb[0].mxu0 %v574
        %v967 = vpop.f32.mrb[0].mxu0
        %v968 = vadd.f32 %v871, %v967
        %v969 = vpop.f32.mrb[0].mxu0
        %v970 = vpop.f32.mrb[0].mxu0
        %v971 = vadd.f32 %v874, %v970
        %v972 = vpop.f32.mrb[0].mxu0
        %973 = vmatprep.mubr.bf16.mxu0 %v579
        %974 = vmatmul.mubr.bf16.gmra.mrb[0].mxu0 %v578
        %v975 = vpop.f32.mrb[0].mxu0
        %v976 = vadd.f32 %v879, %v975
        %v977 = vpop.f32.mrb[0].mxu0
        %v978 = vpop.f32.mrb[0].mxu0
        %v979 = vadd.f32 %v882, %v978
        %v980 = vpop.f32.mrb[0].mxu0
        %981 = vmatprep.mubr.bf16.mxu0 %v583
        %982 = vmatmul.mubr.bf16.gmra.mrb[0].mxu0 %v582
        %v983 = vpop.f32.mrb[0].mxu0
        %v984 = vadd.f32 %v887, %v983
        %v985 = vpop.f32.mrb[0].mxu0
        %v986 = vpop.f32.mrb[0].mxu0
        %v987 = vadd.f32 %v890, %v986
        %v988 = vpop.f32.mrb[0].mxu0
        %989 = vmatprep.mubr.bf16.mxu0 %v587
        %990 = vmatmul.mubr.bf16.gmra.mrb[0].mxu0 %v586
        %v991 = vpop.f32.mrb[0].mxu0
        %v992 = vadd.f32 %v895, %v991
        %v993 = vpop.f32.mrb[0].mxu0
        %v994 = vpop.f32.mrb[0].mxu0
        %v995 = vadd.f32 %v898, %v994
        %v996 = vpop.f32.mrb[0].mxu0
        %997 = vmatprep.mubr.bf16.mxu0 %v591
        %998 = vmatmul.mubr.bf16.gmra.mrb[0].mxu0 %v590
        %v999 = vpop.f32.mrb[0].mxu0
        %v1000 = vadd.f32 %v903, %v999
        %v1001 = vpop.f32.mrb[0].mxu0
        %v1002 = vpop.f32.mrb[0].mxu0
        %v1003 = vadd.f32 %v906, %v1002
        %v1004 = vpop.f32.mrb[0].mxu0
        %1005 = vmatprep.mubr.bf16.mxu0 %v595
        %1006 = vmatmul.mubr.bf16.gmra.mrb[0].mxu0 %v594
        %v1007 = vpop.f32.mrb[0].mxu0
        %v1008 = vadd.f32 %v911, %v1007
        %v1009 = vpop.f32.mrb[0].mxu0
        %v1010 = vpop.f32.mrb[0].mxu0
        %v1011 = vadd.f32 %v914, %v1010
        %v1012 = vpop.f32.mrb[0].mxu0
        %1013 = vdwg.mxu0
        %v1014 = vadd.f32 %v356, %v952
        %v1015 = vadd.f32 %v357, %v955
        %v1016 = vadd.f32 %v358, %v960
        %v1017 = vadd.f32 %v359, %v963
        %v1018 = vadd.f32 %v360, %v968
        %v1019 = vadd.f32 %v361, %v971
        %v1020 = vadd.f32 %v362, %v976
        %v1021 = vadd.f32 %v363, %v979
        %v1022 = vadd.f32 %v364, %v984
        %v1023 = vadd.f32 %v365, %v987
        %v1024 = vadd.f32 %v366, %v992
        %v1025 = vadd.f32 %v367, %v995
        %v1026 = vadd.f32 %v368, %v1000
        %v1027 = vadd.f32 %v369, %v1003
        %v1028 = vadd.f32 %v370, %v1008
        %v1029 = vadd.f32 %v371, %v1011
        %1030 = vst [vmem:[#allocation2] sm:$0xff] %v1014
        %1031 = vst [vmem:[#allocation2 + $0x8] sm:$0xff] %v1015
        %1032 = vst [vmem:[#allocation2 + $0x10] sm:$0xff] %v1016
        %1033 = vst [vmem:[#allocation2 + $0x18] sm:$0xff] %v1017
        %1034 = vst [vmem:[#allocation2 + $0x20] sm:$0xff] %v1018
        %1035 = vst [vmem:[#allocation2 + $0x28] sm:$0xff] %v1019
        %1036 = vst [vmem:[#allocation2 + $0x30] sm:$0xff] %v1020
        %1037 = vst [vmem:[#allocation2 + $0x38] sm:$0xff] %v1021
        %1038 = vst [vmem:[#allocation2 + $0x40] sm:$0xff] %v1022
        %1039 = vst [vmem:[#allocation2 + $0x48] sm:$0xff] %v1023
        %1040 = vst [vmem:[#allocation2 + $0x50] sm:$0xff] %v1024
        %1041 = vst [vmem:[#allocation2 + $0x58] sm:$0xff] %v1025
        %1042 = vst [vmem:[#allocation2 + $0x60] sm:$0xff] %v1026
        %1043 = vst [vmem:[#allocation2 + $0x68] sm:$0xff] %v1027
        %1044 = vst [vmem:[#allocation2 + $0x70] sm:$0xff] %v1028
        %1045 = vst [vmem:[#allocation2 + $0x78] sm:$0xff] %v1029
        %p1046 = scmp.eq.s32.totalorder %s21, 2
        // Predicated region
        $region60: #{hrnet_v3_forward.14} parent=50 // pred_check
          %p1047 = pneg %p1046
        $region61: #{hrnet_v3_forward.14} parent=50 // pred_check_branch
          %1049 = sbr.rel (%p1047) target = $region63
        $region62: #{hrnet_v3_forward.14} parent=50 // pred_region
          %v1050 = vld [vmem:[#allocation2] sm:$0xff]
          %v1051 = vld [vmem:[#allocation2 + $0x8] sm:$0xff]
          %v1052 = vld [vmem:[#allocation2 + $0x10] sm:$0xff]
          %v1053 = vld [vmem:[#allocation2 + $0x18] sm:$0xff]
          %v1054 = vld [vmem:[#allocation2 + $0x20] sm:$0xff]
          %v1055 = vld [vmem:[#allocation2 + $0x28] sm:$0xff]
          %v1056 = vld [vmem:[#allocation2 + $0x30] sm:$0xff]
          %v1057 = vld [vmem:[#allocation2 + $0x38] sm:$0xff]
          %v1058 = vld [vmem:[#allocation2 + $0x40] sm:$0xff]
          %v1059 = vld [vmem:[#allocation2 + $0x48] sm:$0xff]
          %v1060 = vld [vmem:[#allocation2 + $0x50] sm:$0xff]
          %v1061 = vld [vmem:[#allocation2 + $0x58] sm:$0xff]
          %v1062 = vld [vmem:[#allocation2 + $0x60] sm:$0xff]
          %v1063 = vld [vmem:[#allocation2 + $0x68] sm:$0xff]
          %v1064 = vld [vmem:[#allocation2 + $0x70] sm:$0xff]
          %v1065 = vld [vmem:[#allocation2 + $0x78] sm:$0xff]
          %v1066 = vld [vmem:[%s325] sm:$0x1]
          %v1068 = vlaneseq
          %v1069 = vshrl.u32 %v1068, 7
          %v1070 = vsub.s32 0, %v1069
          %v1071 = vrot.slane %v1066, %v1070
          %v1073 = vadd.f32 %v1050, %v1071
          %v1074 = vadd.f32 %v1051, %v1071
          %v1075 = vadd.f32 %v1052, %v1071
          %v1076 = vadd.f32 %v1053, %v1071
          %v1077 = vadd.f32 %v1054, %v1071
          %v1078 = vadd.f32 %v1055, %v1071
          %v1079 = vadd.f32 %v1056, %v1071
          %v1080 = vadd.f32 %v1057, %v1071
          %v1081 = vadd.f32 %v1058, %v1071
          %v1082 = vadd.f32 %v1059, %v1071
          %v1083 = vadd.f32 %v1060, %v1071
          %v1084 = vadd.f32 %v1061, %v1071
          %v1085 = vadd.f32 %v1062, %v1071
          %v1086 = vadd.f32 %v1063, %v1071
          %v1087 = vadd.f32 %v1064, %v1071
          %v1088 = vadd.f32 %v1065, %v1071
          %v1089 = vmax.f32 %v1073, 0.0
          %v1090 = vmax.f32 %v1074, 0.0
          %v1091 = vmax.f32 %v1075, 0.0
          %v1092 = vmax.f32 %v1076, 0.0
          %v1093 = vmax.f32 %v1077, 0.0
          %v1094 = vmax.f32 %v1078, 0.0
          %v1095 = vmax.f32 %v1079, 0.0
          %v1096 = vmax.f32 %v1080, 0.0
          %v1097 = vmax.f32 %v1081, 0.0
          %v1098 = vmax.f32 %v1082, 0.0
          %v1099 = vmax.f32 %v1083, 0.0
          %v1100 = vmax.f32 %v1084, 0.0
          %v1101 = vmax.f32 %v1085, 0.0
          %v1102 = vmax.f32 %v1086, 0.0
          %v1103 = vmax.f32 %v1087, 0.0
          %v1104 = vmax.f32 %v1088, 0.0
          %1105 = vst [vmem:[%s333] sm:$0xff] %v1089
          %1106 = vst [vmem:[%s333 + $0x8] sm:$0xff] %v1090
          %1107 = vst [vmem:[%s333 + $0x10] sm:$0xff] %v1091
          %1108 = vst [vmem:[%s333 + $0x18] sm:$0xff] %v1092
          %1109 = vst [vmem:[%s333 + $0x20] sm:$0xff] %v1093
          %1110 = vst [vmem:[%s333 + $0x28] sm:$0xff] %v1094
          %1111 = vst [vmem:[%s333 + $0x30] sm:$0xff] %v1095
          %1112 = vst [vmem:[%s333 + $0x38] sm:$0xff] %v1096
          %1113 = vst [vmem:[%s333 + $0x40] sm:$0xff] %v1097
          %1114 = vst [vmem:[%s333 + $0x48] sm:$0xff] %v1098
          %1115 = vst [vmem:[%s333 + $0x50] sm:$0xff] %v1099
          %1116 = vst [vmem:[%s333 + $0x58] sm:$0xff] %v1100
          %1117 = vst [vmem:[%s333 + $0x60] sm:$0xff] %v1101
          %1118 = vst [vmem:[%s333 + $0x68] sm:$0xff] %v1102
          %1119 = vst [vmem:[%s333 + $0x70] sm:$0xff] %v1103
          %1120 = vst [vmem:[%s333 + $0x78] sm:$0xff] %v1104
        $region63: #{hrnet_v3_forward.14} parent=50 // pred_fallthru
          _
        %s1121 = smul.u32 16, %s19
        %p1122 = scmp.lt.s32.totalorder %s1121, 15
        %s1123 = scalar_select %p1122, %s1121, 15
        %p1124 = scmp.lt.s32.totalorder %s20, 0
        %s1125 = scalar_select %p1124, %s20, 0
        %s1126 = sadd.s32 %s1125, %s1123
        %s1127 = smul.addr %s1126, 8
        %s1128 = scalar_lea.vmem %s3, %s1127
        // Predicated region
        $region64: #{hrnet_v3_forward.14} parent=50 // pred_check
          %p1129 = pneg %p135
        $region65: #{hrnet_v3_forward.14} parent=50 // pred_check_branch
          %1131 = sbr.rel (%p1129) target = $region67
        $region66: #{hrnet_v3_forward.14} parent=50 // pred_region
          %s1132 = smul.u32 16, %s19
        $region67: #{hrnet_v3_forward.14} parent=50 // pred_fallthru
          _
        // Predicated region
        $region68: #{hrnet_v3_forward.14} parent=50 // pred_check
          %p1133 = pneg %p135
        $region69: #{hrnet_v3_forward.14} parent=50 // pred_check_branch
          %1135 = sbr.rel (%p1133) target = $region71
        $region70: #{hrnet_v3_forward.14} parent=50 // pred_region
          %s1136 = smul.u32 16, %s19
          %p1137 = scmp.lt.s32.totalorder %s1136, 15
          %s1138 = scalar_select %p1137, %s1136, 15
          %p1139 = scmp.lt.s32.totalorder %s20, 0
          %s1140 = scalar_select %p1139, %s20, 0
          %s1141 = sadd.s32 %s1140, %s1138
          %s1142 = smul.addr %s1141, 8
          %s1143 = scalar_lea.vmem %s3, %s1142
        $region71: #{hrnet_v3_forward.14} parent=50 // pred_fallthru
          _
      $region51: #{hrnet_v3_forward.14} parent=5 // pred_fallthru
        _
      %p1144 = scmp.le.s32.totalorder 2, %s9
      // Predicated region
      $region72: #{hrnet_v3_forward.14} parent=5 // pred_check
        %p1145 = pneg %p1144
      $region73: #{hrnet_v3_forward.14} parent=5 // pred_check_branch
        %1147 = sbr.rel (%p1145) target = $region75
      $region74: #{hrnet_v3_forward.14} parent=5 // pred_region
        %s1148 = ssub.s32 %s9, 2
      $region75: #{hrnet_v3_forward.14} parent=5 // pred_fallthru
        _
    $region6: #{hrnet_v3_forward.14} parent=1 // loop_footer
      %s13 = sadd.s32 1, %s9
    $region7: #{hrnet_v3_forward.14} parent=1 // loop_footer_branch
      %8 = sbr.rel target = $region3
    $region8: #{hrnet_v3_forward.14} parent=1 // loop_exit
      _

// kernel: hrnet_v3_forward.15
$region0: #{hrnet_v3_forward.15}
  #allocation0 [shape = 'u32[]', space=smem, size = 0x4, offset = 0x4, fixed_abs, tag = 'smem constant byte address 0x4 - core index']
  #allocation1 [shape = 'u32[144,128]{1,0:T(1,128)}', space=vmem, size = 0x12000, scoped, tag = 'internal scratch']
  #allocation2 [shape = 'f32[32,128]{1,0:T(8,128)}', space=vmem, size = 0x4000, scoped, tag = 'scratch operand']
  %s0 = inlined_call_operand.vmem [shape: bf16[32,1536], index: 0, kind: input, shape index: {}]
  %s1 = inlined_call_operand.vmem [shape: bf16[1536,128], index: 1, kind: input, shape index: {}]
  %s2 = inlined_call_operand.vmem [shape: f32[1,128], index: 2, kind: input, shape index: {}]
  %s3 = inlined_call_operand.vmem [shape: f32[32,128], index: 3, kind: output, shape index: {}]
  %s4 = sld [smem:[#allocation0]]
  $region76: #{hrnet_v3_forward.15} parent=0
    _
  %s6 = ssub.s32 1, %s4
  %s7 = scalar_select 0, %s6, %s4
  $region1: #{hrnet_v3_forward.15} parent=0
    #allocation3 [shape = 'u8[65536]{0}', space=vmem, size = 0x10000, scoped, tag = 'input window, operand 0']
    loop: start=0, step=1, limit=5
    $region2: #{hrnet_v3_forward.15} parent=1 // loop_pre_header
      _
    $region3: #{hrnet_v3_forward.15} parent=1 // loop_header
      %s9 = sphi 0, %s13
      %p10 = scmp.ge.s32.totalorder %s9, 5
      %s16 = sphi 0, %s35
      %s17 = sphi 0, %s31
      %s18 = sphi 0, %s27
      %s19 = sphi 0, %s16
      %s20 = sphi 0, %s17
      %s21 = sphi 0, %s18
      %s22 = sphi 0, %s19
      %s23 = sphi 0, %s20
      %s24 = sphi 0, %s21
      %s40 = sphi 0, %s42
      %s43 = sphi 0, %s40
      %s44 = sphi 0, %s43
      %s60 = sphi 0, %s44
      %s68 = sphi 0, %s70
      %s71 = sphi 0, %s68
      %s72 = sphi 0, %s71
      %s88 = sphi 0, %s72
      %s94 = sphi 0, %s96
      %s97 = sphi 0, %s94
      %s98 = sphi 0, %s97
      %s114 = sphi 0, %s98
      %s122 = sphi 0, %s124
      %s125 = sphi 0, %s122
      %s126 = sphi 0, %s125
      %s142 = sphi 0, %s126
    $region4: #{hrnet_v3_forward.15} parent=1 // loop_header_branch
      %12 = sbr.rel (%p10) target = $region8
    $region5: #{hrnet_v3_forward.15} parent=1 // loop_body
      %s14 = ssub.s32 %s9, 1
      %s15 = ssub.s32 %s9, 2
      %s25 = sadd.s32 1, %s18
      %p26 = scmp.ge.s32.totalorder %s25, 3
      %s27 = scalar_select %p26, 0, %s25
      %s28 = sadd.s32 1, %s17
      %s29 = scalar_select %p26, %s28, %s17
      %p30 = scmp.ge.s32.totalorder %s29, 1
      %s31 = scalar_select %p30, 0, %s29
      %s32 = sadd.s32 1, %s16
      %s33 = scalar_select %p30, %s32, %s16
      %p34 = scmp.ge.s32.totalorder %s33, 1
      %s35 = scalar_select %p34, 0, %s33
      %s36 = ssub.s32 %s16, %s35
      %s37 = ssub.s32 %s18, %s27
      %s38 = sor.u32 %s36, %s37
      %p39 = scmp.eq.s32.totalorder %s38, 0
      %s41 = sadd.s32 %s40, 1
      %s42 = scalar_select %p39, %s40, %s41
      %p45 = pneg %p39
      %p46 = scmp.eq.s32.totalorder %s9, 2
      %p47 = por %p45, %p46
      %p48 = scmp.ne.s32.totalorder %s40, %s43
      %p49 = scmp.eq.s32.totalorder %s9, 0
      %p50 = por %p48, %p49
      %p51 = scmp.ne.s32.totalorder %s40, %s43
      %p52 = scmp.eq.s32.totalorder %s14, 2
      %p53 = por %p51, %p52
      %p54 = scmp.ne.s32.totalorder %s43, %s44
      %p55 = scmp.eq.s32.totalorder %s14, 0
      %p56 = por %p54, %p55
      %p57 = scmp.ne.s32.totalorder %s43, %s44
      %p58 = scmp.eq.s32.totalorder %s15, 2
      %p59 = por %p57, %p58
      %p61 = scmp.ne.s32.totalorder %s44, %s60
      %p62 = scmp.eq.s32.totalorder %s15, 0
      %p63 = por %p61, %p62
      %s64 = ssub.s32 %s18, %s27
      %s65 = ssub.s32 %s17, %s31
      %s66 = sor.u32 %s64, %s65
      %p67 = scmp.eq.s32.totalorder %s66, 0
      %s69 = sadd.s32 %s68, 1
      %s70 = scalar_select %p67, %s68, %s69
      %p73 = pneg %p67
      %p74 = scmp.eq.s32.totalorder %s9, 2
      %p75 = por %p73, %p74
      %p76 = scmp.ne.s32.totalorder %s68, %s71
      %p77 = scmp.eq.s32.totalorder %s9, 0
      %p78 = por %p76, %p77
      %p79 = scmp.ne.s32.totalorder %s68, %s71
      %p80 = scmp.eq.s32.totalorder %s14, 2
      %p81 = por %p79, %p80
      %p82 = scmp.ne.s32.totalorder %s71, %s72
      %p83 = scmp.eq.s32.totalorder %s14, 0
      %p84 = por %p82, %p83
      %p85 = scmp.ne.s32.totalorder %s71, %s72
      %p86 = scmp.eq.s32.totalorder %s15, 2
      %p87 = por %p85, %p86
      %p89 = scmp.ne.s32.totalorder %s72, %s88
      %p90 = scmp.eq.s32.totalorder %s15, 0
      %p91 = por %p89, %p90
      %s92 = ssub.s32 %s17, %s31
      %p93 = scmp.eq.s32.totalorder %s92, 0
      %s95 = sadd.s32 %s94, 1
      %s96 = scalar_select %p93, %s94, %s95
      %p99 = pneg %p93
      %p100 = scmp.eq.s32.totalorder %s9, 2
      %p101 = por %p99, %p100
      %p102 = scmp.ne.s32.totalorder %s94, %s97
      %p103 = scmp.eq.s32.totalorder %s9, 0
      %p104 = por %p102, %p103
      %p105 = scmp.ne.s32.totalorder %s94, %s97
      %p106 = scmp.eq.s32.totalorder %s14, 2
      %p107 = por %p105, %p106
      %p108 = scmp.ne.s32.totalorder %s97, %s98
      %p109 = scmp.eq.s32.totalorder %s14, 0
      %p110 = por %p108, %p109
      %p111 = scmp.ne.s32.totalorder %s97, %s98
      %p112 = scmp.eq.s32.totalorder %s15, 2
      %p113 = por %p111, %p112
      %p115 = scmp.ne.s32.totalorder %s98, %s114
      %p116 = scmp.eq.s32.totalorder %s15, 0
      %p117 = por %p115, %p116
      %s118 = ssub.s32 %s16, %s35
      %s119 = ssub.s32 %s17, %s31
      %s120 = sor.u32 %s118, %s119
      %p121 = scmp.eq.s32.totalorder %s120, 0
      %s123 = sadd.s32 %s122, 1
      %s124 = scalar_select %p121, %s122, %s123
      %p127 = pneg %p121
      %p128 = scmp.eq.s32.totalorder %s9, 2
      %p129 = por %p127, %p128
      %p130 = scmp.ne.s32.totalorder %s122, %s125
      %p131 = scmp.eq.s32.totalorder %s9, 0
      %p132 = por %p130, %p131
      %p133 = scmp.ne.s32.totalorder %s122, %s125
      %p134 = scmp.eq.s32.totalorder %s14, 2
      %p135 = por %p133, %p134
      %p136 = scmp.ne.s32.totalorder %s125, %s126
      %p137 = scmp.eq.s32.totalorder %s14, 0
      %p138 = por %p136, %p137
      %p139 = scmp.ne.s32.totalorder %s125, %s126
      %p140 = scmp.eq.s32.totalorder %s15, 2
      %p141 = por %p139, %p140
      %p143 = scmp.ne.s32.totalorder %s126, %s142
      %p144 = scmp.eq.s32.totalorder %s15, 0
      %p145 = por %p143, %p144
      %p146 = scmp.le.s32.totalorder 1, %s9
      %p147 = scmp.lt.s32.totalorder %s9, 4
      %p148 = pnand %p146, %p147
      %p149 = pneg %p148
      // Predicated region
      $region9: #{hrnet_v3_forward.15} parent=5 // pred_check
        _
      $region10: #{hrnet_v3_forward.15} parent=5 // pred_check_branch
        %151 = sbr.rel (%p148) target = $region12
      $region11: #{hrnet_v3_forward.15} parent=5 // pred_region
        %s152 = ssub.s32 %s9, 1
        // Predicated region
        $region13: #{hrnet_v3_forward.15} parent=11 // pred_check
          %p153 = pneg %p110
        $region14: #{hrnet_v3_forward.15} parent=11 // pred_check_branch
          %155 = sbr.rel (%p153) target = $region16
        $region15: #{hrnet_v3_forward.15} parent=11 // pred_region
          %p156 = scmp.lt.s32.totalorder %s20, 0
          %s157 = scalar_select %p156, %s20, 0
          %s158 = scalar_lea.vmem %s2, %s157
        $region16: #{hrnet_v3_forward.15} parent=11 // pred_fallthru
          _
      $region12: #{hrnet_v3_forward.15} parent=5 // pred_fallthru
        _
      %p159 = scmp.lt.s32.totalorder %s9, 3
      // Predicated region
      $region17: #{hrnet_v3_forward.15} parent=5 // pred_check
        %p160 = pneg %p159
      $region18: #{hrnet_v3_forward.15} parent=5 // pred_check_branch
        %162 = sbr.rel (%p160) target = $region20
      $region19: #{hrnet_v3_forward.15} parent=5 // pred_region
        // Predicated region
        $region21: #{hrnet_v3_forward.15} parent=19 // pred_check
          %p163 = pneg %p50
        $region22: #{hrnet_v3_forward.15} parent=19 // pred_check_branch
          %165 = sbr.rel (%p163) target = $region24
        $region23: #{hrnet_v3_forward.15} parent=19 // pred_region
          %s166 = sand.u32 %s40, 1
          %s167 = sand.u32 %s40, 1
          %s168 = smul.addr %s167, 64
          %s169 = scalar_lea.vmem [#allocation3], %s168
          %s170 = smul.u32 4, %s16
          %s171 = smul.u32 4, %s18
          %s172 = smul.addr %s170, 12
          %s173 = sadd.s32 %s171, %s172
          %s174 = smul.addr %s173, 4
          %s175 = scalar_lea.vmem %s0, %s174
          // Predicated region
          $region25: #{hrnet_v3_forward.15} parent=23 // pred_check
            _
          $region26: #{hrnet_v3_forward.15} parent=23 // pred_check_branch
            %177 = sbr.rel (0) target = $region28
          $region27: #{hrnet_v3_forward.15} parent=23 // pred_region
            // Predicated region
            $region29: #{hrnet_v3_forward.15} parent=27 // pred_check
              _
            $region30: #{hrnet_v3_forward.15} parent=27 // pred_check_branch
              %179 = sbr.rel (0) target = $region32
            $region31: #{hrnet_v3_forward.15} parent=27 // pred_region
              loop: start=0, step=1, limit=1
              $region33: #{hrnet_v3_forward.15} parent=31 // loop_pre_header
                _
              $region34: #{hrnet_v3_forward.15} parent=31 // loop_header
                %s181 = sphi 0, %s185
                %p182 = scmp.ge.s32.totalorder %s181, 1
                %s186 = sphi %s175, %s175
                %s187 = sphi %s169, %s169
              $region35: #{hrnet_v3_forward.15} parent=31 // loop_header_branch
                %184 = sbr.rel (%p182) target = $region39
              $region36: #{hrnet_v3_forward.15} parent=31 // loop_body
                %v188 = vld [vmem:[%s186] sm:$0xff]
                %189 = vst [vmem:[%s187] sm:$0xff] %v188
                %v190 = vld [vmem:[%s186 + $0x8] sm:$0xff]
                %191 = vst [vmem:[%s187 + $0x8] sm:$0xff] %v190
                %v192 = vld [vmem:[%s186 + $0x30] sm:$0xff]
                %193 = vst [vmem:[%s187 + $0x10] sm:$0xff] %v192
                %v194 = vld [vmem:[%s186 + $0x38] sm:$0xff]
                %195 = vst [vmem:[%s187 + $0x18] sm:$0xff] %v194
                %v196 = vld [vmem:[%s186 + $0x60] sm:$0xff]
                %197 = vst [vmem:[%s187 + $0x20] sm:$0xff] %v196
                %v198 = vld [vmem:[%s186 + $0x68] sm:$0xff]
                %199 = vst [vmem:[%s187 + $0x28] sm:$0xff] %v198
                %v200 = vld [vmem:[%s186 + $0x90] sm:$0xff]
                %201 = vst [vmem:[%s187 + $0x30] sm:$0xff] %v200
                %v202 = vld [vmem:[%s186 + $0x98] sm:$0xff]
                %203 = vst [vmem:[%s187 + $0x38] sm:$0xff] %v202
              $region37: #{hrnet_v3_forward.15} parent=31 // loop_footer
                %s185 = sadd.s32 1, %s181
              $region38: #{hrnet_v3_forward.15} parent=31 // loop_footer_branch
                %180 = sbr.rel target = $region34
              $region39: #{hrnet_v3_forward.15} parent=31 // loop_exit
                _
            $region32: #{hrnet_v3_forward.15} parent=27 // pred_fallthru
              _
            // Predicated region
            $region40: #{hrnet_v3_forward.15} parent=27 // pred_check
              _
            $region41: #{hrnet_v3_forward.15} parent=27 // pred_check_branch
              %205 = sbr.rel target = $region43
            $region42: #{hrnet_v3_forward.15} parent=27 // pred_region
              _
            $region43: #{hrnet_v3_forward.15} parent=27 // pred_fallthru
              _
          $region28: #{hrnet_v3_forward.15} parent=23 // pred_fallthru
            _
          %206 = vnop
        $region24: #{hrnet_v3_forward.15} parent=19 // pred_fallthru
          _
        // Predicated region
        $region44: #{hrnet_v3_forward.15} parent=19 // pred_check
          %p207 = pneg %p78
        $region45: #{hrnet_v3_forward.15} parent=19 // pred_check_branch
          %209 = sbr.rel (%p207) target = $region47
        $region46: #{hrnet_v3_forward.15} parent=19 // pred_region
          %s210 = smul.u32 64, %s18
          %p211 = scmp.lt.s32.totalorder %s210, 191
          %s212 = scalar_select %p211, %s210, 191
          %p213 = scmp.lt.s32.totalorder %s17, 0
          %s214 = scalar_select %p213, %s17, 0
          %s215 = sadd.s32 %s214, %s212
          %s216 = smul.addr %s215, 4
          %s217 = scalar_lea.vmem %s1, %s216
          %s218 = smul.u32 64, %s18
        $region47: #{hrnet_v3_forward.15} parent=19 // pred_fallthru
          _
      $region20: #{hrnet_v3_forward.15} parent=5 // pred_fallthru
        _
      %p219 = scmp.le.s32.totalorder 1, %s9
      %p220 = scmp.lt.s32.totalorder %s9, 4
      %p221 = pnand %p219, %p220
      %p222 = pneg %p221
      // Predicated region
      $region48: #{hrnet_v3_forward.15} parent=5 // pred_check
        _
      $region49: #{hrnet_v3_forward.15} parent=5 // pred_check_branch
        %224 = sbr.rel (%p221) target = $region51
      $region50: #{hrnet_v3_forward.15} parent=5 // pred_region
        %s225 = ssub.s32 %s9, 1
        %s226 = sand.u32 %s43, 1
        %s227 = sand.u32 %s43, 1
        %s228 = smul.addr %s227, 64
        %s229 = scalar_lea.vmem [#allocation3], %s228
        // Predicated region
        $region52: #{hrnet_v3_forward.15} parent=50 // pred_check
          %p230 = pneg %p56
        $region53: #{hrnet_v3_forward.15} parent=50 // pred_check_branch
          %232 = sbr.rel (%p230) target = $region55
        $region54: #{hrnet_v3_forward.15} parent=50 // pred_region
          _
        $region55: #{hrnet_v3_forward.15} parent=50 // pred_fallthru
          _
        %s233 = sand.u32 %s43, 1
        %s234 = sand.u32 %s43, 1
        %s235 = smul.addr %s234, 64
        %s236 = scalar_lea.vmem [#allocation3], %s235
        %p237 = pneg %p56
        %p238 = pneg %p53
        %s239 = smul.u32 64, %s21
        %p240 = scmp.lt.s32.totalorder %s239, 191
        %s241 = scalar_select %p240, %s239, 191
        %p242 = scmp.lt.s32.totalorder %s20, 0
        %s243 = scalar_select %p242, %s20, 0
        %s244 = sadd.s32 %s243, %s241
        %s245 = smul.addr %s244, 4
        %s246 = scalar_lea.vmem %s1, %s245
        %p247 = pneg %p84
        %p248 = pneg %p81
        %p249 = scmp.lt.s32.totalorder %s20, 0
        %s250 = scalar_select %p249, %s20, 0
        %s251 = scalar_lea.vmem %s2, %s250
        %p252 = pneg %p110
        %p253 = pneg %p107
        %p254 = pneg %p138
        %p255 = pneg %p135
        %s256 = smul.u32 4, %s19
        %p257 = scmp.lt.s32.totalorder %s256, 3
        %s258 = scalar_select %p257, %s256, 3
        %p259 = scmp.lt.s32.totalorder %s20, 0
        %s260 = scalar_select %p259, %s20, 0
        %s261 = sadd.s32 %s260, %s258
        %s262 = smul.addr %s261, 8
        %s263 = scalar_lea.vmem %s3, %s262
        %s264 = smul.u32 4, %s19
        %s265 = smul.u32 4, %s21
        %s266 = smul.u32 64, %s21
        %p267 = scmp.lt.s32.totalorder %s266, 191
        %s268 = scalar_select %p267, %s266, 191
        %p269 = scmp.lt.s32.totalorder %s20, 0
        %s270 = scalar_select %p269, %s20, 0
        %s271 = sadd.s32 %s270, %s268
        %s272 = smul.addr %s271, 4
        %s273 = scalar_lea.vmem %s1, %s272
        %s274 = smul.u32 64, %s21
        %p275 = scmp.lt.s32.totalorder %s20, 0
        %s276 = scalar_select %p275, %s20, 0
        %s277 = scalar_lea.vmem %s2, %s276
        %s278 = smul.u32 4, %s19
        %p279 = scmp.lt.s32.totalorder %s278, 3
        %s280 = scalar_select %p279, %s278, 3
        %p281 = scmp.lt.s32.totalorder %s20, 0
        %s282 = scalar_select %p281, %s20, 0
        %s283 = sadd.s32 %s282, %s280
        %s284 = smul.addr %s283, 8
        %s285 = scalar_lea.vmem %s3, %s284
        %s286 = smul.u32 4, %s19
        %p288 = scmp.eq.s32.totalorder %s21, 0
        // Predicated region
        $region56: #{hrnet_v3_forward.15} parent=50 // pred_check
          %p289 = pneg %p288
        $region57: #{hrnet_v3_forward.15} parent=50 // pred_check_branch
          %291 = sbr.rel (%p289) target = $region59
        $region58: #{hrnet_v3_forward.15} parent=50 // pred_region
          %292 = vst [vmem:[#allocation2] sm:$0xff] 0.0
          %293 = vst [vmem:[#allocation2 + $0x8] sm:$0xff] 0.0
          %294 = vst [vmem:[#allocation2 + $0x10] sm:$0xff] 0.0
          %295 = vst [vmem:[#allocation2 + $0x18] sm:$0xff] 0.0
        $region59: #{hrnet_v3_forward.15} parent=50 // pred_fallthru
          _
        %v296 = vld [vmem:[#allocation2] sm:$0xff]
        %v297 = vld [vmem:[#allocation2 + $0x8] sm:$0xff]
        %v298 = vld [vmem:[#allocation2 + $0x10] sm:$0xff]
        %v299 = vld [vmem:[#allocation2 + $0x18] sm:$0xff]
        %v300 = vld [vmem:[%s229] sm:$0xff]
        %v301 = vld [vmem:[%s229 + $0x8] sm:$0xff]
        %v302 = vld [vmem:[%s229 + $0x10] sm:$0xff]
        %v303 = vld [vmem:[%s229 + $0x18] sm:$0xff]
        %v304 = vld [vmem:[%s229 + $0x20] sm:$0xff]
        %v305 = vld [vmem:[%s229 + $0x28] sm:$0xff]
        %v306 = vld [vmem:[%s229 + $0x30] sm:$0xff]
        %v307 = vld [vmem:[%s229 + $0x38] sm:$0xff]
        %v308 = vld [vmem:[%s273] sm:$0xf]
        %v309 = vld [vmem:[%s273 + $0x4] sm:$0xf]
        %v310 = vld [vmem:[%s273 + $0x8] sm:$0xf]
        %v311 = vld [vmem:[%s273 + $0xc] sm:$0xf]
        %v312 = vld [vmem:[%s273 + $0x10] sm:$0xf]
        %v313 = vld [vmem:[%s273 + $0x14] sm:$0xf]
        %v314 = vld [vmem:[%s273 + $0x18] sm:$0xf]
        %v315 = vld [vmem:[%s273 + $0x1c] sm:$0xf]
        %v316 = vld [vmem:[%s273 + $0x20] sm:$0xf]
        %v317 = vld [vmem:[%s273 + $0x24] sm:$0xf]
        %v318 = vld [vmem:[%s273 + $0x28] sm:$0xf]
        %v319 = vld [vmem:[%s273 + $0x2c] sm:$0xf]
        %v320 = vld [vmem:[%s273 + $0x30] sm:$0xf]
        %v321 = vld [vmem:[%s273 + $0x34] sm:$0xf]
        %v322 = vld [vmem:[%s273 + $0x38] sm:$0xf]
        %v323 = vld [vmem:[%s273 + $0x3c] sm:$0xf]
        %v324 = vld [vmem:[%s273 + $0x40] sm:$0xf]
        %v325 = vld [vmem:[%s273 + $0x44] sm:$0xf]
        %v326 = vld [vmem:[%s273 + $0x48] sm:$0xf]
        %v327 = vld [vmem:[%s273 + $0x4c] sm:$0xf]
        %v328 = vld [vmem:[%s273 + $0x50] sm:$0xf]
        %v329 = vld [vmem:[%s273 + $0x54] sm:$0xf]
        %v330 = vld [vmem:[%s273 + $0x58] sm:$0xf]
        %v331 = vld [vmem:[%s273 + $0x5c] sm:$0xf]
        %v332 = vld [vmem:[%s273 + $0x60] sm:$0xf]
        %v333 = vld [vmem:[%s273 + $0x64] sm:$0xf]
        %v334 = vld [vmem:[%s273 + $0x68] sm:$0xf]
        %v335 = vld [vmem:[%s273 + $0x6c] sm:$0xf]
        %v336 = vld [vmem:[%s273 + $0x70] sm:$0xf]
        %v337 = vld [vmem:[%s273 + $0x74] sm:$0xf]
        %v338 = vld [vmem:[%s273 + $0x78] sm:$0xf]
        %v339 = vld [vmem:[%s273 + $0x7c] sm:$0xf]
        %v340 = vld [vmem:[%s273 + $0x80] sm:$0xf]
        %v341 = vld [vmem:[%s273 + $0x84] sm:$0xf]
        %v342 = vld [vmem:[%s273 + $0x88] sm:$0xf]
        %v343 = vld [vmem:[%s273 + $0x8c] sm:$0xf]
        %v344 = vld [vmem:[%s273 + $0x90] sm:$0xf]
        %v345 = vld [vmem:[%s273 + $0x94] sm:$0xf]
        %v346 = vld [vmem:[%s273 + $0x98] sm:$0xf]
        %v347 = vld [vmem:[%s273 + $0x9c] sm:$0xf]
        %v348 = vld [vmem:[%s273 + $0xa0] sm:$0xf]
        %v349 = vld [vmem:[%s273 + $0xa4] sm:$0xf]
        %v350 = vld [vmem:[%s273 + $0xa8] sm:$0xf]
        %v351 = vld [vmem:[%s273 + $0xac] sm:$0xf]
        %v352 = vld [vmem:[%s273 + $0xb0] sm:$0xf]
        %v353 = vld [vmem:[%s273 + $0xb4] sm:$0xf]
        %v354 = vld [vmem:[%s273 + $0xb8] sm:$0xf]
        %v355 = vld [vmem:[%s273 + $0xbc] sm:$0xf]
        %v356 = vld [vmem:[%s273 + $0xc0] sm:$0xf]
        %v357 = vld [vmem:[%s273 + $0xc4] sm:$0xf]
        %v358 = vld [vmem:[%s273 + $0xc8] sm:$0xf]
        %v359 = vld [vmem:[%s273 + $0xcc] sm:$0xf]
        %v360 = vld [vmem:[%s273 + $0xd0] sm:$0xf]
        %v361 = vld [vmem:[%s273 + $0xd4] sm:$0xf]
        %v362 = vld [vmem:[%s273 + $0xd8] sm:$0xf]
        %v363 = vld [vmem:[%s273 + $0xdc] sm:$0xf]
        %v364 = vld [vmem:[%s273 + $0xe0] sm:$0xf]
        %v365 = vld [vmem:[%s273 + $0xe4] sm:$0xf]
        %v366 = vld [vmem:[%s273 + $0xe8] sm:$0xf]
        %v367 = vld [vmem:[%s273 + $0xec] sm:$0xf]
        %v368 = vld [vmem:[%s273 + $0xf0] sm:$0xf]
        %v369 = vld [vmem:[%s273 + $0xf4] sm:$0xf]
        %v370 = vld [vmem:[%s273 + $0xf8] sm:$0xf]
        %v371 = vld [vmem:[%s273 + $0xfc] sm:$0xf]
        %v380 = vunpack.c.l.b16 %v300
        %v381 = vunpack.c.h.b16 %v300
        %v382 = vunpack.c.l.b16 %v301
        %v383 = vunpack.c.h.b16 %v301
        %v384 = vunpack.c.l.b16 %v302
        %v385 = vunpack.c.h.b16 %v302
        %v386 = vunpack.c.l.b16 %v303
        %v387 = vunpack.c.h.b16 %v303
        %v388 = vunpack.c.l.b16 %v304
        %v389 = vunpack.c.h.b16 %v304
        %v390 = vunpack.c.l.b16 %v305
        %v391 = vunpack.c.h.b16 %v305
        %v392 = vunpack.c.l.b16 %v306
        %v393 = vunpack.c.h.b16 %v306
        %v394 = vunpack.c.l.b16 %v307
        %v395 = vunpack.c.h.b16 %v307
        %v396 = vpack.c.b16 %v384, %v380
        %v397 = vpack.c.b16 %v385, %v381
        %v398 = vpack.c.b16 %v386, %v382
        %v399 = vpack.c.b16 %v387, %v383
        %v400 = vpack.c.b16 %v392, %v388
        %v401 = vpack.c.b16 %v393, %v389
        %v402 = vpack.c.b16 %v394, %v390
        %v403 = vpack.c.b16 %v395, %v391
        %v476 = vunpack.c.l.b16 %v308
        %v477 = vunpack.c.l.b16 %v309
        %v478 = vunpack.c.l.b16 %v310
        %v479 = vunpack.c.l.b16 %v311
        %v480 = vunpack.c.l.b16 %v312
        %v481 = vunpack.c.l.b16 %v313
        %v482 = vunpack.c.l.b16 %v314
        %v483 = vunpack.c.l.b16 %v315
        %v484 = vunpack.c.l.b16 %v316
        %v485 = vunpack.c.l.b16 %v317
        %v486 = vunpack.c.l.b16 %v318
        %v487 = vunpack.c.l.b16 %v319
        %v488 = vunpack.c.l.b16 %v320
        %v489 = vunpack.c.l.b16 %v321
        %v490 = vunpack.c.l.b16 %v322
        %v491 = vunpack.c.l.b16 %v323
        %v492 = vunpack.c.l.b16 %v324
        %v493 = vunpack.c.l.b16 %v325
        %v494 = vunpack.c.l.b16 %v326
        %v495 = vunpack.c.l.b16 %v327
        %v496 = vunpack.c.l.b16 %v328
        %v497 = vunpack.c.l.b16 %v329
        %v498 = vunpack.c.l.b16 %v330
        %v499 = vunpack.c.l.b16 %v331
        %v500 = vunpack.c.l.b16 %v332
        %v501 = vunpack.c.l.b16 %v333
        %v502 = vunpack.c.l.b16 %v334
        %v503 = vunpack.c.l.b16 %v335
        %v504 = vunpack.c.l.b16 %v336
        %v505 = vunpack.c.l.b16 %v337
        %v506 = vunpack.c.l.b16 %v338
        %v507 = vunpack.c.l.b16 %v339
        %v508 = vunpack.c.l.b16 %v340
        %v509 = vunpack.c.l.b16 %v341
        %v510 = vunpack.c.l.b16 %v342
        %v511 = vunpack.c.l.b16 %v343
        %v512 = vunpack.c.l.b16 %v344
        %v513 = vunpack.c.l.b16 %v345
        %v514 = vunpack.c.l.b16 %v346
        %v515 = vunpack.c.l.b16 %v347
        %v516 = vunpack.c.l.b16 %v348
        %v517 = vunpack.c.l.b16 %v349
        %v518 = vunpack.c.l.b16 %v350
        %v519 = vunpack.c.l.b16 %v351
        %v520 = vunpack.c.l.b16 %v352
        %v521 = vunpack.c.l.b16 %v353
        %v522 = vunpack.c.l.b16 %v354
        %v523 = vunpack.c.l.b16 %v355
        %v524 = vunpack.c.l.b16 %v356
        %v525 = vunpack.c.l.b16 %v357
        %v526 = vunpack.c.l.b16 %v358
        %v527 = vunpack.c.l.b16 %v359
        %v528 = vunpack.c.l.b16 %v360
        %v529 = vunpack.c.l.b16 %v361
        %v530 = vunpack.c.l.b16 %v362
        %v531 = vunpack.c.l.b16 %v363
        %v532 = vunpack.c.l.b16 %v364
        %v533 = vunpack.c.l.b16 %v365
        %v534 = vunpack.c.l.b16 %v366
        %v535 = vunpack.c.l.b16 %v367
        %v536 = vunpack.c.l.b16 %v368
        %v537 = vunpack.c.l.b16 %v369
        %v538 = vunpack.c.l.b16 %v370
        %v539 = vunpack.c.l.b16 %v371
        %v540 = vpack.c.b16 %v477, %v476
        %v541 = vpack.c.b16 %v479, %v478
        %v542 = vpack.c.b16 %v481, %v480
        %v543 = vpack.c.b16 %v483, %v482
        %v544 = vpack.c.b16 %v485, %v484
        %v545 = vpack.c.b16 %v487, %v486
        %v546 = vpack.c.b16 %v489, %v488
        %v547 = vpack.c.b16 %v491, %v490
        %v548 = vpack.c.b16 %v493, %v492
        %v549 = vpack.c.b16 %v495, %v494
        %v550 = vpack.c.b16 %v497, %v496
        %v551 = vpack.c.b16 %v499, %v498
        %v552 = vpack.c.b16 %v501, %v500
        %v553 = vpack.c.b16 %v503, %v502
        %v554 = vpack.c.b16 %v505, %v504
        %v555 = vpack.c.b16 %v507, %v506
        %v556 = vpack.c.b16 %v509, %v508
        %v557 = vpack.c.b16 %v511, %v510
        %v558 = vpack.c.b16 %v513, %v512
        %v559 = vpack.c.b16 %v515, %v514
        %v560 = vpack.c.b16 %v517, %v516
        %v561 = vpack.c.b16 %v519, %v518
        %v562 = vpack.c.b16 %v521, %v520
        %v563 = vpack.c.b16 %v523, %v522
        %v564 = vpack.c.b16 %v525, %v524
        %v565 = vpack.c.b16 %v527, %v526
        %v566 = vpack.c.b16 %v529, %v528
        %v567 = vpack.c.b16 %v531, %v530
        %v568 = vpack.c.b16 %v533, %v532
        %v569 = vpack.c.b16 %v535, %v534
        %v570 = vpack.c.b16 %v537, %v536
        %v571 = vpack.c.b16 %v539, %v538
        %604 = vmatprep.subr.bf16.mxu0 0
        %605 = vmatpush1.bf16.msra.mxu0 %v540
        %606 = vmatprep.subr.bf16.mxu0 0
        %607 = vmatpush1.bf16.msra.mxu0 %v541
        %608 = vmatprep.subr.bf16.mxu0 0
        %609 = vmatpush1.bf16.msra.mxu0 %v542
        %610 = vmatprep.subr.bf16.mxu0 0
        %611 = vmatpush1.bf16.msra.mxu0 %v543
        %612 = vmatprep.subr.bf16.mxu0 0
        %613 = vmatpush1.bf16.msra.mxu0 %v544
        %614 = vmatprep.subr.bf16.mxu0 0
        %615 = vmatpush1.bf16.msra.mxu0 %v545
        %616 = vmatprep.subr.bf16.mxu0 0
        %617 = vmatpush1.bf16.msra.mxu0 %v546
        %618 = vmatprep.subr.bf16.mxu0 0
        %619 = vmatpush1.bf16.msra.mxu0 %v547
        %620 = vmatprep.subr.bf16.mxu0 0
        %621 = vmatpush1.bf16.msra.mxu0 %v548
        %622 = vmatprep.subr.bf16.mxu0 0
        %623 = vmatpush1.bf16.msra.mxu0 %v549
        %624 = vmatprep.subr.bf16.mxu0 0
        %625 = vmatpush1.bf16.msra.mxu0 %v550
        %626 = vmatprep.subr.bf16.mxu0 0
        %627 = vmatpush1.bf16.msra.mxu0 %v551
        %628 = vmatprep.subr.bf16.mxu0 0
        %629 = vmatpush1.bf16.msra.mxu0 %v552
        %630 = vmatprep.subr.bf16.mxu0 0
        %631 = vmatpush1.bf16.msra.mxu0 %v553
        %632 = vmatprep.subr.bf16.mxu0 0
        %633 = vmatpush1.bf16.msra.mxu0 %v554
        %634 = vmatprep.subr.bf16.mxu0 0
        %635 = vmatpush1.bf16.msra.mxu0 %v555
        %636 = vmatprep.mubr.bf16.mxu0 %v397
        %637 = vmatmul.mubr.bf16.gmra.mrb[0].mxu0 %v396
        %v638 = vpop.f32.mrb[0].mxu0
        %v639 = vadd.f32 0.0, %v638
        %v640 = vpop.f32.mrb[0].mxu0
        %v641 = vpop.f32.mrb[0].mxu0
        %v642 = vadd.f32 0.0, %v641
        %v643 = vpop.f32.mrb[0].mxu0
        %644 = vmatprep.mubr.bf16.mxu0 %v401
        %645 = vmatmul.mubr.bf16.gmra.mrb[0].mxu0 %v400
        %v646 = vpop.f32.mrb[0].mxu0
        %v647 = vadd.f32 0.0, %v646
        %v648 = vpop.f32.mrb[0].mxu0
        %v649 = vpop.f32.mrb[0].mxu0
        %v650 = vadd.f32 0.0, %v649
        %v651 = vpop.f32.mrb[0].mxu0
        %652 = vdwg.mxu0
        %653 = vmatprep.subr.bf16.mxu0 0
        %654 = vmatpush1.bf16.msra.mxu0 %v556
        %655 = vmatprep.subr.bf16.mxu0 0
        %656 = vmatpush1.bf16.msra.mxu0 %v557
        %657 = vmatprep.subr.bf16.mxu0 0
        %658 = vmatpush1.bf16.msra.mxu0 %v558
        %659 = vmatprep.subr.bf16.mxu0 0
        %660 = vmatpush1.bf16.msra.mxu0 %v559
        %661 = vmatprep.subr.bf16.mxu0 0
        %662 = vmatpush1.bf16.msra.mxu0 %v560
        %663 = vmatprep.subr.bf16.mxu0 0
        %664 = vmatpush1.bf16.msra.mxu0 %v561
        %665 = vmatprep.subr.bf16.mxu0 0
        %666 = vmatpush1.bf16.msra.mxu0 %v562
        %667 = vmatprep.subr.bf16.mxu0 0
        %668 = vmatpush1.bf16.msra.mxu0 %v563
        %669 = vmatprep.subr.bf16.mxu0 0
        %670 = vmatpush1.bf16.msra.mxu0 %v564
        %671 = vmatprep.subr.bf16.mxu0 0
        %672 = vmatpush1.bf16.msra.mxu0 %v565
        %673 = vmatprep.subr.bf16.mxu0 0
        %674 = vmatpush1.bf16.msra.mxu0 %v566
        %675 = vmatprep.subr.bf16.mxu0 0
        %676 = vmatpush1.bf16.msra.mxu0 %v567
        %677 = vmatprep.subr.bf16.mxu0 0
        %678 = vmatpush1.bf16.msra.mxu0 %v568
        %679 = vmatprep.subr.bf16.mxu0 0
        %680 = vmatpush1.bf16.msra.mxu0 %v569
        %681 = vmatprep.subr.bf16.mxu0 0
        %682 = vmatpush1.bf16.msra.mxu0 %v570
        %683 = vmatprep.subr.bf16.mxu0 0
        %684 = vmatpush1.bf16.msra.mxu0 %v571
        %685 = vmatprep.mubr.bf16.mxu0 %v399
        %686 = vmatmul.mubr.bf16.gmra.mrb[0].mxu0 %v398
        %v687 = vpop.f32.mrb[0].mxu0
        %v688 = vadd.f32 %v639, %v687
        %v689 = vpop.f32.mrb[0].mxu0
        %v690 = vpop.f32.mrb[0].mxu0
        %v691 = vadd.f32 %v642, %v690
        %v692 = vpop.f32.mrb[0].mxu0
        %693 = vmatprep.mubr.bf16.mxu0 %v403
        %694 = vmatmul.mubr.bf16.gmra.mrb[0].mxu0 %v402
        %v695 = vpop.f32.mrb[0].mxu0
        %v696 = vadd.f32 %v647, %v695
        %v697 = vpop.f32.mrb[0].mxu0
        %v698 = vpop.f32.mrb[0].mxu0
        %v699 = vadd.f32 %v650, %v698
        %v700 = vpop.f32.mrb[0].mxu0
        %701 = vdwg.mxu0
        %v702 = vadd.f32 %v296, %v688
        %v703 = vadd.f32 %v297, %v691
        %v704 = vadd.f32 %v298, %v696
        %v705 = vadd.f32 %v299, %v699
        %706 = vst [vmem:[#allocation2] sm:$0xff] %v702
        %707 = vst [vmem:[#allocation2 + $0x8] sm:$0xff] %v703
        %708 = vst [vmem:[#allocation2 + $0x10] sm:$0xff] %v704
        %709 = vst [vmem:[#allocation2 + $0x18] sm:$0xff] %v705
        %p710 = scmp.eq.s32.totalorder %s21, 2
        // Predicated region
        $region60: #{hrnet_v3_forward.15} parent=50 // pred_check
          %p711 = pneg %p710
        $region61: #{hrnet_v3_forward.15} parent=50 // pred_check_branch
          %713 = sbr.rel (%p711) target = $region63
        $region62: #{hrnet_v3_forward.15} parent=50 // pred_region
          %v714 = vld [vmem:[#allocation2] sm:$0xff]
          %v715 = vld [vmem:[#allocation2 + $0x8] sm:$0xff]
          %v716 = vld [vmem:[#allocation2 + $0x10] sm:$0xff]
          %v717 = vld [vmem:[#allocation2 + $0x18] sm:$0xff]
          %v718 = vld [vmem:[%s277] sm:$0x1]
          %v720 = vlaneseq
          %v721 = vshrl.u32 %v720, 7
          %v722 = vsub.s32 0, %v721
          %v723 = vrot.slane %v718, %v722
          %v725 = vadd.f32 %v714, %v723
          %v726 = vadd.f32 %v715, %v723
          %v727 = vadd.f32 %v716, %v723
          %v728 = vadd.f32 %v717, %v723
          %v729 = vmax.f32 %v725, 0.0
          %v730 = vmax.f32 %v726, 0.0
          %v731 = vmax.f32 %v727, 0.0
          %v732 = vmax.f32 %v728, 0.0
          %733 = vst [vmem:[%s285] sm:$0xff] %v729
          %734 = vst [vmem:[%s285 + $0x8] sm:$0xff] %v730
          %735 = vst [vmem:[%s285 + $0x10] sm:$0xff] %v731
          %736 = vst [vmem:[%s285 + $0x18] sm:$0xff] %v732
        $region63: #{hrnet_v3_forward.15} parent=50 // pred_fallthru
          _
        %s737 = smul.u32 4, %s19
        %p738 = scmp.lt.s32.totalorder %s737, 3
        %s739 = scalar_select %p738, %s737, 3
        %p740 = scmp.lt.s32.totalorder %s20, 0
        %s741 = scalar_select %p740, %s20, 0
        %s742 = sadd.s32 %s741, %s739
        %s743 = smul.addr %s742, 8
        %s744 = scalar_lea.vmem %s3, %s743
        // Predicated region
        $region64: #{hrnet_v3_forward.15} parent=50 // pred_check
          %p745 = pneg %p135
        $region65: #{hrnet_v3_forward.15} parent=50 // pred_check_branch
          %747 = sbr.rel (%p745) target = $region67
        $region66: #{hrnet_v3_forward.15} parent=50 // pred_region
          %s748 = smul.u32 4, %s19
        $region67: #{hrnet_v3_forward.15} parent=50 // pred_fallthru
          _
        // Predicated region
        $region68: #{hrnet_v3_forward.15} parent=50 // pred_check
          %p749 = pneg %p135
        $region69: #{hrnet_v3_forward.15} parent=50 // pred_check_branch
          %751 = sbr.rel (%p749) target = $region71
        $region70: #{hrnet_v3_forward.15} parent=50 // pred_region
          %s752 = smul.u32 4, %s19
          %p753 = scmp.lt.s32.totalorder %s752, 3
          %s754 = scalar_select %p753, %s752, 3
          %p755 = scmp.lt.s32.totalorder %s20, 0
          %s756 = scalar_select %p755, %s20, 0
          %s757 = sadd.s32 %s756, %s754
          %s758 = smul.addr %s757, 8
          %s759 = scalar_lea.vmem %s3, %s758
        $region71: #{hrnet_v3_forward.15} parent=50 // pred_fallthru
          _
      $region51: #{hrnet_v3_forward.15} parent=5 // pred_fallthru
        _
      %p760 = scmp.le.s32.totalorder 2, %s9
      // Predicated region
      $region72: #{hrnet_v3_forward.15} parent=5 // pred_check
        %p761 = pneg %p760
      $region73: #{hrnet_v3_forward.15} parent=5 // pred_check_branch
        %763 = sbr.rel (%p761) target = $region75
      $region74: #{hrnet_v3_forward.15} parent=5 // pred_region
        %s764 = ssub.s32 %s9, 2
      $region75: #{hrnet_v3_forward.15} parent=5 // pred_fallthru
        _
    $region6: #{hrnet_v3_forward.15} parent=1 // loop_footer
      %s13 = sadd.s32 1, %s9
    $region7: #{hrnet_v3_forward.15} parent=1 // loop_footer_branch
      %8 = sbr.rel target = $region3
    $region8: #{hrnet_v3_forward.15} parent=1 // loop_exit
      _

// kernel: hrnet_v3_forward.17
$region0: #{hrnet_v3_forward.17}
  #allocation0 [shape = 'u32[]', space=smem, size = 0x4, offset = 0x4, fixed_abs, tag = 'smem constant byte address 0x4 - core index']
  #allocation1 [shape = 'u32[144,128]{1,0:T(1,128)}', space=vmem, size = 0x12000, scoped, tag = 'internal scratch']
  #allocation2 [shape = 'f32[8,128]{1,0:T(8,128)}', space=vmem, size = 0x1000, scoped, tag = 'scratch operand']
  %s0 = inlined_call_operand.vmem [shape: bf16[8,1536], index: 0, kind: input, shape index: {}]
  %s1 = inlined_call_operand.vmem [shape: bf16[1536,128], index: 1, kind: input, shape index: {}]
  %s2 = inlined_call_operand.vmem [shape: f32[1,128], index: 2, kind: input, shape index: {}]
  %s3 = inlined_call_operand.vmem [shape: f32[8,128], index: 3, kind: output, shape index: {}]
  %s4 = sld [smem:[#allocation0]]
  $region53: #{hrnet_v3_forward.17} parent=0
    _
  %s6 = ssub.s32 1, %s4
  %s7 = scalar_select 0, %s6, %s4
  loop: start=0, step=1, limit=5
  $region2: #{hrnet_v3_forward.17} parent=0 // loop_pre_header
    _
  $region3: #{hrnet_v3_forward.17} parent=0 // loop_header
    %s9 = sphi 0, %s13
    %p10 = scmp.ge.s32.totalorder %s9, 5
    %s16 = sphi 0, %s35
    %s17 = sphi 0, %s31
    %s18 = sphi 0, %s27
    %s19 = sphi 0, %s16
    %s20 = sphi 0, %s17
    %s21 = sphi 0, %s18
    %s22 = sphi 0, %s19
    %s23 = sphi 0, %s20
    %s24 = sphi 0, %s21
    %s40 = sphi 0, %s42
    %s43 = sphi 0, %s40
    %s44 = sphi 0, %s43
    %s60 = sphi 0, %s44
    %s68 = sphi 0, %s70
    %s71 = sphi 0, %s68
    %s72 = sphi 0, %s71
    %s88 = sphi 0, %s72
    %s94 = sphi 0, %s96
    %s97 = sphi 0, %s94
    %s98 = sphi 0, %s97
    %s114 = sphi 0, %s98
    %s122 = sphi 0, %s124
    %s125 = sphi 0, %s122
    %s126 = sphi 0, %s125
    %s142 = sphi 0, %s126
  $region4: #{hrnet_v3_forward.17} parent=0 // loop_header_branch
    %12 = sbr.rel (%p10) target = $region8
  $region5: #{hrnet_v3_forward.17} parent=0 // loop_body
    %s14 = ssub.s32 %s9, 1
    %s15 = ssub.s32 %s9, 2
    %s25 = sadd.s32 1, %s18
    %p26 = scmp.ge.s32.totalorder %s25, 3
    %s27 = scalar_select %p26, 0, %s25
    %s28 = sadd.s32 1, %s17
    %s29 = scalar_select %p26, %s28, %s17
    %p30 = scmp.ge.s32.totalorder %s29, 1
    %s31 = scalar_select %p30, 0, %s29
    %s32 = sadd.s32 1, %s16
    %s33 = scalar_select %p30, %s32, %s16
    %p34 = scmp.ge.s32.totalorder %s33, 1
    %s35 = scalar_select %p34, 0, %s33
    %s36 = ssub.s32 %s16, %s35
    %s37 = ssub.s32 %s18, %s27
    %s38 = sor.u32 %s36, %s37
    %p39 = scmp.eq.s32.totalorder %s38, 0
    %s41 = sadd.s32 %s40, 1
    %s42 = scalar_select %p39, %s40, %s41
    %p45 = pneg %p39
    %p46 = scmp.eq.s32.totalorder %s9, 2
    %p47 = por %p45, %p46
    %p48 = scmp.ne.s32.totalorder %s40, %s43
    %p49 = scmp.eq.s32.totalorder %s9, 0
    %p50 = por %p48, %p49
    %p51 = scmp.ne.s32.totalorder %s40, %s43
    %p52 = scmp.eq.s32.totalorder %s14, 2
    %p53 = por %p51, %p52
    %p54 = scmp.ne.s32.totalorder %s43, %s44
    %p55 = scmp.eq.s32.totalorder %s14, 0
    %p56 = por %p54, %p55
    %p57 = scmp.ne.s32.totalorder %s43, %s44
    %p58 = scmp.eq.s32.totalorder %s15, 2
    %p59 = por %p57, %p58
    %p61 = scmp.ne.s32.totalorder %s44, %s60
    %p62 = scmp.eq.s32.totalorder %s15, 0
    %p63 = por %p61, %p62
    %s64 = ssub.s32 %s18, %s27
    %s65 = ssub.s32 %s17, %s31
    %s66 = sor.u32 %s64, %s65
    %p67 = scmp.eq.s32.totalorder %s66, 0
    %s69 = sadd.s32 %s68, 1
    %s70 = scalar_select %p67, %s68, %s69
    %p73 = pneg %p67
    %p74 = scmp.eq.s32.totalorder %s9, 2
    %p75 = por %p73, %p74
    %p76 = scmp.ne.s32.totalorder %s68, %s71
    %p77 = scmp.eq.s32.totalorder %s9, 0
    %p78 = por %p76, %p77
    %p79 = scmp.ne.s32.totalorder %s68, %s71
    %p80 = scmp.eq.s32.totalorder %s14, 2
    %p81 = por %p79, %p80
    %p82 = scmp.ne.s32.totalorder %s71, %s72
    %p83 = scmp.eq.s32.totalorder %s14, 0
    %p84 = por %p82, %p83
    %p85 = scmp.ne.s32.totalorder %s71, %s72
    %p86 = scmp.eq.s32.totalorder %s15, 2
    %p87 = por %p85, %p86
    %p89 = scmp.ne.s32.totalorder %s72, %s88
    %p90 = scmp.eq.s32.totalorder %s15, 0
    %p91 = por %p89, %p90
    %s92 = ssub.s32 %s17, %s31
    %p93 = scmp.eq.s32.totalorder %s92, 0
    %s95 = sadd.s32 %s94, 1
    %s96 = scalar_select %p93, %s94, %s95
    %p99 = pneg %p93
    %p100 = scmp.eq.s32.totalorder %s9, 2
    %p101 = por %p99, %p100
    %p102 = scmp.ne.s32.totalorder %s94, %s97
    %p103 = scmp.eq.s32.totalorder %s9, 0
    %p104 = por %p102, %p103
    %p105 = scmp.ne.s32.totalorder %s94, %s97
    %p106 = scmp.eq.s32.totalorder %s14, 2
    %p107 = por %p105, %p106
    %p108 = scmp.ne.s32.totalorder %s97, %s98
    %p109 = scmp.eq.s32.totalorder %s14, 0
    %p110 = por %p108, %p109
    %p111 = scmp.ne.s32.totalorder %s97, %s98
    %p112 = scmp.eq.s32.totalorder %s15, 2
    %p113 = por %p111, %p112
    %p115 = scmp.ne.s32.totalorder %s98, %s114
    %p116 = scmp.eq.s32.totalorder %s15, 0
    %p117 = por %p115, %p116
    %s118 = ssub.s32 %s16, %s35
    %s119 = ssub.s32 %s17, %s31
    %s120 = sor.u32 %s118, %s119
    %p121 = scmp.eq.s32.totalorder %s120, 0
    %s123 = sadd.s32 %s122, 1
    %s124 = scalar_select %p121, %s122, %s123
    %p127 = pneg %p121
    %p128 = scmp.eq.s32.totalorder %s9, 2
    %p129 = por %p127, %p128
    %p130 = scmp.ne.s32.totalorder %s122, %s125
    %p131 = scmp.eq.s32.totalorder %s9, 0
    %p132 = por %p130, %p131
    %p133 = scmp.ne.s32.totalorder %s122, %s125
    %p134 = scmp.eq.s32.totalorder %s14, 2
    %p135 = por %p133, %p134
    %p136 = scmp.ne.s32.totalorder %s125, %s126
    %p137 = scmp.eq.s32.totalorder %s14, 0
    %p138 = por %p136, %p137
    %p139 = scmp.ne.s32.totalorder %s125, %s126
    %p140 = scmp.eq.s32.totalorder %s15, 2
    %p141 = por %p139, %p140
    %p143 = scmp.ne.s32.totalorder %s126, %s142
    %p144 = scmp.eq.s32.totalorder %s15, 0
    %p145 = por %p143, %p144
    %p146 = scmp.le.s32.totalorder 1, %s9
    %p147 = scmp.lt.s32.totalorder %s9, 4
    %p148 = pnand %p146, %p147
    %p149 = pneg %p148
    // Predicated region
    $region9: #{hrnet_v3_forward.17} parent=5 // pred_check
      _
    $region10: #{hrnet_v3_forward.17} parent=5 // pred_check_branch
      %151 = sbr.rel (%p148) target = $region12
    $region11: #{hrnet_v3_forward.17} parent=5 // pred_region
      %s152 = ssub.s32 %s9, 1
      // Predicated region
      $region13: #{hrnet_v3_forward.17} parent=11 // pred_check
        %p153 = pneg %p110
      $region14: #{hrnet_v3_forward.17} parent=11 // pred_check_branch
        %155 = sbr.rel (%p153) target = $region16
      $region15: #{hrnet_v3_forward.17} parent=11 // pred_region
        %p156 = scmp.lt.s32.totalorder %s20, 0
        %s157 = scalar_select %p156, %s20, 0
        %s158 = scalar_lea.vmem %s2, %s157
      $region16: #{hrnet_v3_forward.17} parent=11 // pred_fallthru
        _
    $region12: #{hrnet_v3_forward.17} parent=5 // pred_fallthru
      _
    %p159 = scmp.lt.s32.totalorder %s9, 3
    // Predicated region
    $region17: #{hrnet_v3_forward.17} parent=5 // pred_check
      %p160 = pneg %p159
    $region18: #{hrnet_v3_forward.17} parent=5 // pred_check_branch
      %162 = sbr.rel (%p160) target = $region20
    $region19: #{hrnet_v3_forward.17} parent=5 // pred_region
      // Predicated region
      $region21: #{hrnet_v3_forward.17} parent=19 // pred_check
        %p163 = pneg %p50
      $region22: #{hrnet_v3_forward.17} parent=19 // pred_check_branch
        %165 = sbr.rel (%p163) target = $region24
      $region23: #{hrnet_v3_forward.17} parent=19 // pred_region
        %s166 = smul.u32 4, %s18
        %p167 = scmp.lt.s32.totalorder %s16, 0
        %s168 = scalar_select %p167, %s16, 0
        %p169 = scmp.lt.s32.totalorder %s166, 11
        %s170 = scalar_select %p169, %s166, 11
        %s171 = smul.addr %s168, 12
        %s172 = sadd.s32 %s170, %s171
        %s173 = smul.addr %s172, 4
        %s174 = scalar_lea.vmem %s0, %s173
        %s175 = smul.u32 4, %s18
      $region24: #{hrnet_v3_forward.17} parent=19 // pred_fallthru
        _
      // Predicated region
      $region25: #{hrnet_v3_forward.17} parent=19 // pred_check
        %p176 = pneg %p78
      $region26: #{hrnet_v3_forward.17} parent=19 // pred_check_branch
        %178 = sbr.rel (%p176) target = $region28
      $region27: #{hrnet_v3_forward.17} parent=19 // pred_region
        %s179 = smul.u32 64, %s18
        %p180 = scmp.lt.s32.totalorder %s179, 191
        %s181 = scalar_select %p180, %s179, 191
        %p182 = scmp.lt.s32.totalorder %s17, 0
        %s183 = scalar_select %p182, %s17, 0
        %s184 = sadd.s32 %s183, %s181
        %s185 = smul.addr %s184, 4
        %s186 = scalar_lea.vmem %s1, %s185
        %s187 = smul.u32 64, %s18
      $region28: #{hrnet_v3_forward.17} parent=19 // pred_fallthru
        _
    $region20: #{hrnet_v3_forward.17} parent=5 // pred_fallthru
      _
    %p188 = scmp.le.s32.totalorder 1, %s9
    %p189 = scmp.lt.s32.totalorder %s9, 4
    %p190 = pnand %p188, %p189
    %p191 = pneg %p190
    // Predicated region
    $region29: #{hrnet_v3_forward.17} parent=5 // pred_check
      _
    $region30: #{hrnet_v3_forward.17} parent=5 // pred_check_branch
      %193 = sbr.rel (%p190) target = $region32
    $region31: #{hrnet_v3_forward.17} parent=5 // pred_region
      %s194 = ssub.s32 %s9, 1
      %s195 = smul.u32 4, %s21
      %p196 = scmp.lt.s32.totalorder %s19, 0
      %s197 = scalar_select %p196, %s19, 0
      %p198 = scmp.lt.s32.totalorder %s195, 11
      %s199 = scalar_select %p198, %s195, 11
      %s200 = smul.addr %s197, 12
      %s201 = sadd.s32 %s199, %s200
      %s202 = smul.addr %s201, 4
      %s203 = scalar_lea.vmem %s0, %s202
      %p204 = pneg %p56
      %p205 = pneg %p53
      %s206 = smul.u32 64, %s21
      %p207 = scmp.lt.s32.totalorder %s206, 191
      %s208 = scalar_select %p207, %s206, 191
      %p209 = scmp.lt.s32.totalorder %s20, 0
      %s210 = scalar_select %p209, %s20, 0
      %s211 = sadd.s32 %s210, %s208
      %s212 = smul.addr %s211, 4
      %s213 = scalar_lea.vmem %s1, %s212
      %p214 = pneg %p84
      %p215 = pneg %p81
      %p216 = scmp.lt.s32.totalorder %s20, 0
      %s217 = scalar_select %p216, %s20, 0
      %s218 = scalar_lea.vmem %s2, %s217
      %p219 = pneg %p110
      %p220 = pneg %p107
      %p221 = pneg %p138
      %p222 = pneg %p135
      %p223 = scmp.lt.s32.totalorder %s19, 0
      %s224 = scalar_select %p223, %s19, 0
      %p225 = scmp.lt.s32.totalorder %s20, 0
      %s226 = scalar_select %p225, %s20, 0
      %s227 = sadd.s32 %s226, %s224
      %s228 = smul.addr %s227, 8
      %s229 = scalar_lea.vmem %s3, %s228
      %s230 = smul.u32 4, %s21
      %p231 = scmp.lt.s32.totalorder %s19, 0
      %s232 = scalar_select %p231, %s19, 0
      %p233 = scmp.lt.s32.totalorder %s230, 11
      %s234 = scalar_select %p233, %s230, 11
      %s235 = smul.addr %s232, 12
      %s236 = sadd.s32 %s234, %s235
      %s237 = smul.addr %s236, 4
      %s238 = scalar_lea.vmem %s0, %s237
      %s239 = smul.u32 4, %s21
      %s240 = smul.u32 64, %s21
      %p241 = scmp.lt.s32.totalorder %s240, 191
      %s242 = scalar_select %p241, %s240, 191
      %p243 = scmp.lt.s32.totalorder %s20, 0
      %s244 = scalar_select %p243, %s20, 0
      %s245 = sadd.s32 %s244, %s242
      %s246 = smul.addr %s245, 4
      %s247 = scalar_lea.vmem %s1, %s246
      %s248 = smul.u32 64, %s21
      %p249 = scmp.lt.s32.totalorder %s20, 0
      %s250 = scalar_select %p249, %s20, 0
      %s251 = scalar_lea.vmem %s2, %s250
      %p252 = scmp.lt.s32.totalorder %s19, 0
      %s253 = scalar_select %p252, %s19, 0
      %p254 = scmp.lt.s32.totalorder %s20, 0
      %s255 = scalar_select %p254, %s20, 0
      %s256 = sadd.s32 %s255, %s253
      %s257 = smul.addr %s256, 8
      %s258 = scalar_lea.vmem %s3, %s257
      %p260 = scmp.eq.s32.totalorder %s21, 0
      // Predicated region
      $region33: #{hrnet_v3_forward.17} parent=31 // pred_check
        %p261 = pneg %p260
      $region34: #{hrnet_v3_forward.17} parent=31 // pred_check_branch
        %263 = sbr.rel (%p261) target = $region36
      $region35: #{hrnet_v3_forward.17} parent=31 // pred_region
        %264 = vst [vmem:[#allocation2] sm:$0xff] 0.0
      $region36: #{hrnet_v3_forward.17} parent=31 // pred_fallthru
        _
      %v265 = vld [vmem:[#allocation2] sm:$0xff]
      %v266 = vld [vmem:[%s238] sm:$0xff]
      %v267 = vld [vmem:[%s238 + $0x8] sm:$0xff]
      %v268 = vld [vmem:[%s247] sm:$0xf]
      %v269 = vld [vmem:[%s247 + $0x4] sm:$0xf]
      %v270 = vld [vmem:[%s247 + $0x8] sm:$0xf]
      %v271 = vld [vmem:[%s247 + $0xc] sm:$0xf]
      %v272 = vld [vmem:[%s247 + $0x10] sm:$0xf]
      %v273 = vld [vmem:[%s247 + $0x14] sm:$0xf]
      %v274 = vld [vmem:[%s247 + $0x18] sm:$0xf]
      %v275 = vld [vmem:[%s247 + $0x1c] sm:$0xf]
      %v276 = vld [vmem:[%s247 + $0x20] sm:$0xf]
      %v277 = vld [vmem:[%s247 + $0x24] sm:$0xf]
      %v278 = vld [vmem:[%s247 + $0x28] sm:$0xf]
      %v279 = vld [vmem:[%s247 + $0x2c] sm:$0xf]
      %v280 = vld [vmem:[%s247 + $0x30] sm:$0xf]
      %v281 = vld [vmem:[%s247 + $0x34] sm:$0xf]
      %v282 = vld [vmem:[%s247 + $0x38] sm:$0xf]
      %v283 = vld [vmem:[%s247 + $0x3c] sm:$0xf]
      %v284 = vld [vmem:[%s247 + $0x40] sm:$0xf]
      %v285 = vld [vmem:[%s247 + $0x44] sm:$0xf]
      %v286 = vld [vmem:[%s247 + $0x48] sm:$0xf]
      %v287 = vld [vmem:[%s247 + $0x4c] sm:$0xf]
      %v288 = vld [vmem:[%s247 + $0x50] sm:$0xf]
      %v289 = vld [vmem:[%s247 + $0x54] sm:$0xf]
      %v290 = vld [vmem:[%s247 + $0x58] sm:$0xf]
      %v291 = vld [vmem:[%s247 + $0x5c] sm:$0xf]
      %v292 = vld [vmem:[%s247 + $0x60] sm:$0xf]
      %v293 = vld [vmem:[%s247 + $0x64] sm:$0xf]
      %v294 = vld [vmem:[%s247 + $0x68] sm:$0xf]
      %v295 = vld [vmem:[%s247 + $0x6c] sm:$0xf]
      %v296 = vld [vmem:[%s247 + $0x70] sm:$0xf]
      %v297 = vld [vmem:[%s247 + $0x74] sm:$0xf]
      %v298 = vld [vmem:[%s247 + $0x78] sm:$0xf]
      %v299 = vld [vmem:[%s247 + $0x7c] sm:$0xf]
      %v300 = vld [vmem:[%s247 + $0x80] sm:$0xf]
      %v301 = vld [vmem:[%s247 + $0x84] sm:$0xf]
      %v302 = vld [vmem:[%s247 + $0x88] sm:$0xf]
      %v303 = vld [vmem:[%s247 + $0x8c] sm:$0xf]
      %v304 = vld [vmem:[%s247 + $0x90] sm:$0xf]
      %v305 = vld [vmem:[%s247 + $0x94] sm:$0xf]
      %v306 = vld [vmem:[%s247 + $0x98] sm:$0xf]
      %v307 = vld [vmem:[%s247 + $0x9c] sm:$0xf]
      %v308 = vld [vmem:[%s247 + $0xa0] sm:$0xf]
      %v309 = vld [vmem:[%s247 + $0xa4] sm:$0xf]
      %v310 = vld [vmem:[%s247 + $0xa8] sm:$0xf]
      %v311 = vld [vmem:[%s247 + $0xac] sm:$0xf]
      %v312 = vld [vmem:[%s247 + $0xb0] sm:$0xf]
      %v313 = vld [vmem:[%s247 + $0xb4] sm:$0xf]
      %v314 = vld [vmem:[%s247 + $0xb8] sm:$0xf]
      %v315 = vld [vmem:[%s247 + $0xbc] sm:$0xf]
      %v316 = vld [vmem:[%s247 + $0xc0] sm:$0xf]
      %v317 = vld [vmem:[%s247 + $0xc4] sm:$0xf]
      %v318 = vld [vmem:[%s247 + $0xc8] sm:$0xf]
      %v319 = vld [vmem:[%s247 + $0xcc] sm:$0xf]
      %v320 = vld [vmem:[%s247 + $0xd0] sm:$0xf]
      %v321 = vld [vmem:[%s247 + $0xd4] sm:$0xf]
      %v322 = vld [vmem:[%s247 + $0xd8] sm:$0xf]
      %v323 = vld [vmem:[%s247 + $0xdc] sm:$0xf]
      %v324 = vld [vmem:[%s247 + $0xe0] sm:$0xf]
      %v325 = vld [vmem:[%s247 + $0xe4] sm:$0xf]
      %v326 = vld [vmem:[%s247 + $0xe8] sm:$0xf]
      %v327 = vld [vmem:[%s247 + $0xec] sm:$0xf]
      %v328 = vld [vmem:[%s247 + $0xf0] sm:$0xf]
      %v329 = vld [vmem:[%s247 + $0xf4] sm:$0xf]
      %v330 = vld [vmem:[%s247 + $0xf8] sm:$0xf]
      %v331 = vld [vmem:[%s247 + $0xfc] sm:$0xf]
      %v334 = vunpack.c.l.b16 %v266
      %v335 = vunpack.c.h.b16 %v266
      %v336 = vunpack.c.l.b16 %v267
      %v337 = vunpack.c.h.b16 %v267
      %v338 = vpack.c.b16 %v334, %v334
      %v339 = vpack.c.b16 %v335, %v335
      %v340 = vpack.c.b16 %v336, %v336
      %v341 = vpack.c.b16 %v337, %v337
      %v410 = vunpack.c.l.b16 %v268
      %v411 = vunpack.c.l.b16 %v269
      %v412 = vunpack.c.l.b16 %v270
      %v413 = vunpack.c.l.b16 %v271
      %v414 = vunpack.c.l.b16 %v272
      %v415 = vunpack.c.l.b16 %v273
      %v416 = vunpack.c.l.b16 %v274
      %v417 = vunpack.c.l.b16 %v275
      %v418 = vunpack.c.l.b16 %v276
      %v419 = vunpack.c.l.b16 %v277
      %v420 = vunpack.c.l.b16 %v278
      %v421 = vunpack.c.l.b16 %v279
      %v422 = vunpack.c.l.b16 %v280
      %v423 = vunpack.c.l.b16 %v281
      %v424 = vunpack.c.l.b16 %v282
      %v425 = vunpack.c.l.b16 %v283
      %v426 = vunpack.c.l.b16 %v284
      %v427 = vunpack.c.l.b16 %v285
      %v428 = vunpack.c.l.b16 %v286
      %v429 = vunpack.c.l.b16 %v287
      %v430 = vunpack.c.l.b16 %v288
      %v431 = vunpack.c.l.b16 %v289
      %v432 = vunpack.c.l.b16 %v290
      %v433 = vunpack.c.l.b16 %v291
      %v434 = vunpack.c.l.b16 %v292
      %v435 = vunpack.c.l.b16 %v293
      %v436 = vunpack.c.l.b16 %v294
      %v437 = vunpack.c.l.b16 %v295
      %v438 = vunpack.c.l.b16 %v296
      %v439 = vunpack.c.l.b16 %v297
      %v440 = vunpack.c.l.b16 %v298
      %v441 = vunpack.c.l.b16 %v299
      %v442 = vunpack.c.l.b16 %v300
      %v443 = vunpack.c.l.b16 %v301
      %v444 = vunpack.c.l.b16 %v302
      %v445 = vunpack.c.l.b16 %v303
      %v446 = vunpack.c.l.b16 %v304
      %v447 = vunpack.c.l.b16 %v305
      %v448 = vunpack.c.l.b16 %v306
      %v449 = vunpack.c.l.b16 %v307
      %v450 = vunpack.c.l.b16 %v308
      %v451 = vunpack.c.l.b16 %v309
      %v452 = vunpack.c.l.b16 %v310
      %v453 = vunpack.c.l.b16 %v311
      %v454 = vunpack.c.l.b16 %v312
      %v455 = vunpack.c.l.b16 %v313
      %v456 = vunpack.c.l.b16 %v314
      %v457 = vunpack.c.l.b16 %v315
      %v458 = vunpack.c.l.b16 %v316
      %v459 = vunpack.c.l.b16 %v317
      %v460 = vunpack.c.l.b16 %v318
      %v461 = vunpack.c.l.b16 %v319
      %v462 = vunpack.c.l.b16 %v320
      %v463 = vunpack.c.l.b16 %v321
      %v464 = vunpack.c.l.b16 %v322
      %v465 = vunpack.c.l.b16 %v323
      %v466 = vunpack.c.l.b16 %v324
      %v467 = vunpack.c.l.b16 %v325
      %v468 = vunpack.c.l.b16 %v326
      %v469 = vunpack.c.l.b16 %v327
      %v470 = vunpack.c.l.b16 %v328
      %v471 = vunpack.c.l.b16 %v329
      %v472 = vunpack.c.l.b16 %v330
      %v473 = vunpack.c.l.b16 %v331
      %v474 = vpack.c.b16 %v411, %v410
      %v475 = vpack.c.b16 %v413, %v412
      %v476 = vpack.c.b16 %v415, %v414
      %v477 = vpack.c.b16 %v417, %v416
      %v478 = vpack.c.b16 %v419, %v418
      %v479 = vpack.c.b16 %v421, %v420
      %v480 = vpack.c.b16 %v423, %v422
      %v481 = vpack.c.b16 %v425, %v424
      %v482 = vpack.c.b16 %v427, %v426
      %v483 = vpack.c.b16 %v429, %v428
      %v484 = vpack.c.b16 %v431, %v430
      %v485 = vpack.c.b16 %v433, %v432
      %v486 = vpack.c.b16 %v435, %v434
      %v487 = vpack.c.b16 %v437, %v436
      %v488 = vpack.c.b16 %v439, %v438
      %v489 = vpack.c.b16 %v441, %v440
      %v490 = vpack.c.b16 %v443, %v442
      %v491 = vpack.c.b16 %v445, %v444
      %v492 = vpack.c.b16 %v447, %v446
      %v493 = vpack.c.b16 %v449, %v448
      %v494 = vpack.c.b16 %v451, %v450
      %v495 = vpack.c.b16 %v453, %v452
      %v496 = vpack.c.b16 %v455, %v454
      %v497 = vpack.c.b16 %v457, %v456
      %v498 = vpack.c.b16 %v459, %v458
      %v499 = vpack.c.b16 %v461, %v460
      %v500 = vpack.c.b16 %v463, %v462
      %v501 = vpack.c.b16 %v465, %v464
      %v502 = vpack.c.b16 %v467, %v466
      %v503 = vpack.c.b16 %v469, %v468
      %v504 = vpack.c.b16 %v471, %v470
      %v505 = vpack.c.b16 %v473, %v472
      %538 = vmatprep.subr.bf16.mxu0 0
      %539 = vmatpush1.bf16.msra.mxu0 %v474
      %540 = vmatprep.subr.bf16.mxu0 0
      %541 = vmatpush1.bf16.msra.mxu0 %v475
      %542 = vmatprep.subr.bf16.mxu0 0
      %543 = vmatpush1.bf16.msra.mxu0 %v476
      %544 = vmatprep.subr.bf16.mxu0 0
      %545 = vmatpush1.bf16.msra.mxu0 %v477
      %546 = vmatprep.subr.bf16.mxu0 0
      %547 = vmatpush1.bf16.msra.mxu0 %v478
      %548 = vmatprep.subr.bf16.mxu0 0
      %549 = vmatpush1.bf16.msra.mxu0 %v479
      %550 = vmatprep.subr.bf16.mxu0 0
      %551 = vmatpush1.bf16.msra.mxu0 %v480
      %552 = vmatprep.subr.bf16.mxu0 0
      %553 = vmatpush1.bf16.msra.mxu0 %v481
      %554 = vmatprep.subr.bf16.mxu0 0
      %555 = vmatpush1.bf16.msra.mxu0 %v482
      %556 = vmatprep.subr.bf16.mxu0 0
      %557 = vmatpush1.bf16.msra.mxu0 %v483
      %558 = vmatprep.subr.bf16.mxu0 0
      %559 = vmatpush1.bf16.msra.mxu0 %v484
      %560 = vmatprep.subr.bf16.mxu0 0
      %561 = vmatpush1.bf16.msra.mxu0 %v485
      %562 = vmatprep.subr.bf16.mxu0 0
      %563 = vmatpush1.bf16.msra.mxu0 %v486
      %564 = vmatprep.subr.bf16.mxu0 0
      %565 = vmatpush1.bf16.msra.mxu0 %v487
      %566 = vmatprep.subr.bf16.mxu0 0
      %567 = vmatpush1.bf16.msra.mxu0 %v488
      %568 = vmatprep.subr.bf16.mxu0 0
      %569 = vmatpush1.bf16.msra.mxu0 %v489
      %570 = vmatprep.mubr.bf16.mxu0 %v339
      %571 = vmatmul.mubr.bf16.gmra.mrb[0].mxu0 %v338
      %v572 = vpop.f32.mrb[0].mxu0
      %v573 = vadd.f32 0.0, %v572
      %v574 = vpop.f32.mrb[0].mxu0
      %v575 = vpop.f32.mrb[0].mxu0
      %v576 = vpop.f32.mrb[0].mxu0
      %577 = vdwg.mxu0
      %578 = vmatprep.subr.bf16.mxu0 0
      %579 = vmatpush1.bf16.msra.mxu0 %v490
      %580 = vmatprep.subr.bf16.mxu0 0
      %581 = vmatpush1.bf16.msra.mxu0 %v491
      %582 = vmatprep.subr.bf16.mxu0 0
      %583 = vmatpush1.bf16.msra.mxu0 %v492
      %584 = vmatprep.subr.bf16.mxu0 0
      %585 = vmatpush1.bf16.msra.mxu0 %v493
      %586 = vmatprep.subr.bf16.mxu0 0
      %587 = vmatpush1.bf16.msra.mxu0 %v494
      %588 = vmatprep.subr.bf16.mxu0 0
      %589 = vmatpush1.bf16.msra.mxu0 %v495
      %590 = vmatprep.subr.bf16.mxu0 0
      %591 = vmatpush1.bf16.msra.mxu0 %v496
      %592 = vmatprep.subr.bf16.mxu0 0
      %593 = vmatpush1.bf16.msra.mxu0 %v497
      %594 = vmatprep.subr.bf16.mxu0 0
      %595 = vmatpush1.bf16.msra.mxu0 %v498
      %596 = vmatprep.subr.bf16.mxu0 0
      %597 = vmatpush1.bf16.msra.mxu0 %v499
      %598 = vmatprep.subr.bf16.mxu0 0
      %599 = vmatpush1.bf16.msra.mxu0 %v500
      %600 = vmatprep.subr.bf16.mxu0 0
      %601 = vmatpush1.bf16.msra.mxu0 %v501
      %602 = vmatprep.subr.bf16.mxu0 0
      %603 = vmatpush1.bf16.msra.mxu0 %v502
      %604 = vmatprep.subr.bf16.mxu0 0
      %605 = vmatpush1.bf16.msra.mxu0 %v503
      %606 = vmatprep.subr.bf16.mxu0 0
      %607 = vmatpush1.bf16.msra.mxu0 %v504
      %608 = vmatprep.subr.bf16.mxu0 0
      %609 = vmatpush1.bf16.msra.mxu0 %v505
      %610 = vmatprep.mubr.bf16.mxu0 %v341
      %611 = vmatmul.mubr.bf16.gmra.mrb[0].mxu0 %v340
      %v612 = vpop.f32.mrb[0].mxu0
      %v613 = vadd.f32 %v573, %v612
      %v614 = vpop.f32.mrb[0].mxu0
      %v615 = vpop.f32.mrb[0].mxu0
      %v616 = vpop.f32.mrb[0].mxu0
      %617 = vdwg.mxu0
      %v618 = vadd.f32 %v265, %v613
      %619 = vst [vmem:[#allocation2] sm:$0xff] %v618
      %p620 = scmp.eq.s32.totalorder %s21, 2
      // Predicated region
      $region37: #{hrnet_v3_forward.17} parent=31 // pred_check
        %p621 = pneg %p620
      $region38: #{hrnet_v3_forward.17} parent=31 // pred_check_branch
        %623 = sbr.rel (%p621) target = $region40
      $region39: #{hrnet_v3_forward.17} parent=31 // pred_region
        %v624 = vld [vmem:[#allocation2] sm:$0xff]
        %v625 = vld [vmem:[%s251] sm:$0x1]
        %v627 = vlaneseq
        %v628 = vshrl.u32 %v627, 7
        %v629 = vsub.s32 0, %v628
        %v630 = vrot.slane %v625, %v629
        %v632 = vadd.f32 %v624, %v630
        %v633 = vmax.f32 %v632, 0.0
        %634 = vst [vmem:[%s258] sm:$0xff] %v633
      $region40: #{hrnet_v3_forward.17} parent=31 // pred_fallthru
        _
      %p635 = scmp.lt.s32.totalorder %s19, 0
      %s636 = scalar_select %p635, %s19, 0
      %p637 = scmp.lt.s32.totalorder %s20, 0
      %s638 = scalar_select %p637, %s20, 0
      %s639 = sadd.s32 %s638, %s636
      %s640 = smul.addr %s639, 8
      %s641 = scalar_lea.vmem %s3, %s640
      // Predicated region
      $region41: #{hrnet_v3_forward.17} parent=31 // pred_check
        %p642 = pneg %p135
      $region42: #{hrnet_v3_forward.17} parent=31 // pred_check_branch
        %644 = sbr.rel (%p642) target = $region44
      $region43: #{hrnet_v3_forward.17} parent=31 // pred_region
        _
      $region44: #{hrnet_v3_forward.17} parent=31 // pred_fallthru
        _
      // Predicated region
      $region45: #{hrnet_v3_forward.17} parent=31 // pred_check
        %p645 = pneg %p135
      $region46: #{hrnet_v3_forward.17} parent=31 // pred_check_branch
        %647 = sbr.rel (%p645) target = $region48
      $region47: #{hrnet_v3_forward.17} parent=31 // pred_region
        %p648 = scmp.lt.s32.totalorder %s19, 0
        %s649 = scalar_select %p648, %s19, 0
        %p650 = scmp.lt.s32.totalorder %s20, 0
        %s651 = scalar_select %p650, %s20, 0
        %s652 = sadd.s32 %s651, %s649
        %s653 = smul.addr %s652, 8
        %s654 = scalar_lea.vmem %s3, %s653
      $region48: #{hrnet_v3_forward.17} parent=31 // pred_fallthru
        _
    $region32: #{hrnet_v3_forward.17} parent=5 // pred_fallthru
      _
    %p655 = scmp.le.s32.totalorder 2, %s9
    // Predicated region
    $region49: #{hrnet_v3_forward.17} parent=5 // pred_check
      %p656 = pneg %p655
    $region50: #{hrnet_v3_forward.17} parent=5 // pred_check_branch
      %658 = sbr.rel (%p656) target = $region52
    $region51: #{hrnet_v3_forward.17} parent=5 // pred_region
      %s659 = ssub.s32 %s9, 2
    $region52: #{hrnet_v3_forward.17} parent=5 // pred_fallthru
      _
  $region6: #{hrnet_v3_forward.17} parent=0 // loop_footer
    %s13 = sadd.s32 1, %s9
  $region7: #{hrnet_v3_forward.17} parent=0 // loop_footer_branch
    %8 = sbr.rel target = $region3
  $region8: #{hrnet_v3_forward.17} parent=0 // loop_exit
    _

// kernel: hrnet_v3_forward.20
$region0: #{hrnet_v3_forward.20}
  #allocation0 [shape = 'u32[]', space=smem, size = 0x4, offset = 0x4, fixed_abs, tag = 'smem constant byte address 0x4 - core index']
  #allocation1 [shape = 'u32[144,128]{1,0:T(1,128)}', space=vmem, size = 0x12000, scoped, tag = 'internal scratch']
  #allocation2 [shape = 'f32[8,128]{1,0:T(8,128)}', space=vmem, size = 0x1000, scoped, tag = 'scratch operand']
  %s0 = inlined_call_operand.vmem [shape: bf16[8,128], index: 0, kind: input, shape index: {}]
  %s1 = inlined_call_operand.vmem [shape: bf16[128,128], index: 1, kind: input, shape index: {}]
  %s2 = inlined_call_operand.vmem [shape: f32[1,128], index: 2, kind: input, shape index: {}]
  %s3 = inlined_call_operand.vmem [shape: f32[8,128], index: 3, kind: output, shape index: {}]
  %s4 = sld [smem:[#allocation0]]
  $region30: #{hrnet_v3_forward.20} parent=0
    _
  %s6 = ssub.s32 1, %s4
  %s7 = scalar_select 0, %s6, %s4
  // Predicated region
  $region2: #{hrnet_v3_forward.20} parent=0 // pred_check
    _
  $region3: #{hrnet_v3_forward.20} parent=0 // pred_check_branch
    %9 = sbr.rel (0) target = $region5
  $region4: #{hrnet_v3_forward.20} parent=0 // pred_region
    _
  $region5: #{hrnet_v3_forward.20} parent=0 // pred_fallthru
    _
  // Predicated region
  $region6: #{hrnet_v3_forward.20} parent=0 // pred_check
    _
  $region7: #{hrnet_v3_forward.20} parent=0 // pred_check_branch
    %11 = sbr.rel (0) target = $region9
  $region8: #{hrnet_v3_forward.20} parent=0 // pred_region
    _
  $region9: #{hrnet_v3_forward.20} parent=0 // pred_fallthru
    _
  // Predicated region
  $region10: #{hrnet_v3_forward.20} parent=0 // pred_check
    _
  $region11: #{hrnet_v3_forward.20} parent=0 // pred_check_branch
    %13 = sbr.rel (0) target = $region13
  $region12: #{hrnet_v3_forward.20} parent=0 // pred_region
    _
  $region13: #{hrnet_v3_forward.20} parent=0 // pred_fallthru
    _
  %p15 = scmp.eq.s32.totalorder 0, 0
  // Predicated region
  $region14: #{hrnet_v3_forward.20} parent=0 // pred_check
    %p16 = pneg %p15
  $region15: #{hrnet_v3_forward.20} parent=0 // pred_check_branch
    %18 = sbr.rel (%p16) target = $region17
  $region16: #{hrnet_v3_forward.20} parent=0 // pred_region
    %19 = vst [vmem:[#allocation2] sm:$0xff] 0.0
  $region17: #{hrnet_v3_forward.20} parent=0 // pred_fallthru
    _
  %v20 = vld [vmem:[#allocation2] sm:$0xff]
  %v21 = vld [vmem:[%s0] sm:$0xf]
  %v22 = vld [vmem:[%s1] sm:$0xf]
  %v23 = vld [vmem:[%s1 + $0x4] sm:$0xf]
  %v24 = vld [vmem:[%s1 + $0x8] sm:$0xf]
  %v25 = vld [vmem:[%s1 + $0xc] sm:$0xf]
  %v26 = vld [vmem:[%s1 + $0x10] sm:$0xf]
  %v27 = vld [vmem:[%s1 + $0x14] sm:$0xf]
  %v28 = vld [vmem:[%s1 + $0x18] sm:$0xf]
  %v29 = vld [vmem:[%s1 + $0x1c] sm:$0xf]
  %v30 = vld [vmem:[%s1 + $0x20] sm:$0xf]
  %v31 = vld [vmem:[%s1 + $0x24] sm:$0xf]
  %v32 = vld [vmem:[%s1 + $0x28] sm:$0xf]
  %v33 = vld [vmem:[%s1 + $0x2c] sm:$0xf]
  %v34 = vld [vmem:[%s1 + $0x30] sm:$0xf]
  %v35 = vld [vmem:[%s1 + $0x34] sm:$0xf]
  %v36 = vld [vmem:[%s1 + $0x38] sm:$0xf]
  %v37 = vld [vmem:[%s1 + $0x3c] sm:$0xf]
  %v54 = vunpack.c.l.b16 %v22
  %v55 = vunpack.c.l.b16 %v23
  %v56 = vunpack.c.l.b16 %v24
  %v57 = vunpack.c.l.b16 %v25
  %v58 = vunpack.c.l.b16 %v26
  %v59 = vunpack.c.l.b16 %v27
  %v60 = vunpack.c.l.b16 %v28
  %v61 = vunpack.c.l.b16 %v29
  %v62 = vunpack.c.l.b16 %v30
  %v63 = vunpack.c.l.b16 %v31
  %v64 = vunpack.c.l.b16 %v32
  %v65 = vunpack.c.l.b16 %v33
  %v66 = vunpack.c.l.b16 %v34
  %v67 = vunpack.c.l.b16 %v35
  %v68 = vunpack.c.l.b16 %v36
  %v69 = vunpack.c.l.b16 %v37
  %v70 = vpack.c.b16 %v55, %v54
  %v71 = vpack.c.b16 %v57, %v56
  %v72 = vpack.c.b16 %v59, %v58
  %v73 = vpack.c.b16 %v61, %v60
  %v74 = vpack.c.b16 %v63, %v62
  %v75 = vpack.c.b16 %v65, %v64
  %v76 = vpack.c.b16 %v67, %v66
  %v77 = vpack.c.b16 %v69, %v68
  %86 = vmatprep.subr.bf16.mxu0 0
  %87 = vmatpush1.bf16.msra.mxu0 %v70
  %88 = vmatprep.subr.bf16.mxu0 0
  %89 = vmatpush1.bf16.msra.mxu0 %v71
  %90 = vmatprep.subr.bf16.mxu0 0
  %91 = vmatpush1.bf16.msra.mxu0 %v72
  %92 = vmatprep.subr.bf16.mxu0 0
  %93 = vmatpush1.bf16.msra.mxu0 %v73
  %94 = vmatprep.subr.bf16.mxu0 0
  %95 = vmatpush1.bf16.msra.mxu0 %v74
  %96 = vmatprep.subr.bf16.mxu0 0
  %97 = vmatpush1.bf16.msra.mxu0 %v75
  %98 = vmatprep.subr.bf16.mxu0 0
  %99 = vmatpush1.bf16.msra.mxu0 %v76
  %100 = vmatprep.subr.bf16.mxu0 0
  %101 = vmatpush1.bf16.msra.mxu0 %v77
  %102 = vmatprep.subr.bf16.mxu0 0
  %103 = vmatpush1.bf16.msra.mxu0 0
  %104 = vmatprep.subr.bf16.mxu0 0
  %105 = vmatpush1.bf16.msra.mxu0 0
  %106 = vmatprep.subr.bf16.mxu0 0
  %107 = vmatpush1.bf16.msra.mxu0 0
  %108 = vmatprep.subr.bf16.mxu0 0
  %109 = vmatpush1.bf16.msra.mxu0 0
  %110 = vmatprep.subr.bf16.mxu0 0
  %111 = vmatpush1.bf16.msra.mxu0 0
  %112 = vmatprep.subr.bf16.mxu0 0
  %113 = vmatpush1.bf16.msra.mxu0 0
  %114 = vmatprep.subr.bf16.mxu0 0
  %115 = vmatpush1.bf16.msra.mxu0 0
  %116 = vmatprep.subr.bf16.mxu0 0
  %117 = vmatpush1.bf16.msra.mxu0 0
  %118 = vmatprep.mubr.bf16.mxu0 0
  %119 = vmatmul.mubr.bf16.gmra.mrb[0].mxu0 %v21
  %v120 = vpop.f32.mrb[0].mxu0
  %v121 = vadd.f32 0.0, %v120
  %v122 = vpop.f32.mrb[0].mxu0
  %v123 = vpop.f32.mrb[0].mxu0
  %v124 = vpop.f32.mrb[0].mxu0
  %125 = vdwg.mxu0
  %v126 = vadd.f32 %v20, %v121
  %127 = vst [vmem:[#allocation2] sm:$0xff] %v126
  // Predicated region
  $region18: #{hrnet_v3_forward.20} parent=0 // pred_check
    %p128 = pneg %p15
  $region19: #{hrnet_v3_forward.20} parent=0 // pred_check_branch
    %130 = sbr.rel (%p128) target = $region21
  $region20: #{hrnet_v3_forward.20} parent=0 // pred_region
    %v131 = vld [vmem:[#allocation2] sm:$0xff]
    %v132 = vld [vmem:[%s2] sm:$0x1]
    %v134 = vlaneseq
    %v135 = vshrl.u32 %v134, 7
    %v136 = vsub.s32 0, %v135
    %v137 = vrot.slane %v132, %v136
    %v139 = vadd.f32 %v131, %v137
    %140 = vst [vmem:[%s3] sm:$0xff] %v139
  $region21: #{hrnet_v3_forward.20} parent=0 // pred_fallthru
    _
  // Predicated region
  $region22: #{hrnet_v3_forward.20} parent=0 // pred_check
    _
  $region23: #{hrnet_v3_forward.20} parent=0 // pred_check_branch
    %142 = sbr.rel (0) target = $region25
  $region24: #{hrnet_v3_forward.20} parent=0 // pred_region
    _
  $region25: #{hrnet_v3_forward.20} parent=0 // pred_fallthru
    _
  // Predicated region
  $region26: #{hrnet_v3_forward.20} parent=0 // pred_check
    _
  $region27: #{hrnet_v3_forward.20} parent=0 // pred_check_branch
    %144 = sbr.rel (0) target = $region29
  $region28: #{hrnet_v3_forward.20} parent=0 // pred_region
    _
  $region29: #{hrnet_v3_forward.20} parent=0 // pred_fallthru
    _

// kernel: hrnet_v3_forward.21
$region0: #{hrnet_v3_forward.21}
  #allocation0 [shape = 'u32[]', space=smem, size = 0x4, offset = 0x4, fixed_abs, tag = 'smem constant byte address 0x4 - core index']
  #allocation1 [shape = 'u32[144,128]{1,0:T(1,128)}', space=vmem, size = 0x12000, scoped, tag = 'internal scratch']
  #allocation2 [shape = 's32[1]{0}', space=sflag, size = 0x4, scoped, tag = 'scoped memory for hrnet_v3_forward.21']
  #allocation3 [shape = 'u8[512]{0}', space=smem, size = 0x200, scoped, tag = 'prefetched SMEM operand 0']
  #allocation4 [shape = 'u8[512]{0}', space=smem, size = 0x200, scoped, tag = 'prefetched SMEM operand 1']
  %s0 = inlined_call_operand.vmem [shape: s32[4], index: 0, kind: input, shape index: {}]
  %s1 = inlined_call_operand.vmem [shape: s32[4], index: 1, kind: input, shape index: {}]
  %s2 = inlined_call_operand.vmem [shape: f32[2,2,2,128], index: 2, kind: input, shape index: {}, may-alias: {2,3}]
  %s3 = inlined_call_operand.vmem [shape: f32[2,2,2,128], index: 3, kind: input, shape index: {}, may-alias: {2,3}]
  %s4 = inlined_call_operand.vmem [shape: f32[4,1,128], index: 4, kind: input, shape index: {}]
  %s5 = inlined_call_operand.vmem [shape: f32[4,2], index: 5, kind: input, shape index: {}]
  %s6 = inlined_call_operand.vmem [shape: f32[2,4,4,128], index: 6, kind: input, shape index: {}]
  %s7 = inlined_call_operand.vmem [shape: f32[2,4,4,128], index: 7, kind: output, shape index: {}]
  %s8 = sld [smem:[#allocation0]]
  $region53: #{hrnet_v3_forward.21} parent=0
    _
  %s10 = ssub.s32 1, %s8
  %s11 = scalar_select 0, %s10, %s8
  %s12 = sshll.u32 %s0, 4
  %s13 = int_to_ptr.vmem [resolvable:$true] %s12
  %15 = dma.vmem_to_smem %s13, 16, [#allocation3], [#allocation2]
  %s16 = sshll.u32 %s1, 4
  %s17 = int_to_ptr.vmem [resolvable:$true] %s16
  %19 = dma.vmem_to_smem %s17, 16, [#allocation4], [#allocation2]
  %20 = dma.done [#allocation2], 32
  %21 = sfence
  loop: start=0, step=1, limit=10
  $region2: #{hrnet_v3_forward.21} parent=0 // loop_pre_header
    _
  $region3: #{hrnet_v3_forward.21} parent=0 // loop_header
    %s23 = sphi 0, %s27
    %p24 = scmp.ge.s32.totalorder %s23, 10
    %s30 = sphi 0, %s42
    %s31 = sphi 0, %s38
    %s32 = sphi 0, %s30
    %s33 = sphi 0, %s31
    %s34 = sphi 0, %s32
    %s35 = sphi 0, %s33
    %s49 = sphi 0, %s51
    %s52 = sphi 0, %s49
    %s53 = sphi 0, %s52
    %s69 = sphi 0, %s53
    %s79 = sphi 0, %s81
    %s82 = sphi 0, %s79
    %s83 = sphi 0, %s82
    %s99 = sphi 0, %s83
    %s105 = sphi 0, %s107
    %s108 = sphi 0, %s105
    %s109 = sphi 0, %s108
    %s125 = sphi 0, %s109
    %s129 = sphi 0, %s129
    %s131 = sphi 0, %s129
    %s132 = sphi 0, %s131
    %s146 = sphi 0, %s132
    %s154 = sphi 0, %s156
    %s157 = sphi 0, %s154
    %s158 = sphi 0, %s157
    %s174 = sphi 0, %s158
    %s182 = sphi 0, %s184
    %s185 = sphi 0, %s182
    %s186 = sphi 0, %s185
    %s202 = sphi 0, %s186
  $region4: #{hrnet_v3_forward.21} parent=0 // loop_header_branch
    %26 = sbr.rel (%p24) target = $region8
  $region5: #{hrnet_v3_forward.21} parent=0 // loop_body
    %s28 = ssub.s32 %s23, 1
    %s29 = ssub.s32 %s23, 2
    %s36 = sadd.s32 1, %s31
    %p37 = scmp.ge.s32.totalorder %s36, 4
    %s38 = scalar_select %p37, 0, %s36
    %s39 = sadd.s32 1, %s30
    %s40 = scalar_select %p37, %s39, %s30
    %p41 = scmp.ge.s32.totalorder %s40, 2
    %s42 = scalar_select %p41, 0, %s40
    %s43 = sld [smem:[#allocation3 + %s31]]
    %s44 = sld [smem:[#allocation3 + %s38]]
    %s45 = ssub.s32 %s30, %s42
    %s46 = ssub.s32 %s43, %s44
    %s47 = sor.u32 %s45, %s46
    %p48 = scmp.eq.s32.totalorder %s47, 0
    %s50 = sadd.s32 %s49, 1
    %s51 = scalar_select %p48, %s49, %s50
    %p54 = pneg %p48
    %p55 = scmp.eq.s32.totalorder %s23, 7
    %p56 = por %p54, %p55
    %p57 = scmp.ne.s32.totalorder %s49, %s52
    %p58 = scmp.eq.s32.totalorder %s23, 0
    %p59 = por %p57, %p58
    %p60 = scmp.ne.s32.totalorder %s49, %s52
    %p61 = scmp.eq.s32.totalorder %s28, 7
    %p62 = por %p60, %p61
    %p63 = scmp.ne.s32.totalorder %s52, %s53
    %p64 = scmp.eq.s32.totalorder %s28, 0
    %p65 = por %p63, %p64
    %p66 = scmp.ne.s32.totalorder %s52, %s53
    %p67 = scmp.eq.s32.totalorder %s29, 7
    %p68 = por %p66, %p67
    %p70 = scmp.ne.s32.totalorder %s53, %s69
    %p71 = scmp.eq.s32.totalorder %s29, 0
    %p72 = por %p70, %p71
    %s73 = sld [smem:[#allocation4 + %s31]]
    %s74 = sld [smem:[#allocation4 + %s38]]
    %s75 = ssub.s32 %s30, %s42
    %s76 = ssub.s32 %s73, %s74
    %s77 = sor.u32 %s75, %s76
    %p78 = scmp.eq.s32.totalorder %s77, 0
    %s80 = sadd.s32 %s79, 1
    %s81 = scalar_select %p78, %s79, %s80
    %p84 = pneg %p78
    %p85 = scmp.eq.s32.totalorder %s23, 7
    %p86 = por %p84, %p85
    %p87 = scmp.ne.s32.totalorder %s79, %s82
    %p88 = scmp.eq.s32.totalorder %s23, 0
    %p89 = por %p87, %p88
    %p90 = scmp.ne.s32.totalorder %s79, %s82
    %p91 = scmp.eq.s32.totalorder %s28, 7
    %p92 = por %p90, %p91
    %p93 = scmp.ne.s32.totalorder %s82, %s83
    %p94 = scmp.eq.s32.totalorder %s28, 0
    %p95 = por %p93, %p94
    %p96 = scmp.ne.s32.totalorder %s82, %s83
    %p97 = scmp.eq.s32.totalorder %s29, 7
    %p98 = por %p96, %p97
    %p100 = scmp.ne.s32.totalorder %s83, %s99
    %p101 = scmp.eq.s32.totalorder %s29, 0
    %p102 = por %p100, %p101
    %s103 = ssub.s32 %s31, %s38
    %p104 = scmp.eq.s32.totalorder %s103, 0
    %s106 = sadd.s32 %s105, 1
    %s107 = scalar_select %p104, %s105, %s106
    %p110 = pneg %p104
    %p111 = scmp.eq.s32.totalorder %s23, 7
    %p112 = por %p110, %p111
    %p113 = scmp.ne.s32.totalorder %s105, %s108
    %p114 = scmp.eq.s32.totalorder %s23, 0
    %p115 = por %p113, %p114
    %p116 = scmp.ne.s32.totalorder %s105, %s108
    %p117 = scmp.eq.s32.totalorder %s28, 7
    %p118 = por %p116, %p117
    %p119 = scmp.ne.s32.totalorder %s108, %s109
    %p120 = scmp.eq.s32.totalorder %s28, 0
    %p121 = por %p119, %p120
    %p122 = scmp.ne.s32.totalorder %s108, %s109
    %p123 = scmp.eq.s32.totalorder %s29, 7
    %p124 = por %p122, %p123
    %p126 = scmp.ne.s32.totalorder %s109, %s125
    %p127 = scmp.eq.s32.totalorder %s29, 0
    %p128 = por %p126, %p127
    %s130 = sadd.s32 %s129, 1
    %p133 = scmp.eq.s32.totalorder %s23, 7
    %p134 = scmp.ne.s32.totalorder %s129, %s131
    %p135 = scmp.eq.s32.totalorder %s23, 0
    %p136 = por %p134, %p135
    %p137 = scmp.ne.s32.totalorder %s129, %s131
    %p138 = scmp.eq.s32.totalorder %s28, 7
    %p139 = por %p137, %p138
    %p140 = scmp.ne.s32.totalorder %s131, %s132
    %p141 = scmp.eq.s32.totalorder %s28, 0
    %p142 = por %p140, %p141
    %p143 = scmp.ne.s32.totalorder %s131, %s132
    %p144 = scmp.eq.s32.totalorder %s29, 7
    %p145 = por %p143, %p144
    %p147 = scmp.ne.s32.totalorder %s132, %s146
    %p148 = scmp.eq.s32.totalorder %s29, 0
    %p149 = por %p147, %p148
    %s150 = ssub.s32 %s30, %s42
    %s151 = ssub.s32 %s31, %s38
    %s152 = sor.u32 %s150, %s151
    %p153 = scmp.eq.s32.totalorder %s152, 0
    %s155 = sadd.s32 %s154, 1
    %s156 = scalar_select %p153, %s154, %s155
    %p159 = pneg %p153
    %p160 = scmp.eq.s32.totalorder %s23, 7
    %p161 = por %p159, %p160
    %p162 = scmp.ne.s32.totalorder %s154, %s157
    %p163 = scmp.eq.s32.totalorder %s23, 0
    %p164 = por %p162, %p163
    %p165 = scmp.ne.s32.totalorder %s154, %s157
    %p166 = scmp.eq.s32.totalorder %s28, 7
    %p167 = por %p165, %p166
    %p168 = scmp.ne.s32.totalorder %s157, %s158
    %p169 = scmp.eq.s32.totalorder %s28, 0
    %p170 = por %p168, %p169
    %p171 = scmp.ne.s32.totalorder %s157, %s158
    %p172 = scmp.eq.s32.totalorder %s29, 7
    %p173 = por %p171, %p172
    %p175 = scmp.ne.s32.totalorder %s158, %s174
    %p176 = scmp.eq.s32.totalorder %s29, 0
    %p177 = por %p175, %p176
    %s178 = ssub.s32 %s30, %s42
    %s179 = ssub.s32 %s31, %s38
    %s180 = sor.u32 %s178, %s179
    %p181 = scmp.eq.s32.totalorder %s180, 0
    %s183 = sadd.s32 %s182, 1
    %s184 = scalar_select %p181, %s182, %s183
    %p187 = pneg %p181
    %p188 = scmp.eq.s32.totalorder %s23, 7
    %p189 = por %p187, %p188
    %p190 = scmp.ne.s32.totalorder %s182, %s185
    %p191 = scmp.eq.s32.totalorder %s23, 0
    %p192 = por %p190, %p191
    %p193 = scmp.ne.s32.totalorder %s182, %s185
    %p194 = scmp.eq.s32.totalorder %s28, 7
    %p195 = por %p193, %p194
    %p196 = scmp.ne.s32.totalorder %s185, %s186
    %p197 = scmp.eq.s32.totalorder %s28, 0
    %p198 = por %p196, %p197
    %p199 = scmp.ne.s32.totalorder %s185, %s186
    %p200 = scmp.eq.s32.totalorder %s29, 7
    %p201 = por %p199, %p200
    %p203 = scmp.ne.s32.totalorder %s186, %s202
    %p204 = scmp.eq.s32.totalorder %s29, 0
    %p205 = por %p203, %p204
    %p206 = scmp.le.s32.totalorder 1, %s23
    %p207 = scmp.lt.s32.totalorder %s23, 9
    %p208 = pnand %p206, %p207
    %p209 = pneg %p208
    // Predicated region
    $region9: #{hrnet_v3_forward.21} parent=5 // pred_check
      _
    $region10: #{hrnet_v3_forward.21} parent=5 // pred_check_branch
      %211 = sbr.rel (%p208) target = $region12
    $region11: #{hrnet_v3_forward.21} parent=5 // pred_region
      %s212 = ssub.s32 %s23, 1
      // Predicated region
      $region13: #{hrnet_v3_forward.21} parent=11 // pred_check
        %p213 = pneg %p142
      $region14: #{hrnet_v3_forward.21} parent=11 // pred_check_branch
        %215 = sbr.rel (%p213) target = $region16
      $region15: #{hrnet_v3_forward.21} parent=11 // pred_region
        _
      $region16: #{hrnet_v3_forward.21} parent=11 // pred_fallthru
        _
    $region12: #{hrnet_v3_forward.21} parent=5 // pred_fallthru
      _
    %p216 = scmp.lt.s32.totalorder %s23, 8
    // Predicated region
    $region17: #{hrnet_v3_forward.21} parent=5 // pred_check
      %p217 = pneg %p216
    $region18: #{hrnet_v3_forward.21} parent=5 // pred_check_branch
      %219 = sbr.rel (%p217) target = $region20
    $region19: #{hrnet_v3_forward.21} parent=5 // pred_region
      // Predicated region
      $region21: #{hrnet_v3_forward.21} parent=19 // pred_check
        %p220 = pneg %p59
      $region22: #{hrnet_v3_forward.21} parent=19 // pred_check_branch
        %222 = sbr.rel (%p220) target = $region24
      $region23: #{hrnet_v3_forward.21} parent=19 // pred_region
        %s223 = sld [smem:[#allocation3 + %s31]]
        %p224 = scmp.lt.s32.totalorder %s30, 1
        %s225 = scalar_select %p224, %s30, 1
        %p226 = scmp.lt.s32.totalorder %s223, 1
        %s227 = scalar_select %p226, %s223, 1
        %s228 = smul.addr %s225, 2
        %s229 = sadd.s32 %s227, %s228
        %s230 = smul.addr %s229, 2
        %s231 = scalar_lea.vmem %s2, %s230
        %s232 = sld [smem:[#allocation3 + %s31]]
      $region24: #{hrnet_v3_forward.21} parent=19 // pred_fallthru
        _
      // Predicated region
      $region25: #{hrnet_v3_forward.21} parent=19 // pred_check
        %p233 = pneg %p89
      $region26: #{hrnet_v3_forward.21} parent=19 // pred_check_branch
        %235 = sbr.rel (%p233) target = $region28
      $region27: #{hrnet_v3_forward.21} parent=19 // pred_region
        %s236 = sld [smem:[#allocation4 + %s31]]
        %p237 = scmp.lt.s32.totalorder %s30, 1
        %s238 = scalar_select %p237, %s30, 1
        %p239 = scmp.lt.s32.totalorder %s236, 1
        %s240 = scalar_select %p239, %s236, 1
        %s241 = smul.addr %s238, 2
        %s242 = sadd.s32 %s240, %s241
        %s243 = smul.addr %s242, 2
        %s244 = scalar_lea.vmem %s3, %s243
        %s245 = sld [smem:[#allocation4 + %s31]]
      $region28: #{hrnet_v3_forward.21} parent=19 // pred_fallthru
        _
      // Predicated region
      $region29: #{hrnet_v3_forward.21} parent=19 // pred_check
        %p246 = pneg %p115
      $region30: #{hrnet_v3_forward.21} parent=19 // pred_check_branch
        %248 = sbr.rel (%p246) target = $region32
      $region31: #{hrnet_v3_forward.21} parent=19 // pred_region
        %p249 = scmp.lt.s32.totalorder %s31, 3
        %s250 = scalar_select %p249, %s31, 3
        %s251 = scalar_lea.vmem %s4, %s250
      $region32: #{hrnet_v3_forward.21} parent=19 // pred_fallthru
        _
      // Predicated region
      $region33: #{hrnet_v3_forward.21} parent=19 // pred_check
        %p252 = pneg %p164
      $region34: #{hrnet_v3_forward.21} parent=19 // pred_check_branch
        %254 = sbr.rel (%p252) target = $region36
      $region35: #{hrnet_v3_forward.21} parent=19 // pred_region
        %p255 = scmp.lt.s32.totalorder %s30, 1
        %s256 = scalar_select %p255, %s30, 1
        %p257 = scmp.lt.s32.totalorder %s31, 3
        %s258 = scalar_select %p257, %s31, 3
        %s259 = smul.addr %s256, 4
        %s260 = sadd.s32 %s258, %s259
        %s261 = smul.addr %s260, 4
        %s262 = scalar_lea.vmem %s6, %s261
      $region36: #{hrnet_v3_forward.21} parent=19 // pred_fallthru
        _
    $region20: #{hrnet_v3_forward.21} parent=5 // pred_fallthru
      _
    %p263 = scmp.le.s32.totalorder 1, %s23
    %p264 = scmp.lt.s32.totalorder %s23, 9
    %p265 = pnand %p263, %p264
    %p266 = pneg %p265
    // Predicated region
    $region37: #{hrnet_v3_forward.21} parent=5 // pred_check
      _
    $region38: #{hrnet_v3_forward.21} parent=5 // pred_check_branch
      %268 = sbr.rel (%p265) target = $region40
    $region39: #{hrnet_v3_forward.21} parent=5 // pred_region
      %s269 = ssub.s32 %s23, 1
      %s270 = sld [smem:[#allocation3 + %s33]]
      %p271 = scmp.lt.s32.totalorder %s32, 1
      %s272 = scalar_select %p271, %s32, 1
      %p273 = scmp.lt.s32.totalorder %s270, 1
      %s274 = scalar_select %p273, %s270, 1
      %s275 = smul.addr %s272, 2
      %s276 = sadd.s32 %s274, %s275
      %s277 = smul.addr %s276, 2
      %s278 = scalar_lea.vmem %s2, %s277
      %p279 = pneg %p65
      %p280 = pneg %p62
      %s281 = sld [smem:[#allocation4 + %s33]]
      %p282 = scmp.lt.s32.totalorder %s32, 1
      %s283 = scalar_select %p282, %s32, 1
      %p284 = scmp.lt.s32.totalorder %s281, 1
      %s285 = scalar_select %p284, %s281, 1
      %s286 = smul.addr %s283, 2
      %s287 = sadd.s32 %s285, %s286
      %s288 = smul.addr %s287, 2
      %s289 = scalar_lea.vmem %s3, %s288
      %p290 = pneg %p95
      %p291 = pneg %p92
      %p292 = scmp.lt.s32.totalorder %s33, 3
      %s293 = scalar_select %p292, %s33, 3
      %s294 = scalar_lea.vmem %s4, %s293
      %p295 = pneg %p121
      %p296 = pneg %p118
      %p297 = pneg %p142
      %p298 = pneg %p139
      %p299 = scmp.lt.s32.totalorder %s32, 1
      %s300 = scalar_select %p299, %s32, 1
      %p301 = scmp.lt.s32.totalorder %s33, 3
      %s302 = scalar_select %p301, %s33, 3
      %s303 = smul.addr %s300, 4
      %s304 = sadd.s32 %s302, %s303
      %s305 = smul.addr %s304, 4
      %s306 = scalar_lea.vmem %s6, %s305
      %p307 = pneg %p170
      %p308 = pneg %p167
      %p309 = pneg %p198
      %p310 = pneg %p195
      %p311 = scmp.lt.s32.totalorder %s32, 1
      %s312 = scalar_select %p311, %s32, 1
      %p313 = scmp.lt.s32.totalorder %s33, 3
      %s314 = scalar_select %p313, %s33, 3
      %s315 = smul.addr %s312, 4
      %s316 = sadd.s32 %s314, %s315
      %s317 = smul.addr %s316, 4
      %s318 = scalar_lea.vmem %s7, %s317
      %s319 = sld [smem:[#allocation3 + %s33]]
      %p320 = scmp.lt.s32.totalorder %s32, 1
      %s321 = scalar_select %p320, %s32, 1
      %p322 = scmp.lt.s32.totalorder %s319, 1
      %s323 = scalar_select %p322, %s319, 1
      %s324 = smul.addr %s321, 2
      %s325 = sadd.s32 %s323, %s324
      %s326 = smul.addr %s325, 2
      %s327 = scalar_lea.vmem %s2, %s326
      %s328 = sld [smem:[#allocation3 + %s33]]
      %s329 = sld [smem:[#allocation4 + %s33]]
      %p330 = scmp.lt.s32.totalorder %s32, 1
      %s331 = scalar_select %p330, %s32, 1
      %p332 = scmp.lt.s32.totalorder %s329, 1
      %s333 = scalar_select %p332, %s329, 1
      %s334 = smul.addr %s331, 2
      %s335 = sadd.s32 %s333, %s334
      %s336 = smul.addr %s335, 2
      %s337 = scalar_lea.vmem %s3, %s336
      %s338 = sld [smem:[#allocation4 + %s33]]
      %p339 = scmp.lt.s32.totalorder %s33, 3
      %s340 = scalar_select %p339, %s33, 3
      %s341 = scalar_lea.vmem %s4, %s340
      %p342 = scmp.lt.s32.totalorder %s32, 1
      %s343 = scalar_select %p342, %s32, 1
      %p344 = scmp.lt.s32.totalorder %s33, 3
      %s345 = scalar_select %p344, %s33, 3
      %s346 = smul.addr %s343, 4
      %s347 = sadd.s32 %s345, %s346
      %s348 = smul.addr %s347, 4
      %s349 = scalar_lea.vmem %s6, %s348
      %p350 = scmp.lt.s32.totalorder %s32, 1
      %s351 = scalar_select %p350, %s32, 1
      %p352 = scmp.lt.s32.totalorder %s33, 3
      %s353 = scalar_select %p352, %s33, 3
      %s354 = smul.addr %s351, 4
      %s355 = sadd.s32 %s353, %s354
      %s356 = smul.addr %s355, 4
      %s357 = scalar_lea.vmem %s7, %s356
      %v358 = vld [vmem:[%s341] sm:$0x1]
      %v359 = vld [vmem:[%s327] sm:$0x3]
      %v360 = vsub.f32 1.0, %v358
      %v362 = vlaneseq
      %v363 = vshrl.u32 %v362, 7
      %v364 = vsub.s32 0, %v363
      %v365 = vrot.slane %v360, %v364
      %366 = vset.pattern.permute.xlu0 0
      %367 = vperm.xlu0 %366, %v365
      %v368 = vpop.permute.xlu0 %367
      %v370 = vmul.f32 %v359, %v368
      %v371 = vld [vmem:[%s337] sm:$0x3]
      %v373 = vlaneseq
      %v374 = vshrl.u32 %v373, 7
      %v375 = vsub.s32 0, %v374
      %v376 = vrot.slane %v358, %v375
      %377 = vset.pattern.permute.xlu0 0
      %378 = vperm.xlu0 %377, %v376
      %v379 = vpop.permute.xlu0 %378
      %v381 = vmul.f32 %v371, %v379
      %v382 = vadd.f32 %v370, %v381
      %v383 = vld [vmem:[%s5] sm:$0xf]
      %v384 = vld [vmem:[%s349] sm:$0xf]
      %vm385 = vcmask 15360
      %v387 = vsel %vm385, %v383, 0
      %vm389 = vcmask 1041408
      %v391 = vsel %vm389, %v382, 0
      %393 = vmatprep.subr.mxu0 0.0
      %394 = vmatpush1.msra.mxu0 %v391
      %395 = vmatprep.subr.mxu0 0.0
      %396 = vmatpush1.msra.mxu0 0.0
      %397 = vmatprep.subr.mxu0 0.0
      %398 = vmatpush1.msra.mxu0 0.0
      %399 = vmatprep.subr.mxu0 0.0
      %400 = vmatpush1.msra.mxu0 0.0
      %401 = vmatprep.subr.mxu0 0.0
      %402 = vmatpush1.msra.mxu0 0.0
      %403 = vmatprep.subr.mxu0 0.0
      %404 = vmatpush1.msra.mxu0 0.0
      %405 = vmatprep.subr.mxu0 0.0
      %406 = vmatpush1.msra.mxu0 0.0
      %407 = vmatprep.subr.mxu0 0.0
      %408 = vmatpush1.msra.mxu0 0.0
      %409 = vmatprep.subr.mxu0 0.0
      %410 = vmatpush1.msra.mxu0 0.0
      %411 = vmatprep.subr.mxu0 0.0
      %412 = vmatpush1.msra.mxu0 0.0
      %413 = vmatprep.subr.mxu0 0.0
      %414 = vmatpush1.msra.mxu0 0.0
      %415 = vmatprep.subr.mxu0 0.0
      %416 = vmatpush1.msra.mxu0 0.0
      %417 = vmatprep.subr.mxu0 0.0
      %418 = vmatpush1.msra.mxu0 0.0
      %419 = vmatprep.subr.mxu0 0.0
      %420 = vmatpush1.msra.mxu0 0.0
      %421 = vmatprep.subr.mxu0 0.0
      %422 = vmatpush1.msra.mxu0 0.0
      %423 = vmatprep.subr.mxu0 0.0
      %424 = vmatpush1.msra.mxu0 0.0
      %425 = vmatprep.subr.mxu0 0.0
      %426 = vmatpush1.msra.mxu0 0.0
      %427 = vmatprep.subr.mxu0 0.0
      %428 = vmatpush1.msra.mxu0 0.0
      %429 = vmatprep.subr.mxu0 0.0
      %430 = vmatpush1.msra.mxu0 0.0
      %431 = vmatprep.subr.mxu0 0.0
      %432 = vmatpush1.msra.mxu0 0.0
      %433 = vmatprep.subr.mxu0 0.0
      %434 = vmatpush1.msra.mxu0 0.0
      %435 = vmatprep.subr.mxu0 0.0
      %436 = vmatpush1.msra.mxu0 0.0
      %437 = vmatprep.subr.mxu0 0.0
      %438 = vmatpush1.msra.mxu0 0.0
      %439 = vmatprep.subr.mxu0 0.0
      %440 = vmatpush1.msra.mxu0 0.0
      %441 = vmatprep.subr.mxu0 0.0
      %442 = vmatpush1.msra.mxu0 0.0
      %443 = vmatprep.subr.mxu0 0.0
      %444 = vmatpush1.msra.mxu0 0.0
      %445 = vmatprep.subr.mxu0 0.0
      %446 = vmatpush1.msra.mxu0 0.0
      %447 = vmatprep.subr.mxu0 0.0
      %448 = vmatpush1.msra.mxu0 0.0
      %449 = vmatprep.subr.mxu0 0.0
      %450 = vmatpush1.msra.mxu0 0.0
      %451 = vmatprep.subr.mxu0 0.0
      %452 = vmatpush1.msra.mxu0 0.0
      %453 = vmatprep.subr.mxu0 0.0
      %454 = vmatpush1.msra.mxu0 0.0
      %455 = vmatprep.subr.mxu0 0.0
      %456 = vmatpush1.msra.mxu0 0.0
      %457 = vmatprep.mubr.f32.mxu0 0.0
      %458 = vmatmul.mubr.f32.gmra.mrb[0].mxu0 %v387
      %v459 = vpop.f32.mrb[0].mxu0
      %v460 = vadd.f32 %v384, %v459
      %v461 = vpop.f32.mrb[0].mxu0
      %462 = vdwg.mxu0
      %v463 = vmax.f32 %v460, 0.0
      %464 = vst [vmem:[%s357] sm:$0xf] %v463
      %p465 = scmp.lt.s32.totalorder %s32, 1
      %s466 = scalar_select %p465, %s32, 1
      %p467 = scmp.lt.s32.totalorder %s33, 3
      %s468 = scalar_select %p467, %s33, 3
      %s469 = smul.addr %s466, 4
      %s470 = sadd.s32 %s468, %s469
      %s471 = smul.addr %s470, 4
      %s472 = scalar_lea.vmem %s7, %s471
      // Predicated region
      $region41: #{hrnet_v3_forward.21} parent=39 // pred_check
        %p473 = pneg %p195
      $region42: #{hrnet_v3_forward.21} parent=39 // pred_check_branch
        %475 = sbr.rel (%p473) target = $region44
      $region43: #{hrnet_v3_forward.21} parent=39 // pred_region
        _
      $region44: #{hrnet_v3_forward.21} parent=39 // pred_fallthru
        _
    $region40: #{hrnet_v3_forward.21} parent=5 // pred_fallthru
      _
    %p476 = scmp.le.s32.totalorder 2, %s23
    // Predicated region
    $region45: #{hrnet_v3_forward.21} parent=5 // pred_check
      %p477 = pneg %p476
    $region46: #{hrnet_v3_forward.21} parent=5 // pred_check_branch
      %479 = sbr.rel (%p477) target = $region48
    $region47: #{hrnet_v3_forward.21} parent=5 // pred_region
      %s480 = ssub.s32 %s23, 2
      // Predicated region
      $region49: #{hrnet_v3_forward.21} parent=47 // pred_check
        %p481 = pneg %p201
      $region50: #{hrnet_v3_forward.21} parent=47 // pred_check_branch
        %483 = sbr.rel (%p481) target = $region52
      $region51: #{hrnet_v3_forward.21} parent=47 // pred_region
        %p484 = scmp.lt.s32.totalorder %s34, 1
        %s485 = scalar_select %p484, %s34, 1
        %p486 = scmp.lt.s32.totalorder %s35, 3
        %s487 = scalar_select %p486, %s35, 3
        %s488 = smul.addr %s485, 4
        %s489 = sadd.s32 %s487, %s488
        %s490 = smul.addr %s489, 4
        %s491 = scalar_lea.vmem %s7, %s490
      $region52: #{hrnet_v3_forward.21} parent=47 // pred_fallthru
        _
    $region48: #{hrnet_v3_forward.21} parent=5 // pred_fallthru
      _
  $region6: #{hrnet_v3_forward.21} parent=0 // loop_footer
    %s27 = sadd.s32 1, %s23
  $region7: #{hrnet_v3_forward.21} parent=0 // loop_footer_branch
    %22 = sbr.rel target = $region3
  $region8: #{hrnet_v3_forward.21} parent=0 // loop_exit
    _

// kernel: hrnet_v3_forward.24
$region0: #{hrnet_v3_forward.24}
  #allocation0 [shape = 'u32[]', space=smem, size = 0x4, offset = 0x4, fixed_abs, tag = 'smem constant byte address 0x4 - core index']
  #allocation1 [shape = 'u32[144,128]{1,0:T(1,128)}', space=vmem, size = 0x12000, scoped, tag = 'internal scratch']
  #allocation2 [shape = 'f32[32,128]{1,0:T(8,128)}', space=vmem, size = 0x4000, scoped, tag = 'scratch operand']
  %s0 = inlined_call_operand.vmem [shape: bf16[32,128], index: 0, kind: input, shape index: {}]
  %s1 = inlined_call_operand.vmem [shape: bf16[128,128], index: 1, kind: input, shape index: {}]
  %s2 = inlined_call_operand.vmem [shape: f32[1,128], index: 2, kind: input, shape index: {}]
  %s3 = inlined_call_operand.vmem [shape: f32[32,128], index: 3, kind: output, shape index: {}]
  %s4 = sld [smem:[#allocation0]]
  $region30: #{hrnet_v3_forward.24} parent=0
    _
  %s6 = ssub.s32 1, %s4
  %s7 = scalar_select 0, %s6, %s4
  // Predicated region
  $region2: #{hrnet_v3_forward.24} parent=0 // pred_check
    _
  $region3: #{hrnet_v3_forward.24} parent=0 // pred_check_branch
    %9 = sbr.rel (0) target = $region5
  $region4: #{hrnet_v3_forward.24} parent=0 // pred_region
    _
  $region5: #{hrnet_v3_forward.24} parent=0 // pred_fallthru
    _
  // Predicated region
  $region6: #{hrnet_v3_forward.24} parent=0 // pred_check
    _
  $region7: #{hrnet_v3_forward.24} parent=0 // pred_check_branch
    %11 = sbr.rel (0) target = $region9
  $region8: #{hrnet_v3_forward.24} parent=0 // pred_region
    _
  $region9: #{hrnet_v3_forward.24} parent=0 // pred_fallthru
    _
  // Predicated region
  $region10: #{hrnet_v3_forward.24} parent=0 // pred_check
    _
  $region11: #{hrnet_v3_forward.24} parent=0 // pred_check_branch
    %13 = sbr.rel (0) target = $region13
  $region12: #{hrnet_v3_forward.24} parent=0 // pred_region
    _
  $region13: #{hrnet_v3_forward.24} parent=0 // pred_fallthru
    _
  %p15 = scmp.eq.s32.totalorder 0, 0
  // Predicated region
  $region14: #{hrnet_v3_forward.24} parent=0 // pred_check
    %p16 = pneg %p15
  $region15: #{hrnet_v3_forward.24} parent=0 // pred_check_branch
    %18 = sbr.rel (%p16) target = $region17
  $region16: #{hrnet_v3_forward.24} parent=0 // pred_region
    %19 = vst [vmem:[#allocation2] sm:$0xff] 0.0
    %20 = vst [vmem:[#allocation2 + $0x8] sm:$0xff] 0.0
    %21 = vst [vmem:[#allocation2 + $0x10] sm:$0xff] 0.0
    %22 = vst [vmem:[#allocation2 + $0x18] sm:$0xff] 0.0
  $region17: #{hrnet_v3_forward.24} parent=0 // pred_fallthru
    _
  %v23 = vld [vmem:[#allocation2] sm:$0xff]
  %v24 = vld [vmem:[#allocation2 + $0x8] sm:$0xff]
  %v25 = vld [vmem:[#allocation2 + $0x10] sm:$0xff]
  %v26 = vld [vmem:[#allocation2 + $0x18] sm:$0xff]
  %v27 = vld [vmem:[%s0] sm:$0xf]
  %v28 = vld [vmem:[%s0 + $0x4] sm:$0xf]
  %v29 = vld [vmem:[%s0 + $0x8] sm:$0xf]
  %v30 = vld [vmem:[%s0 + $0xc] sm:$0xf]
  %v31 = vld [vmem:[%s1] sm:$0xf]
  %v32 = vld [vmem:[%s1 + $0x4] sm:$0xf]
  %v33 = vld [vmem:[%s1 + $0x8] sm:$0xf]
  %v34 = vld [vmem:[%s1 + $0xc] sm:$0xf]
  %v35 = vld [vmem:[%s1 + $0x10] sm:$0xf]
  %v36 = vld [vmem:[%s1 + $0x14] sm:$0xf]
  %v37 = vld [vmem:[%s1 + $0x18] sm:$0xf]
  %v38 = vld [vmem:[%s1 + $0x1c] sm:$0xf]
  %v39 = vld [vmem:[%s1 + $0x20] sm:$0xf]
  %v40 = vld [vmem:[%s1 + $0x24] sm:$0xf]
  %v41 = vld [vmem:[%s1 + $0x28] sm:$0xf]
  %v42 = vld [vmem:[%s1 + $0x2c] sm:$0xf]
  %v43 = vld [vmem:[%s1 + $0x30] sm:$0xf]
  %v44 = vld [vmem:[%s1 + $0x34] sm:$0xf]
  %v45 = vld [vmem:[%s1 + $0x38] sm:$0xf]
  %v46 = vld [vmem:[%s1 + $0x3c] sm:$0xf]
  %v51 = vunpack.c.l.b16 %v27
  %v52 = vunpack.c.l.b16 %v28
  %v53 = vunpack.c.l.b16 %v29
  %v54 = vunpack.c.l.b16 %v30
  %v55 = vpack.c.b16 %v52, %v51
  %v56 = vpack.c.b16 %v54, %v53
  %v75 = vunpack.c.l.b16 %v31
  %v76 = vunpack.c.l.b16 %v32
  %v77 = vunpack.c.l.b16 %v33
  %v78 = vunpack.c.l.b16 %v34
  %v79 = vunpack.c.l.b16 %v35
  %v80 = vunpack.c.l.b16 %v36
  %v81 = vunpack.c.l.b16 %v37
  %v82 = vunpack.c.l.b16 %v38
  %v83 = vunpack.c.l.b16 %v39
  %v84 = vunpack.c.l.b16 %v40
  %v85 = vunpack.c.l.b16 %v41
  %v86 = vunpack.c.l.b16 %v42
  %v87 = vunpack.c.l.b16 %v43
  %v88 = vunpack.c.l.b16 %v44
  %v89 = vunpack.c.l.b16 %v45
  %v90 = vunpack.c.l.b16 %v46
  %v91 = vpack.c.b16 %v76, %v75
  %v92 = vpack.c.b16 %v78, %v77
  %v93 = vpack.c.b16 %v80, %v79
  %v94 = vpack.c.b16 %v82, %v81
  %v95 = vpack.c.b16 %v84, %v83
  %v96 = vpack.c.b16 %v86, %v85
  %v97 = vpack.c.b16 %v88, %v87
  %v98 = vpack.c.b16 %v90, %v89
  %107 = vmatprep.subr.bf16.mxu0 0
  %108 = vmatpush1.bf16.msra.mxu0 %v91
  %109 = vmatprep.subr.bf16.mxu0 0
  %110 = vmatpush1.bf16.msra.mxu0 %v92
  %111 = vmatprep.subr.bf16.mxu0 0
  %112 = vmatpush1.bf16.msra.mxu0 %v93
  %113 = vmatprep.subr.bf16.mxu0 0
  %114 = vmatpush1.bf16.msra.mxu0 %v94
  %115 = vmatprep.subr.bf16.mxu0 0
  %116 = vmatpush1.bf16.msra.mxu0 %v95
  %117 = vmatprep.subr.bf16.mxu0 0
  %118 = vmatpush1.bf16.msra.mxu0 %v96
  %119 = vmatprep.subr.bf16.mxu0 0
  %120 = vmatpush1.bf16.msra.mxu0 %v97
  %121 = vmatprep.subr.bf16.mxu0 0
  %122 = vmatpush1.bf16.msra.mxu0 %v98
  %123 = vmatprep.subr.bf16.mxu0 0
  %124 = vmatpush1.bf16.msra.mxu0 0
  %125 = vmatprep.subr.bf16.mxu0 0
  %126 = vmatpush1.bf16.msra.mxu0 0
  %127 = vmatprep.subr.bf16.mxu0 0
  %128 = vmatpush1.bf16.msra.mxu0 0
  %129 = vmatprep.subr.bf16.mxu0 0
  %130 = vmatpush1.bf16.msra.mxu0 0
  %131 = vmatprep.subr.bf16.mxu0 0
  %132 = vmatpush1.bf16.msra.mxu0 0
  %133 = vmatprep.subr.bf16.mxu0 0
  %134 = vmatpush1.bf16.msra.mxu0 0
  %135 = vmatprep.subr.bf16.mxu0 0
  %136 = vmatpush1.bf16.msra.mxu0 0
  %137 = vmatprep.subr.bf16.mxu0 0
  %138 = vmatpush1.bf16.msra.mxu0 0
  %139 = vmatprep.mubr.bf16.mxu0 0
  %140 = vmatmul.mubr.bf16.gmra.mrb[0].mxu0 %v55
  %v141 = vpop.f32.mrb[0].mxu0
  %v142 = vadd.f32 0.0, %v141
  %v143 = vpop.f32.mrb[0].mxu0
  %v144 = vpop.f32.mrb[0].mxu0
  %v145 = vadd.f32 0.0, %v144
  %v146 = vpop.f32.mrb[0].mxu0
  %147 = vmatprep.mubr.bf16.mxu0 0
  %148 = vmatmul.mubr.bf16.gmra.mrb[0].mxu0 %v56
  %v149 = vpop.f32.mrb[0].mxu0
  %v150 = vadd.f32 0.0, %v149
  %v151 = vpop.f32.mrb[0].mxu0
  %v152 = vpop.f32.mrb[0].mxu0
  %v153 = vadd.f32 0.0, %v152
  %v154 = vpop.f32.mrb[0].mxu0
  %155 = vdwg.mxu0
  %v156 = vadd.f32 %v23, %v142
  %v157 = vadd.f32 %v24, %v145
  %v158 = vadd.f32 %v25, %v150
  %v159 = vadd.f32 %v26, %v153
  %160 = vst [vmem:[#allocation2] sm:$0xff] %v156
  %161 = vst [vmem:[#allocation2 + $0x8] sm:$0xff] %v157
  %162 = vst [vmem:[#allocation2 + $0x10] sm:$0xff] %v158
  %163 = vst [vmem:[#allocation2 + $0x18] sm:$0xff] %v159
  // Predicated region
  $region18: #{hrnet_v3_forward.24} parent=0 // pred_check
    %p164 = pneg %p15
  $region19: #{hrnet_v3_forward.24} parent=0 // pred_check_branch
    %166 = sbr.rel (%p164) target = $region21
  $region20: #{hrnet_v3_forward.24} parent=0 // pred_region
    %v167 = vld [vmem:[#allocation2] sm:$0xff]
    %v168 = vld [vmem:[#allocation2 + $0x8] sm:$0xff]
    %v169 = vld [vmem:[#allocation2 + $0x10] sm:$0xff]
    %v170 = vld [vmem:[#allocation2 + $0x18] sm:$0xff]
    %v171 = vld [vmem:[%s2] sm:$0x1]
    %v173 = vlaneseq
    %v174 = vshrl.u32 %v173, 7
    %v175 = vsub.s32 0, %v174
    %v176 = vrot.slane %v171, %v175
    %v178 = vadd.f32 %v167, %v176
    %v179 = vadd.f32 %v168, %v176
    %v180 = vadd.f32 %v169, %v176
    %v181 = vadd.f32 %v170, %v176
    %182 = vst [vmem:[%s3] sm:$0xff] %v178
    %183 = vst [vmem:[%s3 + $0x8] sm:$0xff] %v179
    %184 = vst [vmem:[%s3 + $0x10] sm:$0xff] %v180
    %185 = vst [vmem:[%s3 + $0x18] sm:$0xff] %v181
  $region21: #{hrnet_v3_forward.24} parent=0 // pred_fallthru
    _
  // Predicated region
  $region22: #{hrnet_v3_forward.24} parent=0 // pred_check
    _
  $region23: #{hrnet_v3_forward.24} parent=0 // pred_check_branch
    %187 = sbr.rel (0) target = $region25
  $region24: #{hrnet_v3_forward.24} parent=0 // pred_region
    _
  $region25: #{hrnet_v3_forward.24} parent=0 // pred_fallthru
    _
  // Predicated region
  $region26: #{hrnet_v3_forward.24} parent=0 // pred_check
    _
  $region27: #{hrnet_v3_forward.24} parent=0 // pred_check_branch
    %189 = sbr.rel (0) target = $region29
  $region28: #{hrnet_v3_forward.24} parent=0 // pred_region
    _
  $region29: #{hrnet_v3_forward.24} parent=0 // pred_fallthru
    _

// kernel: hrnet_v3_forward.23
$region0: #{hrnet_v3_forward.23}
  #allocation0 [shape = 'u32[]', space=smem, size = 0x4, offset = 0x4, fixed_abs, tag = 'smem constant byte address 0x4 - core index']
  #allocation1 [shape = 'u32[144,128]{1,0:T(1,128)}', space=vmem, size = 0x12000, scoped, tag = 'internal scratch']
  #allocation2 [shape = 's32[1]{0}', space=sflag, size = 0x4, scoped, tag = 'scoped memory for hrnet_v3_forward.23']
  #allocation3 [shape = 'u8[512]{0}', space=smem, size = 0x200, scoped, tag = 'prefetched SMEM operand 0']
  #allocation4 [shape = 'u8[512]{0}', space=smem, size = 0x200, scoped, tag = 'prefetched SMEM operand 1']
  %s0 = inlined_call_operand.vmem [shape: s32[4], index: 0, kind: input, shape index: {}]
  %s1 = inlined_call_operand.vmem [shape: s32[4], index: 1, kind: input, shape index: {}]
  %s2 = inlined_call_operand.vmem [shape: f32[2,2,2,128], index: 2, kind: input, shape index: {}, may-alias: {2,3}]
  %s3 = inlined_call_operand.vmem [shape: f32[2,2,2,128], index: 3, kind: input, shape index: {}, may-alias: {2,3}]
  %s4 = inlined_call_operand.vmem [shape: f32[4,1,128], index: 4, kind: input, shape index: {}]
  %s5 = inlined_call_operand.vmem [shape: f32[4,2], index: 5, kind: input, shape index: {}]
  %s6 = inlined_call_operand.vmem [shape: f32[2,4,4,128], index: 6, kind: output, shape index: {}]
  %s7 = sld [smem:[#allocation0]]
  $region49: #{hrnet_v3_forward.23} parent=0
    _
  %s9 = ssub.s32 1, %s7
  %s10 = scalar_select 0, %s9, %s7
  %s11 = sshll.u32 %s0, 4
  %s12 = int_to_ptr.vmem [resolvable:$true] %s11
  %14 = dma.vmem_to_smem %s12, 16, [#allocation3], [#allocation2]
  %s15 = sshll.u32 %s1, 4
  %s16 = int_to_ptr.vmem [resolvable:$true] %s15
  %18 = dma.vmem_to_smem %s16, 16, [#allocation4], [#allocation2]
  %19 = dma.done [#allocation2], 32
  %20 = sfence
  loop: start=0, step=1, limit=10
  $region2: #{hrnet_v3_forward.23} parent=0 // loop_pre_header
    _
  $region3: #{hrnet_v3_forward.23} parent=0 // loop_header
    %s22 = sphi 0, %s26
    %p23 = scmp.ge.s32.totalorder %s22, 10
    %s29 = sphi 0, %s41
    %s30 = sphi 0, %s37
    %s31 = sphi 0, %s29
    %s32 = sphi 0, %s30
    %s33 = sphi 0, %s31
    %s34 = sphi 0, %s32
    %s48 = sphi 0, %s50
    %s51 = sphi 0, %s48
    %s52 = sphi 0, %s51
    %s68 = sphi 0, %s52
    %s78 = sphi 0, %s80
    %s81 = sphi 0, %s78
    %s82 = sphi 0, %s81
    %s98 = sphi 0, %s82
    %s104 = sphi 0, %s106
    %s107 = sphi 0, %s104
    %s108 = sphi 0, %s107
    %s124 = sphi 0, %s108
    %s128 = sphi 0, %s128
    %s130 = sphi 0, %s128
    %s131 = sphi 0, %s130
    %s145 = sphi 0, %s131
    %s153 = sphi 0, %s155
    %s156 = sphi 0, %s153
    %s157 = sphi 0, %s156
    %s173 = sphi 0, %s157
  $region4: #{hrnet_v3_forward.23} parent=0 // loop_header_branch
    %25 = sbr.rel (%p23) target = $region8
  $region5: #{hrnet_v3_forward.23} parent=0 // loop_body
    %s27 = ssub.s32 %s22, 1
    %s28 = ssub.s32 %s22, 2
    %s35 = sadd.s32 1, %s30
    %p36 = scmp.ge.s32.totalorder %s35, 4
    %s37 = scalar_select %p36, 0, %s35
    %s38 = sadd.s32 1, %s29
    %s39 = scalar_select %p36, %s38, %s29
    %p40 = scmp.ge.s32.totalorder %s39, 2
    %s41 = scalar_select %p40, 0, %s39
    %s42 = sld [smem:[#allocation3 + %s30]]
    %s43 = sld [smem:[#allocation3 + %s37]]
    %s44 = ssub.s32 %s29, %s41
    %s45 = ssub.s32 %s42, %s43
    %s46 = sor.u32 %s44, %s45
    %p47 = scmp.eq.s32.totalorder %s46, 0
    %s49 = sadd.s32 %s48, 1
    %s50 = scalar_select %p47, %s48, %s49
    %p53 = pneg %p47
    %p54 = scmp.eq.s32.totalorder %s22, 7
    %p55 = por %p53, %p54
    %p56 = scmp.ne.s32.totalorder %s48, %s51
    %p57 = scmp.eq.s32.totalorder %s22, 0
    %p58 = por %p56, %p57
    %p59 = scmp.ne.s32.totalorder %s48, %s51
    %p60 = scmp.eq.s32.totalorder %s27, 7
    %p61 = por %p59, %p60
    %p62 = scmp.ne.s32.totalorder %s51, %s52
    %p63 = scmp.eq.s32.totalorder %s27, 0
    %p64 = por %p62, %p63
    %p65 = scmp.ne.s32.totalorder %s51, %s52
    %p66 = scmp.eq.s32.totalorder %s28, 7
    %p67 = por %p65, %p66
    %p69 = scmp.ne.s32.totalorder %s52, %s68
    %p70 = scmp.eq.s32.totalorder %s28, 0
    %p71 = por %p69, %p70
    %s72 = sld [smem:[#allocation4 + %s30]]
    %s73 = sld [smem:[#allocation4 + %s37]]
    %s74 = ssub.s32 %s29, %s41
    %s75 = ssub.s32 %s72, %s73
    %s76 = sor.u32 %s74, %s75
    %p77 = scmp.eq.s32.totalorder %s76, 0
    %s79 = sadd.s32 %s78, 1
    %s80 = scalar_select %p77, %s78, %s79
    %p83 = pneg %p77
    %p84 = scmp.eq.s32.totalorder %s22, 7
    %p85 = por %p83, %p84
    %p86 = scmp.ne.s32.totalorder %s78, %s81
    %p87 = scmp.eq.s32.totalorder %s22, 0
    %p88 = por %p86, %p87
    %p89 = scmp.ne.s32.totalorder %s78, %s81
    %p90 = scmp.eq.s32.totalorder %s27, 7
    %p91 = por %p89, %p90
    %p92 = scmp.ne.s32.totalorder %s81, %s82
    %p93 = scmp.eq.s32.totalorder %s27, 0
    %p94 = por %p92, %p93
    %p95 = scmp.ne.s32.totalorder %s81, %s82
    %p96 = scmp.eq.s32.totalorder %s28, 7
    %p97 = por %p95, %p96
    %p99 = scmp.ne.s32.totalorder %s82, %s98
    %p100 = scmp.eq.s32.totalorder %s28, 0
    %p101 = por %p99, %p100
    %s102 = ssub.s32 %s30, %s37
    %p103 = scmp.eq.s32.totalorder %s102, 0
    %s105 = sadd.s32 %s104, 1
    %s106 = scalar_select %p103, %s104, %s105
    %p109 = pneg %p103
    %p110 = scmp.eq.s32.totalorder %s22, 7
    %p111 = por %p109, %p110
    %p112 = scmp.ne.s32.totalorder %s104, %s107
    %p113 = scmp.eq.s32.totalorder %s22, 0
    %p114 = por %p112, %p113
    %p115 = scmp.ne.s32.totalorder %s104, %s107
    %p116 = scmp.eq.s32.totalorder %s27, 7
    %p117 = por %p115, %p116
    %p118 = scmp.ne.s32.totalorder %s107, %s108
    %p119 = scmp.eq.s32.totalorder %s27, 0
    %p120 = por %p118, %p119
    %p121 = scmp.ne.s32.totalorder %s107, %s108
    %p122 = scmp.eq.s32.totalorder %s28, 7
    %p123 = por %p121, %p122
    %p125 = scmp.ne.s32.totalorder %s108, %s124
    %p126 = scmp.eq.s32.totalorder %s28, 0
    %p127 = por %p125, %p126
    %s129 = sadd.s32 %s128, 1
    %p132 = scmp.eq.s32.totalorder %s22, 7
    %p133 = scmp.ne.s32.totalorder %s128, %s130
    %p134 = scmp.eq.s32.totalorder %s22, 0
    %p135 = por %p133, %p134
    %p136 = scmp.ne.s32.totalorder %s128, %s130
    %p137 = scmp.eq.s32.totalorder %s27, 7
    %p138 = por %p136, %p137
    %p139 = scmp.ne.s32.totalorder %s130, %s131
    %p140 = scmp.eq.s32.totalorder %s27, 0
    %p141 = por %p139, %p140
    %p142 = scmp.ne.s32.totalorder %s130, %s131
    %p143 = scmp.eq.s32.totalorder %s28, 7
    %p144 = por %p142, %p143
    %p146 = scmp.ne.s32.totalorder %s131, %s145
    %p147 = scmp.eq.s32.totalorder %s28, 0
    %p148 = por %p146, %p147
    %s149 = ssub.s32 %s29, %s41
    %s150 = ssub.s32 %s30, %s37
    %s151 = sor.u32 %s149, %s150
    %p152 = scmp.eq.s32.totalorder %s151, 0
    %s154 = sadd.s32 %s153, 1
    %s155 = scalar_select %p152, %s153, %s154
    %p158 = pneg %p152
    %p159 = scmp.eq.s32.totalorder %s22, 7
    %p160 = por %p158, %p159
    %p161 = scmp.ne.s32.totalorder %s153, %s156
    %p162 = scmp.eq.s32.totalorder %s22, 0
    %p163 = por %p161, %p162
    %p164 = scmp.ne.s32.totalorder %s153, %s156
    %p165 = scmp.eq.s32.totalorder %s27, 7
    %p166 = por %p164, %p165
    %p167 = scmp.ne.s32.totalorder %s156, %s157
    %p168 = scmp.eq.s32.totalorder %s27, 0
    %p169 = por %p167, %p168
    %p170 = scmp.ne.s32.totalorder %s156, %s157
    %p171 = scmp.eq.s32.totalorder %s28, 7
    %p172 = por %p170, %p171
    %p174 = scmp.ne.s32.totalorder %s157, %s173
    %p175 = scmp.eq.s32.totalorder %s28, 0
    %p176 = por %p174, %p175
    %p177 = scmp.le.s32.totalorder 1, %s22
    %p178 = scmp.lt.s32.totalorder %s22, 9
    %p179 = pnand %p177, %p178
    %p180 = pneg %p179
    // Predicated region
    $region9: #{hrnet_v3_forward.23} parent=5 // pred_check
      _
    $region10: #{hrnet_v3_forward.23} parent=5 // pred_check_branch
      %182 = sbr.rel (%p179) target = $region12
    $region11: #{hrnet_v3_forward.23} parent=5 // pred_region
      %s183 = ssub.s32 %s22, 1
      // Predicated region
      $region13: #{hrnet_v3_forward.23} parent=11 // pred_check
        %p184 = pneg %p141
      $region14: #{hrnet_v3_forward.23} parent=11 // pred_check_branch
        %186 = sbr.rel (%p184) target = $region16
      $region15: #{hrnet_v3_forward.23} parent=11 // pred_region
        _
      $region16: #{hrnet_v3_forward.23} parent=11 // pred_fallthru
        _
    $region12: #{hrnet_v3_forward.23} parent=5 // pred_fallthru
      _
    %p187 = scmp.lt.s32.totalorder %s22, 8
    // Predicated region
    $region17: #{hrnet_v3_forward.23} parent=5 // pred_check
      %p188 = pneg %p187
    $region18: #{hrnet_v3_forward.23} parent=5 // pred_check_branch
      %190 = sbr.rel (%p188) target = $region20
    $region19: #{hrnet_v3_forward.23} parent=5 // pred_region
      // Predicated region
      $region21: #{hrnet_v3_forward.23} parent=19 // pred_check
        %p191 = pneg %p58
      $region22: #{hrnet_v3_forward.23} parent=19 // pred_check_branch
        %193 = sbr.rel (%p191) target = $region24
      $region23: #{hrnet_v3_forward.23} parent=19 // pred_region
        %s194 = sld [smem:[#allocation3 + %s30]]
        %p195 = scmp.lt.s32.totalorder %s29, 1
        %s196 = scalar_select %p195, %s29, 1
        %p197 = scmp.lt.s32.totalorder %s194, 1
        %s198 = scalar_select %p197, %s194, 1
        %s199 = smul.addr %s196, 2
        %s200 = sadd.s32 %s198, %s199
        %s201 = smul.addr %s200, 2
        %s202 = scalar_lea.vmem %s2, %s201
        %s203 = sld [smem:[#allocation3 + %s30]]
      $region24: #{hrnet_v3_forward.23} parent=19 // pred_fallthru
        _
      // Predicated region
      $region25: #{hrnet_v3_forward.23} parent=19 // pred_check
        %p204 = pneg %p88
      $region26: #{hrnet_v3_forward.23} parent=19 // pred_check_branch
        %206 = sbr.rel (%p204) target = $region28
      $region27: #{hrnet_v3_forward.23} parent=19 // pred_region
        %s207 = sld [smem:[#allocation4 + %s30]]
        %p208 = scmp.lt.s32.totalorder %s29, 1
        %s209 = scalar_select %p208, %s29, 1
        %p210 = scmp.lt.s32.totalorder %s207, 1
        %s211 = scalar_select %p210, %s207, 1
        %s212 = smul.addr %s209, 2
        %s213 = sadd.s32 %s211, %s212
        %s214 = smul.addr %s213, 2
        %s215 = scalar_lea.vmem %s3, %s214
        %s216 = sld [smem:[#allocation4 + %s30]]
      $region28: #{hrnet_v3_forward.23} parent=19 // pred_fallthru
        _
      // Predicated region
      $region29: #{hrnet_v3_forward.23} parent=19 // pred_check
        %p217 = pneg %p114
      $region30: #{hrnet_v3_forward.23} parent=19 // pred_check_branch
        %219 = sbr.rel (%p217) target = $region32
      $region31: #{hrnet_v3_forward.23} parent=19 // pred_region
        %p220 = scmp.lt.s32.totalorder %s30, 3
        %s221 = scalar_select %p220, %s30, 3
        %s222 = scalar_lea.vmem %s4, %s221
      $region32: #{hrnet_v3_forward.23} parent=19 // pred_fallthru
        _
    $region20: #{hrnet_v3_forward.23} parent=5 // pred_fallthru
      _
    %p223 = scmp.le.s32.totalorder 1, %s22
    %p224 = scmp.lt.s32.totalorder %s22, 9
    %p225 = pnand %p223, %p224
    %p226 = pneg %p225
    // Predicated region
    $region33: #{hrnet_v3_forward.23} parent=5 // pred_check
      _
    $region34: #{hrnet_v3_forward.23} parent=5 // pred_check_branch
      %228 = sbr.rel (%p225) target = $region36
    $region35: #{hrnet_v3_forward.23} parent=5 // pred_region
      %s229 = ssub.s32 %s22, 1
      %s230 = sld [smem:[#allocation3 + %s32]]
      %p231 = scmp.lt.s32.totalorder %s31, 1
      %s232 = scalar_select %p231, %s31, 1
      %p233 = scmp.lt.s32.totalorder %s230, 1
      %s234 = scalar_select %p233, %s230, 1
      %s235 = smul.addr %s232, 2
      %s236 = sadd.s32 %s234, %s235
      %s237 = smul.addr %s236, 2
      %s238 = scalar_lea.vmem %s2, %s237
      %p239 = pneg %p64
      %p240 = pneg %p61
      %s241 = sld [smem:[#allocation4 + %s32]]
      %p242 = scmp.lt.s32.totalorder %s31, 1
      %s243 = scalar_select %p242, %s31, 1
      %p244 = scmp.lt.s32.totalorder %s241, 1
      %s245 = scalar_select %p244, %s241, 1
      %s246 = smul.addr %s243, 2
      %s247 = sadd.s32 %s245, %s246
      %s248 = smul.addr %s247, 2
      %s249 = scalar_lea.vmem %s3, %s248
      %p250 = pneg %p94
      %p251 = pneg %p91
      %p252 = scmp.lt.s32.totalorder %s32, 3
      %s253 = scalar_select %p252, %s32, 3
      %s254 = scalar_lea.vmem %s4, %s253
      %p255 = pneg %p120
      %p256 = pneg %p117
      %p257 = pneg %p141
      %p258 = pneg %p138
      %p259 = pneg %p169
      %p260 = pneg %p166
      %p261 = scmp.lt.s32.totalorder %s31, 1
      %s262 = scalar_select %p261, %s31, 1
      %p263 = scmp.lt.s32.totalorder %s32, 3
      %s264 = scalar_select %p263, %s32, 3
      %s265 = smul.addr %s262, 4
      %s266 = sadd.s32 %s264, %s265
      %s267 = smul.addr %s266, 4
      %s268 = scalar_lea.vmem %s6, %s267
      %s269 = sld [smem:[#allocation3 + %s32]]
      %p270 = scmp.lt.s32.totalorder %s31, 1
      %s271 = scalar_select %p270, %s31, 1
      %p272 = scmp.lt.s32.totalorder %s269, 1
      %s273 = scalar_select %p272, %s269, 1
      %s274 = smul.addr %s271, 2
      %s275 = sadd.s32 %s273, %s274
      %s276 = smul.addr %s275, 2
      %s277 = scalar_lea.vmem %s2, %s276
      %s278 = sld [smem:[#allocation3 + %s32]]
      %s279 = sld [smem:[#allocation4 + %s32]]
      %p280 = scmp.lt.s32.totalorder %s31, 1
      %s281 = scalar_select %p280, %s31, 1
      %p282 = scmp.lt.s32.totalorder %s279, 1
      %s283 = scalar_select %p282, %s279, 1
      %s284 = smul.addr %s281, 2
      %s285 = sadd.s32 %s283, %s284
      %s286 = smul.addr %s285, 2
      %s287 = scalar_lea.vmem %s3, %s286
      %s288 = sld [smem:[#allocation4 + %s32]]
      %p289 = scmp.lt.s32.totalorder %s32, 3
      %s290 = scalar_select %p289, %s32, 3
      %s291 = scalar_lea.vmem %s4, %s290
      %p292 = scmp.lt.s32.totalorder %s31, 1
      %s293 = scalar_select %p292, %s31, 1
      %p294 = scmp.lt.s32.totalorder %s32, 3
      %s295 = scalar_select %p294, %s32, 3
      %s296 = smul.addr %s293, 4
      %s297 = sadd.s32 %s295, %s296
      %s298 = smul.addr %s297, 4
      %s299 = scalar_lea.vmem %s6, %s298
      %v300 = vld [vmem:[%s291] sm:$0x1]
      %v301 = vld [vmem:[%s277] sm:$0x3]
      %v302 = vsub.f32 1.0, %v300
      %v304 = vlaneseq
      %v305 = vshrl.u32 %v304, 7
      %v306 = vsub.s32 0, %v305
      %v307 = vrot.slane %v302, %v306
      %308 = vset.pattern.permute.xlu0 0
      %309 = vperm.xlu0 %308, %v307
      %v310 = vpop.permute.xlu0 %309
      %v312 = vmul.f32 %v301, %v310
      %v313 = vld [vmem:[%s287] sm:$0x3]
      %v315 = vlaneseq
      %v316 = vshrl.u32 %v315, 7
      %v317 = vsub.s32 0, %v316
      %v318 = vrot.slane %v300, %v317
      %319 = vset.pattern.permute.xlu0 0
      %320 = vperm.xlu0 %319, %v318
      %v321 = vpop.permute.xlu0 %320
      %v323 = vmul.f32 %v313, %v321
      %v324 = vadd.f32 %v312, %v323
      %v325 = vld [vmem:[%s5] sm:$0xf]
      %vm326 = vcmask 15360
      %v328 = vsel %vm326, %v325, 0
      %vm330 = vcmask 1041408
      %v332 = vsel %vm330, %v324, 0
      %334 = vmatprep.subr.mxu0 0.0
      %335 = vmatpush1.msra.mxu0 %v332
      %336 = vmatprep.subr.mxu0 0.0
      %337 = vmatpush1.msra.mxu0 0.0
      %338 = vmatprep.subr.mxu0 0.0
      %339 = vmatpush1.msra.mxu0 0.0
      %340 = vmatprep.subr.mxu0 0.0
      %341 = vmatpush1.msra.mxu0 0.0
      %342 = vmatprep.subr.mxu0 0.0
      %343 = vmatpush1.msra.mxu0 0.0
      %344 = vmatprep.subr.mxu0 0.0
      %345 = vmatpush1.msra.mxu0 0.0
      %346 = vmatprep.subr.mxu0 0.0
      %347 = vmatpush1.msra.mxu0 0.0
      %348 = vmatprep.subr.mxu0 0.0
      %349 = vmatpush1.msra.mxu0 0.0
      %350 = vmatprep.subr.mxu0 0.0
      %351 = vmatpush1.msra.mxu0 0.0
      %352 = vmatprep.subr.mxu0 0.0
      %353 = vmatpush1.msra.mxu0 0.0
      %354 = vmatprep.subr.mxu0 0.0
      %355 = vmatpush1.msra.mxu0 0.0
      %356 = vmatprep.subr.mxu0 0.0
      %357 = vmatpush1.msra.mxu0 0.0
      %358 = vmatprep.subr.mxu0 0.0
      %359 = vmatpush1.msra.mxu0 0.0
      %360 = vmatprep.subr.mxu0 0.0
      %361 = vmatpush1.msra.mxu0 0.0
      %362 = vmatprep.subr.mxu0 0.0
      %363 = vmatpush1.msra.mxu0 0.0
      %364 = vmatprep.subr.mxu0 0.0
      %365 = vmatpush1.msra.mxu0 0.0
      %366 = vmatprep.subr.mxu0 0.0
      %367 = vmatpush1.msra.mxu0 0.0
      %368 = vmatprep.subr.mxu0 0.0
      %369 = vmatpush1.msra.mxu0 0.0
      %370 = vmatprep.subr.mxu0 0.0
      %371 = vmatpush1.msra.mxu0 0.0
      %372 = vmatprep.subr.mxu0 0.0
      %373 = vmatpush1.msra.mxu0 0.0
      %374 = vmatprep.subr.mxu0 0.0
      %375 = vmatpush1.msra.mxu0 0.0
      %376 = vmatprep.subr.mxu0 0.0
      %377 = vmatpush1.msra.mxu0 0.0
      %378 = vmatprep.subr.mxu0 0.0
      %379 = vmatpush1.msra.mxu0 0.0
      %380 = vmatprep.subr.mxu0 0.0
      %381 = vmatpush1.msra.mxu0 0.0
      %382 = vmatprep.subr.mxu0 0.0
      %383 = vmatpush1.msra.mxu0 0.0
      %384 = vmatprep.subr.mxu0 0.0
      %385 = vmatpush1.msra.mxu0 0.0
      %386 = vmatprep.subr.mxu0 0.0
      %387 = vmatpush1.msra.mxu0 0.0
      %388 = vmatprep.subr.mxu0 0.0
      %389 = vmatpush1.msra.mxu0 0.0
      %390 = vmatprep.subr.mxu0 0.0
      %391 = vmatpush1.msra.mxu0 0.0
      %392 = vmatprep.subr.mxu0 0.0
      %393 = vmatpush1.msra.mxu0 0.0
      %394 = vmatprep.subr.mxu0 0.0
      %395 = vmatpush1.msra.mxu0 0.0
      %396 = vmatprep.subr.mxu0 0.0
      %397 = vmatpush1.msra.mxu0 0.0
      %398 = vmatprep.mubr.f32.mxu0 0.0
      %399 = vmatmul.mubr.f32.gmra.mrb[0].mxu0 %v328
      %v400 = vpop.f32.mrb[0].mxu0
      %v401 = vadd.f32 0.0, %v400
      %v402 = vpop.f32.mrb[0].mxu0
      %403 = vdwg.mxu0
      %404 = vst [vmem:[%s299] sm:$0xf] %v401
      %p405 = scmp.lt.s32.totalorder %s31, 1
      %s406 = scalar_select %p405, %s31, 1
      %p407 = scmp.lt.s32.totalorder %s32, 3
      %s408 = scalar_select %p407, %s32, 3
      %s409 = smul.addr %s406, 4
      %s410 = sadd.s32 %s408, %s409
      %s411 = smul.addr %s410, 4
      %s412 = scalar_lea.vmem %s6, %s411
      // Predicated region
      $region37: #{hrnet_v3_forward.23} parent=35 // pred_check
        %p413 = pneg %p166
      $region38: #{hrnet_v3_forward.23} parent=35 // pred_check_branch
        %415 = sbr.rel (%p413) target = $region40
      $region39: #{hrnet_v3_forward.23} parent=35 // pred_region
        _
      $region40: #{hrnet_v3_forward.23} parent=35 // pred_fallthru
        _
    $region36: #{hrnet_v3_forward.23} parent=5 // pred_fallthru
      _
    %p416 = scmp.le.s32.totalorder 2, %s22
    // Predicated region
    $region41: #{hrnet_v3_forward.23} parent=5 // pred_check
      %p417 = pneg %p416
    $region42: #{hrnet_v3_forward.23} parent=5 // pred_check_branch
      %419 = sbr.rel (%p417) target = $region44
    $region43: #{hrnet_v3_forward.23} parent=5 // pred_region
      %s420 = ssub.s32 %s22, 2
      // Predicated region
      $region45: #{hrnet_v3_forward.23} parent=43 // pred_check
        %p421 = pneg %p172
      $region46: #{hrnet_v3_forward.23} parent=43 // pred_check_branch
        %423 = sbr.rel (%p421) target = $region48
      $region47: #{hrnet_v3_forward.23} parent=43 // pred_region
        %p424 = scmp.lt.s32.totalorder %s33, 1
        %s425 = scalar_select %p424, %s33, 1
        %p426 = scmp.lt.s32.totalorder %s34, 3
        %s427 = scalar_select %p426, %s34, 3
        %s428 = smul.addr %s425, 4
        %s429 = sadd.s32 %s427, %s428
        %s430 = smul.addr %s429, 4
        %s431 = scalar_lea.vmem %s6, %s430
      $region48: #{hrnet_v3_forward.23} parent=43 // pred_fallthru
        _
    $region44: #{hrnet_v3_forward.23} parent=5 // pred_fallthru
      _
  $region6: #{hrnet_v3_forward.23} parent=0 // loop_footer
    %s26 = sadd.s32 1, %s22
  $region7: #{hrnet_v3_forward.23} parent=0 // loop_footer_branch
    %21 = sbr.rel target = $region3
  $region8: #{hrnet_v3_forward.23} parent=0 // loop_exit
    _

// kernel: hrnet_v3_forward.22
$region0: #{hrnet_v3_forward.22}
  #allocation0 [shape = 'u32[]', space=smem, size = 0x4, offset = 0x4, fixed_abs, tag = 'smem constant byte address 0x4 - core index']
  #allocation1 [shape = 'u32[144,128]{1,0:T(1,128)}', space=vmem, size = 0x12000, scoped, tag = 'internal scratch']
  #allocation2 [shape = 'f32[8,128]{1,0:T(8,128)}', space=vmem, size = 0x1000, scoped, tag = 'scratch operand']
  %s0 = inlined_call_operand.vmem [shape: bf16[8,1536], index: 0, kind: input, shape index: {}]
  %s1 = inlined_call_operand.vmem [shape: bf16[1536,128], index: 1, kind: input, shape index: {}]
  %s2 = inlined_call_operand.vmem [shape: f32[1,128], index: 2, kind: input, shape index: {}]
  %s3 = inlined_call_operand.vmem [shape: f32[8,128], index: 3, kind: input, shape index: {}]
  %s4 = inlined_call_operand.vmem [shape: f32[8,128], index: 4, kind: output, shape index: {}]
  %s5 = sld [smem:[#allocation0]]
  $region57: #{hrnet_v3_forward.22} parent=0
    _
  %s7 = ssub.s32 1, %s5
  %s8 = scalar_select 0, %s7, %s5
  loop: start=0, step=1, limit=5
  $region2: #{hrnet_v3_forward.22} parent=0 // loop_pre_header
    _
  $region3: #{hrnet_v3_forward.22} parent=0 // loop_header
    %s10 = sphi 0, %s14
    %p11 = scmp.ge.s32.totalorder %s10, 5
    %s17 = sphi 0, %s36
    %s18 = sphi 0, %s32
    %s19 = sphi 0, %s28
    %s20 = sphi 0, %s17
    %s21 = sphi 0, %s18
    %s22 = sphi 0, %s19
    %s23 = sphi 0, %s20
    %s24 = sphi 0, %s21
    %s25 = sphi 0, %s22
    %s41 = sphi 0, %s43
    %s44 = sphi 0, %s41
    %s45 = sphi 0, %s44
    %s61 = sphi 0, %s45
    %s69 = sphi 0, %s71
    %s72 = sphi 0, %s69
    %s73 = sphi 0, %s72
    %s89 = sphi 0, %s73
    %s95 = sphi 0, %s97
    %s98 = sphi 0, %s95
    %s99 = sphi 0, %s98
    %s115 = sphi 0, %s99
    %s123 = sphi 0, %s125
    %s126 = sphi 0, %s123
    %s127 = sphi 0, %s126
    %s143 = sphi 0, %s127
    %s151 = sphi 0, %s153
    %s154 = sphi 0, %s151
    %s155 = sphi 0, %s154
    %s171 = sphi 0, %s155
  $region4: #{hrnet_v3_forward.22} parent=0 // loop_header_branch
    %13 = sbr.rel (%p11) target = $region8
  $region5: #{hrnet_v3_forward.22} parent=0 // loop_body
    %s15 = ssub.s32 %s10, 1
    %s16 = ssub.s32 %s10, 2
    %s26 = sadd.s32 1, %s19
    %p27 = scmp.ge.s32.totalorder %s26, 3
    %s28 = scalar_select %p27, 0, %s26
    %s29 = sadd.s32 1, %s18
    %s30 = scalar_select %p27, %s29, %s18
    %p31 = scmp.ge.s32.totalorder %s30, 1
    %s32 = scalar_select %p31, 0, %s30
    %s33 = sadd.s32 1, %s17
    %s34 = scalar_select %p31, %s33, %s17
    %p35 = scmp.ge.s32.totalorder %s34, 1
    %s36 = scalar_select %p35, 0, %s34
    %s37 = ssub.s32 %s17, %s36
    %s38 = ssub.s32 %s19, %s28
    %s39 = sor.u32 %s37, %s38
    %p40 = scmp.eq.s32.totalorder %s39, 0
    %s42 = sadd.s32 %s41, 1
    %s43 = scalar_select %p40, %s41, %s42
    %p46 = pneg %p40
    %p47 = scmp.eq.s32.totalorder %s10, 2
    %p48 = por %p46, %p47
    %p49 = scmp.ne.s32.totalorder %s41, %s44
    %p50 = scmp.eq.s32.totalorder %s10, 0
    %p51 = por %p49, %p50
    %p52 = scmp.ne.s32.totalorder %s41, %s44
    %p53 = scmp.eq.s32.totalorder %s15, 2
    %p54 = por %p52, %p53
    %p55 = scmp.ne.s32.totalorder %s44, %s45
    %p56 = scmp.eq.s32.totalorder %s15, 0
    %p57 = por %p55, %p56
    %p58 = scmp.ne.s32.totalorder %s44, %s45
    %p59 = scmp.eq.s32.totalorder %s16, 2
    %p60 = por %p58, %p59
    %p62 = scmp.ne.s32.totalorder %s45, %s61
    %p63 = scmp.eq.s32.totalorder %s16, 0
    %p64 = por %p62, %p63
    %s65 = ssub.s32 %s19, %s28
    %s66 = ssub.s32 %s18, %s32
    %s67 = sor.u32 %s65, %s66
    %p68 = scmp.eq.s32.totalorder %s67, 0
    %s70 = sadd.s32 %s69, 1
    %s71 = scalar_select %p68, %s69, %s70
    %p74 = pneg %p68
    %p75 = scmp.eq.s32.totalorder %s10, 2
    %p76 = por %p74, %p75
    %p77 = scmp.ne.s32.totalorder %s69, %s72
    %p78 = scmp.eq.s32.totalorder %s10, 0
    %p79 = por %p77, %p78
    %p80 = scmp.ne.s32.totalorder %s69, %s72
    %p81 = scmp.eq.s32.totalorder %s15, 2
    %p82 = por %p80, %p81
    %p83 = scmp.ne.s32.totalorder %s72, %s73
    %p84 = scmp.eq.s32.totalorder %s15, 0
    %p85 = por %p83, %p84
    %p86 = scmp.ne.s32.totalorder %s72, %s73
    %p87 = scmp.eq.s32.totalorder %s16, 2
    %p88 = por %p86, %p87
    %p90 = scmp.ne.s32.totalorder %s73, %s89
    %p91 = scmp.eq.s32.totalorder %s16, 0
    %p92 = por %p90, %p91
    %s93 = ssub.s32 %s18, %s32
    %p94 = scmp.eq.s32.totalorder %s93, 0
    %s96 = sadd.s32 %s95, 1
    %s97 = scalar_select %p94, %s95, %s96
    %p100 = pneg %p94
    %p101 = scmp.eq.s32.totalorder %s10, 2
    %p102 = por %p100, %p101
    %p103 = scmp.ne.s32.totalorder %s95, %s98
    %p104 = scmp.eq.s32.totalorder %s10, 0
    %p105 = por %p103, %p104
    %p106 = scmp.ne.s32.totalorder %s95, %s98
    %p107 = scmp.eq.s32.totalorder %s15, 2
    %p108 = por %p106, %p107
    %p109 = scmp.ne.s32.totalorder %s98, %s99
    %p110 = scmp.eq.s32.totalorder %s15, 0
    %p111 = por %p109, %p110
    %p112 = scmp.ne.s32.totalorder %s98, %s99
    %p113 = scmp.eq.s32.totalorder %s16, 2
    %p114 = por %p112, %p113
    %p116 = scmp.ne.s32.totalorder %s99, %s115
    %p117 = scmp.eq.s32.totalorder %s16, 0
    %p118 = por %p116, %p117
    %s119 = ssub.s32 %s17, %s36
    %s120 = ssub.s32 %s18, %s32
    %s121 = sor.u32 %s119, %s120
    %p122 = scmp.eq.s32.totalorder %s121, 0
    %s124 = sadd.s32 %s123, 1
    %s125 = scalar_select %p122, %s123, %s124
    %p128 = pneg %p122
    %p129 = scmp.eq.s32.totalorder %s10, 2
    %p130 = por %p128, %p129
    %p131 = scmp.ne.s32.totalorder %s123, %s126
    %p132 = scmp.eq.s32.totalorder %s10, 0
    %p133 = por %p131, %p132
    %p134 = scmp.ne.s32.totalorder %s123, %s126
    %p135 = scmp.eq.s32.totalorder %s15, 2
    %p136 = por %p134, %p135
    %p137 = scmp.ne.s32.totalorder %s126, %s127
    %p138 = scmp.eq.s32.totalorder %s15, 0
    %p139 = por %p137, %p138
    %p140 = scmp.ne.s32.totalorder %s126, %s127
    %p141 = scmp.eq.s32.totalorder %s16, 2
    %p142 = por %p140, %p141
    %p144 = scmp.ne.s32.totalorder %s127, %s143
    %p145 = scmp.eq.s32.totalorder %s16, 0
    %p146 = por %p144, %p145
    %s147 = ssub.s32 %s17, %s36
    %s148 = ssub.s32 %s18, %s32
    %s149 = sor.u32 %s147, %s148
    %p150 = scmp.eq.s32.totalorder %s149, 0
    %s152 = sadd.s32 %s151, 1
    %s153 = scalar_select %p150, %s151, %s152
    %p156 = pneg %p150
    %p157 = scmp.eq.s32.totalorder %s10, 2
    %p158 = por %p156, %p157
    %p159 = scmp.ne.s32.totalorder %s151, %s154
    %p160 = scmp.eq.s32.totalorder %s10, 0
    %p161 = por %p159, %p160
    %p162 = scmp.ne.s32.totalorder %s151, %s154
    %p163 = scmp.eq.s32.totalorder %s15, 2
    %p164 = por %p162, %p163
    %p165 = scmp.ne.s32.totalorder %s154, %s155
    %p166 = scmp.eq.s32.totalorder %s15, 0
    %p167 = por %p165, %p166
    %p168 = scmp.ne.s32.totalorder %s154, %s155
    %p169 = scmp.eq.s32.totalorder %s16, 2
    %p170 = por %p168, %p169
    %p172 = scmp.ne.s32.totalorder %s155, %s171
    %p173 = scmp.eq.s32.totalorder %s16, 0
    %p174 = por %p172, %p173
    %p175 = scmp.le.s32.totalorder 1, %s10
    %p176 = scmp.lt.s32.totalorder %s10, 4
    %p177 = pnand %p175, %p176
    %p178 = pneg %p177
    // Predicated region
    $region9: #{hrnet_v3_forward.22} parent=5 // pred_check
      _
    $region10: #{hrnet_v3_forward.22} parent=5 // pred_check_branch
      %180 = sbr.rel (%p177) target = $region12
    $region11: #{hrnet_v3_forward.22} parent=5 // pred_region
      %s181 = ssub.s32 %s10, 1
      // Predicated region
      $region13: #{hrnet_v3_forward.22} parent=11 // pred_check
        %p182 = pneg %p111
      $region14: #{hrnet_v3_forward.22} parent=11 // pred_check_branch
        %184 = sbr.rel (%p182) target = $region16
      $region15: #{hrnet_v3_forward.22} parent=11 // pred_region
        %p185 = scmp.lt.s32.totalorder %s21, 0
        %s186 = scalar_select %p185, %s21, 0
        %s187 = scalar_lea.vmem %s2, %s186
      $region16: #{hrnet_v3_forward.22} parent=11 // pred_fallthru
        _
      // Predicated region
      $region17: #{hrnet_v3_forward.22} parent=11 // pred_check
        %p188 = pneg %p139
      $region18: #{hrnet_v3_forward.22} parent=11 // pred_check_branch
        %190 = sbr.rel (%p188) target = $region20
      $region19: #{hrnet_v3_forward.22} parent=11 // pred_region
        %p191 = scmp.lt.s32.totalorder %s20, 0
        %s192 = scalar_select %p191, %s20, 0
        %p193 = scmp.lt.s32.totalorder %s21, 0
        %s194 = scalar_select %p193, %s21, 0
        %s195 = sadd.s32 %s194, %s192
        %s196 = smul.addr %s195, 8
        %s197 = scalar_lea.vmem %s3, %s196
      $region20: #{hrnet_v3_forward.22} parent=11 // pred_fallthru
        _
    $region12: #{hrnet_v3_forward.22} parent=5 // pred_fallthru
      _
    %p198 = scmp.lt.s32.totalorder %s10, 3
    // Predicated region
    $region21: #{hrnet_v3_forward.22} parent=5 // pred_check
      %p199 = pneg %p198
    $region22: #{hrnet_v3_forward.22} parent=5 // pred_check_branch
      %201 = sbr.rel (%p199) target = $region24
    $region23: #{hrnet_v3_forward.22} parent=5 // pred_region
      // Predicated region
      $region25: #{hrnet_v3_forward.22} parent=23 // pred_check
        %p202 = pneg %p51
      $region26: #{hrnet_v3_forward.22} parent=23 // pred_check_branch
        %204 = sbr.rel (%p202) target = $region28
      $region27: #{hrnet_v3_forward.22} parent=23 // pred_region
        %s205 = smul.u32 4, %s19
        %p206 = scmp.lt.s32.totalorder %s17, 0
        %s207 = scalar_select %p206, %s17, 0
        %p208 = scmp.lt.s32.totalorder %s205, 11
        %s209 = scalar_select %p208, %s205, 11
        %s210 = smul.addr %s207, 12
        %s211 = sadd.s32 %s209, %s210
        %s212 = smul.addr %s211, 4
        %s213 = scalar_lea.vmem %s0, %s212
        %s214 = smul.u32 4, %s19
      $region28: #{hrnet_v3_forward.22} parent=23 // pred_fallthru
        _
      // Predicated region
      $region29: #{hrnet_v3_forward.22} parent=23 // pred_check
        %p215 = pneg %p79
      $region30: #{hrnet_v3_forward.22} parent=23 // pred_check_branch
        %217 = sbr.rel (%p215) target = $region32
      $region31: #{hrnet_v3_forward.22} parent=23 // pred_region
        %s218 = smul.u32 64, %s19
        %p219 = scmp.lt.s32.totalorder %s218, 191
        %s220 = scalar_select %p219, %s218, 191
        %p221 = scmp.lt.s32.totalorder %s18, 0
        %s222 = scalar_select %p221, %s18, 0
        %s223 = sadd.s32 %s222, %s220
        %s224 = smul.addr %s223, 4
        %s225 = scalar_lea.vmem %s1, %s224
        %s226 = smul.u32 64, %s19
      $region32: #{hrnet_v3_forward.22} parent=23 // pred_fallthru
        _
    $region24: #{hrnet_v3_forward.22} parent=5 // pred_fallthru
      _
    %p227 = scmp.le.s32.totalorder 1, %s10
    %p228 = scmp.lt.s32.totalorder %s10, 4
    %p229 = pnand %p227, %p228
    %p230 = pneg %p229
    // Predicated region
    $region33: #{hrnet_v3_forward.22} parent=5 // pred_check
      _
    $region34: #{hrnet_v3_forward.22} parent=5 // pred_check_branch
      %232 = sbr.rel (%p229) target = $region36
    $region35: #{hrnet_v3_forward.22} parent=5 // pred_region
      %s233 = ssub.s32 %s10, 1
      %s234 = smul.u32 4, %s22
      %p235 = scmp.lt.s32.totalorder %s20, 0
      %s236 = scalar_select %p235, %s20, 0
      %p237 = scmp.lt.s32.totalorder %s234, 11
      %s238 = scalar_select %p237, %s234, 11
      %s239 = smul.addr %s236, 12
      %s240 = sadd.s32 %s238, %s239
      %s241 = smul.addr %s240, 4
      %s242 = scalar_lea.vmem %s0, %s241
      %p243 = pneg %p57
      %p244 = pneg %p54
      %s245 = smul.u32 64, %s22
      %p246 = scmp.lt.s32.totalorder %s245, 191
      %s247 = scalar_select %p246, %s245, 191
      %p248 = scmp.lt.s32.totalorder %s21, 0
      %s249 = scalar_select %p248, %s21, 0
      %s250 = sadd.s32 %s249, %s247
      %s251 = smul.addr %s250, 4
      %s252 = scalar_lea.vmem %s1, %s251
      %p253 = pneg %p85
      %p254 = pneg %p82
      %p255 = scmp.lt.s32.totalorder %s21, 0
      %s256 = scalar_select %p255, %s21, 0
      %s257 = scalar_lea.vmem %s2, %s256
      %p258 = pneg %p111
      %p259 = pneg %p108
      %p260 = scmp.lt.s32.totalorder %s20, 0
      %s261 = scalar_select %p260, %s20, 0
      %p262 = scmp.lt.s32.totalorder %s21, 0
      %s263 = scalar_select %p262, %s21, 0
      %s264 = sadd.s32 %s263, %s261
      %s265 = smul.addr %s264, 8
      %s266 = scalar_lea.vmem %s3, %s265
      %p267 = pneg %p139
      %p268 = pneg %p136
      %p269 = pneg %p167
      %p270 = pneg %p164
      %p271 = scmp.lt.s32.totalorder %s20, 0
      %s272 = scalar_select %p271, %s20, 0
      %p273 = scmp.lt.s32.totalorder %s21, 0
      %s274 = scalar_select %p273, %s21, 0
      %s275 = sadd.s32 %s274, %s272
      %s276 = smul.addr %s275, 8
      %s277 = scalar_lea.vmem %s4, %s276
      %s278 = smul.u32 4, %s22
      %p279 = scmp.lt.s32.totalorder %s20, 0
      %s280 = scalar_select %p279, %s20, 0
      %p281 = scmp.lt.s32.totalorder %s278, 11
      %s282 = scalar_select %p281, %s278, 11
      %s283 = smul.addr %s280, 12
      %s284 = sadd.s32 %s282, %s283
      %s285 = smul.addr %s284, 4
      %s286 = scalar_lea.vmem %s0, %s285
      %s287 = smul.u32 4, %s22
      %s288 = smul.u32 64, %s22
      %p289 = scmp.lt.s32.totalorder %s288, 191
      %s290 = scalar_select %p289, %s288, 191
      %p291 = scmp.lt.s32.totalorder %s21, 0
      %s292 = scalar_select %p291, %s21, 0
      %s293 = sadd.s32 %s292, %s290
      %s294 = smul.addr %s293, 4
      %s295 = scalar_lea.vmem %s1, %s294
      %s296 = smul.u32 64, %s22
      %p297 = scmp.lt.s32.totalorder %s21, 0
      %s298 = scalar_select %p297, %s21, 0
      %s299 = scalar_lea.vmem %s2, %s298
      %p300 = scmp.lt.s32.totalorder %s20, 0
      %s301 = scalar_select %p300, %s20, 0
      %p302 = scmp.lt.s32.totalorder %s21, 0
      %s303 = scalar_select %p302, %s21, 0
      %s304 = sadd.s32 %s303, %s301
      %s305 = smul.addr %s304, 8
      %s306 = scalar_lea.vmem %s3, %s305
      %p307 = scmp.lt.s32.totalorder %s20, 0
      %s308 = scalar_select %p307, %s20, 0
      %p309 = scmp.lt.s32.totalorder %s21, 0
      %s310 = scalar_select %p309, %s21, 0
      %s311 = sadd.s32 %s310, %s308
      %s312 = smul.addr %s311, 8
      %s313 = scalar_lea.vmem %s4, %s312
      %p315 = scmp.eq.s32.totalorder %s22, 0
      // Predicated region
      $region37: #{hrnet_v3_forward.22} parent=35 // pred_check
        %p316 = pneg %p315
      $region38: #{hrnet_v3_forward.22} parent=35 // pred_check_branch
        %318 = sbr.rel (%p316) target = $region40
      $region39: #{hrnet_v3_forward.22} parent=35 // pred_region
        %319 = vst [vmem:[#allocation2] sm:$0xff] 0.0
      $region40: #{hrnet_v3_forward.22} parent=35 // pred_fallthru
        _
      %v320 = vld [vmem:[#allocation2] sm:$0xff]
      %v321 = vld [vmem:[%s286] sm:$0xff]
      %v322 = vld [vmem:[%s286 + $0x8] sm:$0xff]
      %v323 = vld [vmem:[%s295] sm:$0xf]
      %v324 = vld [vmem:[%s295 + $0x4] sm:$0xf]
      %v325 = vld [vmem:[%s295 + $0x8] sm:$0xf]
      %v326 = vld [vmem:[%s295 + $0xc] sm:$0xf]
      %v327 = vld [vmem:[%s295 + $0x10] sm:$0xf]
      %v328 = vld [vmem:[%s295 + $0x14] sm:$0xf]
      %v329 = vld [vmem:[%s295 + $0x18] sm:$0xf]
      %v330 = vld [vmem:[%s295 + $0x1c] sm:$0xf]
      %v331 = vld [vmem:[%s295 + $0x20] sm:$0xf]
      %v332 = vld [vmem:[%s295 + $0x24] sm:$0xf]
      %v333 = vld [vmem:[%s295 + $0x28] sm:$0xf]
      %v334 = vld [vmem:[%s295 + $0x2c] sm:$0xf]
      %v335 = vld [vmem:[%s295 + $0x30] sm:$0xf]
      %v336 = vld [vmem:[%s295 + $0x34] sm:$0xf]
      %v337 = vld [vmem:[%s295 + $0x38] sm:$0xf]
      %v338 = vld [vmem:[%s295 + $0x3c] sm:$0xf]
      %v339 = vld [vmem:[%s295 + $0x40] sm:$0xf]
      %v340 = vld [vmem:[%s295 + $0x44] sm:$0xf]
      %v341 = vld [vmem:[%s295 + $0x48] sm:$0xf]
      %v342 = vld [vmem:[%s295 + $0x4c] sm:$0xf]
      %v343 = vld [vmem:[%s295 + $0x50] sm:$0xf]
      %v344 = vld [vmem:[%s295 + $0x54] sm:$0xf]
      %v345 = vld [vmem:[%s295 + $0x58] sm:$0xf]
      %v346 = vld [vmem:[%s295 + $0x5c] sm:$0xf]
      %v347 = vld [vmem:[%s295 + $0x60] sm:$0xf]
      %v348 = vld [vmem:[%s295 + $0x64] sm:$0xf]
      %v349 = vld [vmem:[%s295 + $0x68] sm:$0xf]
      %v350 = vld [vmem:[%s295 + $0x6c] sm:$0xf]
      %v351 = vld [vmem:[%s295 + $0x70] sm:$0xf]
      %v352 = vld [vmem:[%s295 + $0x74] sm:$0xf]
      %v353 = vld [vmem:[%s295 + $0x78] sm:$0xf]
      %v354 = vld [vmem:[%s295 + $0x7c] sm:$0xf]
      %v355 = vld [vmem:[%s295 + $0x80] sm:$0xf]
      %v356 = vld [vmem:[%s295 + $0x84] sm:$0xf]
      %v357 = vld [vmem:[%s295 + $0x88] sm:$0xf]
      %v358 = vld [vmem:[%s295 + $0x8c] sm:$0xf]
      %v359 = vld [vmem:[%s295 + $0x90] sm:$0xf]
      %v360 = vld [vmem:[%s295 + $0x94] sm:$0xf]
      %v361 = vld [vmem:[%s295 + $0x98] sm:$0xf]
      %v362 = vld [vmem:[%s295 + $0x9c] sm:$0xf]
      %v363 = vld [vmem:[%s295 + $0xa0] sm:$0xf]
      %v364 = vld [vmem:[%s295 + $0xa4] sm:$0xf]
      %v365 = vld [vmem:[%s295 + $0xa8] sm:$0xf]
      %v366 = vld [vmem:[%s295 + $0xac] sm:$0xf]
      %v367 = vld [vmem:[%s295 + $0xb0] sm:$0xf]
      %v368 = vld [vmem:[%s295 + $0xb4] sm:$0xf]
      %v369 = vld [vmem:[%s295 + $0xb8] sm:$0xf]
      %v370 = vld [vmem:[%s295 + $0xbc] sm:$0xf]
      %v371 = vld [vmem:[%s295 + $0xc0] sm:$0xf]
      %v372 = vld [vmem:[%s295 + $0xc4] sm:$0xf]
      %v373 = vld [vmem:[%s295 + $0xc8] sm:$0xf]
      %v374 = vld [vmem:[%s295 + $0xcc] sm:$0xf]
      %v375 = vld [vmem:[%s295 + $0xd0] sm:$0xf]
      %v376 = vld [vmem:[%s295 + $0xd4] sm:$0xf]
      %v377 = vld [vmem:[%s295 + $0xd8] sm:$0xf]
      %v378 = vld [vmem:[%s295 + $0xdc] sm:$0xf]
      %v379 = vld [vmem:[%s295 + $0xe0] sm:$0xf]
      %v380 = vld [vmem:[%s295 + $0xe4] sm:$0xf]
      %v381 = vld [vmem:[%s295 + $0xe8] sm:$0xf]
      %v382 = vld [vmem:[%s295 + $0xec] sm:$0xf]
      %v383 = vld [vmem:[%s295 + $0xf0] sm:$0xf]
      %v384 = vld [vmem:[%s295 + $0xf4] sm:$0xf]
      %v385 = vld [vmem:[%s295 + $0xf8] sm:$0xf]
      %v386 = vld [vmem:[%s295 + $0xfc] sm:$0xf]
      %v389 = vunpack.c.l.b16 %v321
      %v390 = vunpack.c.h.b16 %v321
      %v391 = vunpack.c.l.b16 %v322
      %v392 = vunpack.c.h.b16 %v322
      %v393 = vpack.c.b16 %v389, %v389
      %v394 = vpack.c.b16 %v390, %v390
      %v395 = vpack.c.b16 %v391, %v391
      %v396 = vpack.c.b16 %v392, %v392
      %v465 = vunpack.c.l.b16 %v323
      %v466 = vunpack.c.l.b16 %v324
      %v467 = vunpack.c.l.b16 %v325
      %v468 = vunpack.c.l.b16 %v326
      %v469 = vunpack.c.l.b16 %v327
      %v470 = vunpack.c.l.b16 %v328
      %v471 = vunpack.c.l.b16 %v329
      %v472 = vunpack.c.l.b16 %v330
      %v473 = vunpack.c.l.b16 %v331
      %v474 = vunpack.c.l.b16 %v332
      %v475 = vunpack.c.l.b16 %v333
      %v476 = vunpack.c.l.b16 %v334
      %v477 = vunpack.c.l.b16 %v335
      %v478 = vunpack.c.l.b16 %v336
      %v479 = vunpack.c.l.b16 %v337
      %v480 = vunpack.c.l.b16 %v338
      %v481 = vunpack.c.l.b16 %v339
      %v482 = vunpack.c.l.b16 %v340
      %v483 = vunpack.c.l.b16 %v341
      %v484 = vunpack.c.l.b16 %v342
      %v485 = vunpack.c.l.b16 %v343
      %v486 = vunpack.c.l.b16 %v344
      %v487 = vunpack.c.l.b16 %v345
      %v488 = vunpack.c.l.b16 %v346
      %v489 = vunpack.c.l.b16 %v347
      %v490 = vunpack.c.l.b16 %v348
      %v491 = vunpack.c.l.b16 %v349
      %v492 = vunpack.c.l.b16 %v350
      %v493 = vunpack.c.l.b16 %v351
      %v494 = vunpack.c.l.b16 %v352
      %v495 = vunpack.c.l.b16 %v353
      %v496 = vunpack.c.l.b16 %v354
      %v497 = vunpack.c.l.b16 %v355
      %v498 = vunpack.c.l.b16 %v356
      %v499 = vunpack.c.l.b16 %v357
      %v500 = vunpack.c.l.b16 %v358
      %v501 = vunpack.c.l.b16 %v359
      %v502 = vunpack.c.l.b16 %v360
      %v503 = vunpack.c.l.b16 %v361
      %v504 = vunpack.c.l.b16 %v362
      %v505 = vunpack.c.l.b16 %v363
      %v506 = vunpack.c.l.b16 %v364
      %v507 = vunpack.c.l.b16 %v365
      %v508 = vunpack.c.l.b16 %v366
      %v509 = vunpack.c.l.b16 %v367
      %v510 = vunpack.c.l.b16 %v368
      %v511 = vunpack.c.l.b16 %v369
      %v512 = vunpack.c.l.b16 %v370
      %v513 = vunpack.c.l.b16 %v371
      %v514 = vunpack.c.l.b16 %v372
      %v515 = vunpack.c.l.b16 %v373
      %v516 = vunpack.c.l.b16 %v374
      %v517 = vunpack.c.l.b16 %v375
      %v518 = vunpack.c.l.b16 %v376
      %v519 = vunpack.c.l.b16 %v377
      %v520 = vunpack.c.l.b16 %v378
      %v521 = vunpack.c.l.b16 %v379
      %v522 = vunpack.c.l.b16 %v380
      %v523 = vunpack.c.l.b16 %v381
      %v524 = vunpack.c.l.b16 %v382
      %v525 = vunpack.c.l.b16 %v383
      %v526 = vunpack.c.l.b16 %v384
      %v527 = vunpack.c.l.b16 %v385
      %v528 = vunpack.c.l.b16 %v386
      %v529 = vpack.c.b16 %v466, %v465
      %v530 = vpack.c.b16 %v468, %v467
      %v531 = vpack.c.b16 %v470, %v469
      %v532 = vpack.c.b16 %v472, %v471
      %v533 = vpack.c.b16 %v474, %v473
      %v534 = vpack.c.b16 %v476, %v475
      %v535 = vpack.c.b16 %v478, %v477
      %v536 = vpack.c.b16 %v480, %v479
      %v537 = vpack.c.b16 %v482, %v481
      %v538 = vpack.c.b16 %v484, %v483
      %v539 = vpack.c.b16 %v486, %v485
      %v540 = vpack.c.b16 %v488, %v487
      %v541 = vpack.c.b16 %v490, %v489
      %v542 = vpack.c.b16 %v492, %v491
      %v543 = vpack.c.b16 %v494, %v493
      %v544 = vpack.c.b16 %v496, %v495
      %v545 = vpack.c.b16 %v498, %v497
      %v546 = vpack.c.b16 %v500, %v499
      %v547 = vpack.c.b16 %v502, %v501
      %v548 = vpack.c.b16 %v504, %v503
      %v549 = vpack.c.b16 %v506, %v505
      %v550 = vpack.c.b16 %v508, %v507
      %v551 = vpack.c.b16 %v510, %v509
      %v552 = vpack.c.b16 %v512, %v511
      %v553 = vpack.c.b16 %v514, %v513
      %v554 = vpack.c.b16 %v516, %v515
      %v555 = vpack.c.b16 %v518, %v517
      %v556 = vpack.c.b16 %v520, %v519
      %v557 = vpack.c.b16 %v522, %v521
      %v558 = vpack.c.b16 %v524, %v523
      %v559 = vpack.c.b16 %v526, %v525
      %v560 = vpack.c.b16 %v528, %v527
      %593 = vmatprep.subr.bf16.mxu0 0
      %594 = vmatpush1.bf16.msra.mxu0 %v529
      %595 = vmatprep.subr.bf16.mxu0 0
      %596 = vmatpush1.bf16.msra.mxu0 %v530
      %597 = vmatprep.subr.bf16.mxu0 0
      %598 = vmatpush1.bf16.msra.mxu0 %v531
      %599 = vmatprep.subr.bf16.mxu0 0
      %600 = vmatpush1.bf16.msra.mxu0 %v532
      %601 = vmatprep.subr.bf16.mxu0 0
      %602 = vmatpush1.bf16.msra.mxu0 %v533
      %603 = vmatprep.subr.bf16.mxu0 0
      %604 = vmatpush1.bf16.msra.mxu0 %v534
      %605 = vmatprep.subr.bf16.mxu0 0
      %606 = vmatpush1.bf16.msra.mxu0 %v535
      %607 = vmatprep.subr.bf16.mxu0 0
      %608 = vmatpush1.bf16.msra.mxu0 %v536
      %609 = vmatprep.subr.bf16.mxu0 0
      %610 = vmatpush1.bf16.msra.mxu0 %v537
      %611 = vmatprep.subr.bf16.mxu0 0
      %612 = vmatpush1.bf16.msra.mxu0 %v538
      %613 = vmatprep.subr.bf16.mxu0 0
      %614 = vmatpush1.bf16.msra.mxu0 %v539
      %615 = vmatprep.subr.bf16.mxu0 0
      %616 = vmatpush1.bf16.msra.mxu0 %v540
      %617 = vmatprep.subr.bf16.mxu0 0
      %618 = vmatpush1.bf16.msra.mxu0 %v541
      %619 = vmatprep.subr.bf16.mxu0 0
      %620 = vmatpush1.bf16.msra.mxu0 %v542
      %621 = vmatprep.subr.bf16.mxu0 0
      %622 = vmatpush1.bf16.msra.mxu0 %v543
      %623 = vmatprep.subr.bf16.mxu0 0
      %624 = vmatpush1.bf16.msra.mxu0 %v544
      %625 = vmatprep.mubr.bf16.mxu0 %v394
      %626 = vmatmul.mubr.bf16.gmra.mrb[0].mxu0 %v393
      %v627 = vpop.f32.mrb[0].mxu0
      %v628 = vadd.f32 0.0, %v627
      %v629 = vpop.f32.mrb[0].mxu0
      %v630 = vpop.f32.mrb[0].mxu0
      %v631 = vpop.f32.mrb[0].mxu0
      %632 = vdwg.mxu0
      %633 = vmatprep.subr.bf16.mxu0 0
      %634 = vmatpush1.bf16.msra.mxu0 %v545
      %635 = vmatprep.subr.bf16.mxu0 0
      %636 = vmatpush1.bf16.msra.mxu0 %v546
      %637 = vmatprep.subr.bf16.mxu0 0
      %638 = vmatpush1.bf16.msra.mxu0 %v547
      %639 = vmatprep.subr.bf16.mxu0 0
      %640 = vmatpush1.bf16.msra.mxu0 %v548
      %641 = vmatprep.subr.bf16.mxu0 0
      %642 = vmatpush1.bf16.msra.mxu0 %v549
      %643 = vmatprep.subr.bf16.mxu0 0
      %644 = vmatpush1.bf16.msra.mxu0 %v550
      %645 = vmatprep.subr.bf16.mxu0 0
      %646 = vmatpush1.bf16.msra.mxu0 %v551
      %647 = vmatprep.subr.bf16.mxu0 0
      %648 = vmatpush1.bf16.msra.mxu0 %v552
      %649 = vmatprep.subr.bf16.mxu0 0
      %650 = vmatpush1.bf16.msra.mxu0 %v553
      %651 = vmatprep.subr.bf16.mxu0 0
      %652 = vmatpush1.bf16.msra.mxu0 %v554
      %653 = vmatprep.subr.bf16.mxu0 0
      %654 = vmatpush1.bf16.msra.mxu0 %v555
      %655 = vmatprep.subr.bf16.mxu0 0
      %656 = vmatpush1.bf16.msra.mxu0 %v556
      %657 = vmatprep.subr.bf16.mxu0 0
      %658 = vmatpush1.bf16.msra.mxu0 %v557
      %659 = vmatprep.subr.bf16.mxu0 0
      %660 = vmatpush1.bf16.msra.mxu0 %v558
      %661 = vmatprep.subr.bf16.mxu0 0
      %662 = vmatpush1.bf16.msra.mxu0 %v559
      %663 = vmatprep.subr.bf16.mxu0 0
      %664 = vmatpush1.bf16.msra.mxu0 %v560
      %665 = vmatprep.mubr.bf16.mxu0 %v396
      %666 = vmatmul.mubr.bf16.gmra.mrb[0].mxu0 %v395
      %v667 = vpop.f32.mrb[0].mxu0
      %v668 = vadd.f32 %v628, %v667
      %v669 = vpop.f32.mrb[0].mxu0
      %v670 = vpop.f32.mrb[0].mxu0
      %v671 = vpop.f32.mrb[0].mxu0
      %672 = vdwg.mxu0
      %v673 = vadd.f32 %v320, %v668
      %674 = vst [vmem:[#allocation2] sm:$0xff] %v673
      %p675 = scmp.eq.s32.totalorder %s22, 2
      // Predicated region
      $region41: #{hrnet_v3_forward.22} parent=35 // pred_check
        %p676 = pneg %p675
      $region42: #{hrnet_v3_forward.22} parent=35 // pred_check_branch
        %678 = sbr.rel (%p676) target = $region44
      $region43: #{hrnet_v3_forward.22} parent=35 // pred_region
        %v679 = vld [vmem:[#allocation2] sm:$0xff]
        %v680 = vld [vmem:[%s299] sm:$0x1]
        %v682 = vlaneseq
        %v683 = vshrl.u32 %v682, 7
        %v684 = vsub.s32 0, %v683
        %v685 = vrot.slane %v680, %v684
        %v687 = vadd.f32 %v679, %v685
        %v688 = vld [vmem:[%s306] sm:$0xff]
        %v689 = vadd.f32 %v687, %v688
        %v690 = vmax.f32 %v689, 0.0
        %691 = vst [vmem:[%s313] sm:$0xff] %v690
      $region44: #{hrnet_v3_forward.22} parent=35 // pred_fallthru
        _
      %p692 = scmp.lt.s32.totalorder %s20, 0
      %s693 = scalar_select %p692, %s20, 0
      %p694 = scmp.lt.s32.totalorder %s21, 0
      %s695 = scalar_select %p694, %s21, 0
      %s696 = sadd.s32 %s695, %s693
      %s697 = smul.addr %s696, 8
      %s698 = scalar_lea.vmem %s4, %s697
      // Predicated region
      $region45: #{hrnet_v3_forward.22} parent=35 // pred_check
        %p699 = pneg %p164
      $region46: #{hrnet_v3_forward.22} parent=35 // pred_check_branch
        %701 = sbr.rel (%p699) target = $region48
      $region47: #{hrnet_v3_forward.22} parent=35 // pred_region
        _
      $region48: #{hrnet_v3_forward.22} parent=35 // pred_fallthru
        _
      // Predicated region
      $region49: #{hrnet_v3_forward.22} parent=35 // pred_check
        %p702 = pneg %p164
      $region50: #{hrnet_v3_forward.22} parent=35 // pred_check_branch
        %704 = sbr.rel (%p702) target = $region52
      $region51: #{hrnet_v3_forward.22} parent=35 // pred_region
        %p705 = scmp.lt.s32.totalorder %s20, 0
        %s706 = scalar_select %p705, %s20, 0
        %p707 = scmp.lt.s32.totalorder %s21, 0
        %s708 = scalar_select %p707, %s21, 0
        %s709 = sadd.s32 %s708, %s706
        %s710 = smul.addr %s709, 8
        %s711 = scalar_lea.vmem %s4, %s710
      $region52: #{hrnet_v3_forward.22} parent=35 // pred_fallthru
        _
    $region36: #{hrnet_v3_forward.22} parent=5 // pred_fallthru
      _
    %p712 = scmp.le.s32.totalorder 2, %s10
    // Predicated region
    $region53: #{hrnet_v3_forward.22} parent=5 // pred_check
      %p713 = pneg %p712
    $region54: #{hrnet_v3_forward.22} parent=5 // pred_check_branch
      %715 = sbr.rel (%p713) target = $region56
    $region55: #{hrnet_v3_forward.22} parent=5 // pred_region
      %s716 = ssub.s32 %s10, 2
    $region56: #{hrnet_v3_forward.22} parent=5 // pred_fallthru
      _
  $region6: #{hrnet_v3_forward.22} parent=0 // loop_footer
    %s14 = sadd.s32 1, %s10
  $region7: #{hrnet_v3_forward.22} parent=0 // loop_footer_branch
    %9 = sbr.rel target = $region3
  $region8: #{hrnet_v3_forward.22} parent=0 // loop_exit
    _

// kernel: hrnet_v3_forward.25
$region0: #{hrnet_v3_forward.25}
  #allocation0 [shape = 'u32[]', space=smem, size = 0x4, offset = 0x4, fixed_abs, tag = 'smem constant byte address 0x4 - core index']
  #allocation1 [shape = 'u32[144,128]{1,0:T(1,128)}', space=vmem, size = 0x12000, scoped, tag = 'internal scratch']
  #allocation2 [shape = 'f32[32,128]{1,0:T(8,128)}', space=vmem, size = 0x4000, scoped, tag = 'scratch operand']
  %s0 = inlined_call_operand.vmem [shape: bf16[32,128], index: 0, kind: input, shape index: {}]
  %s1 = inlined_call_operand.vmem [shape: bf16[128,128], index: 1, kind: input, shape index: {}]
  %s2 = inlined_call_operand.vmem [shape: f32[1,128], index: 2, kind: input, shape index: {}]
  %s3 = inlined_call_operand.vmem [shape: f32[32,128], index: 3, kind: input, shape index: {}]
  %s4 = inlined_call_operand.vmem [shape: f32[32,128], index: 4, kind: output, shape index: {}]
  %s5 = sld [smem:[#allocation0]]
  $region34: #{hrnet_v3_forward.25} parent=0
    _
  %s7 = ssub.s32 1, %s5
  %s8 = scalar_select 0, %s7, %s5
  // Predicated region
  $region2: #{hrnet_v3_forward.25} parent=0 // pred_check
    _
  $region3: #{hrnet_v3_forward.25} parent=0 // pred_check_branch
    %10 = sbr.rel (0) target = $region5
  $region4: #{hrnet_v3_forward.25} parent=0 // pred_region
    _
  $region5: #{hrnet_v3_forward.25} parent=0 // pred_fallthru
    _
  // Predicated region
  $region6: #{hrnet_v3_forward.25} parent=0 // pred_check
    _
  $region7: #{hrnet_v3_forward.25} parent=0 // pred_check_branch
    %12 = sbr.rel (0) target = $region9
  $region8: #{hrnet_v3_forward.25} parent=0 // pred_region
    _
  $region9: #{hrnet_v3_forward.25} parent=0 // pred_fallthru
    _
  // Predicated region
  $region10: #{hrnet_v3_forward.25} parent=0 // pred_check
    _
  $region11: #{hrnet_v3_forward.25} parent=0 // pred_check_branch
    %14 = sbr.rel (0) target = $region13
  $region12: #{hrnet_v3_forward.25} parent=0 // pred_region
    _
  $region13: #{hrnet_v3_forward.25} parent=0 // pred_fallthru
    _
  // Predicated region
  $region14: #{hrnet_v3_forward.25} parent=0 // pred_check
    _
  $region15: #{hrnet_v3_forward.25} parent=0 // pred_check_branch
    %16 = sbr.rel (0) target = $region17
  $region16: #{hrnet_v3_forward.25} parent=0 // pred_region
    _
  $region17: #{hrnet_v3_forward.25} parent=0 // pred_fallthru
    _
  %p18 = scmp.eq.s32.totalorder 0, 0
  // Predicated region
  $region18: #{hrnet_v3_forward.25} parent=0 // pred_check
    %p19 = pneg %p18
  $region19: #{hrnet_v3_forward.25} parent=0 // pred_check_branch
    %21 = sbr.rel (%p19) target = $region21
  $region20: #{hrnet_v3_forward.25} parent=0 // pred_region
    %22 = vst [vmem:[#allocation2] sm:$0xff] 0.0
    %23 = vst [vmem:[#allocation2 + $0x8] sm:$0xff] 0.0
    %24 = vst [vmem:[#allocation2 + $0x10] sm:$0xff] 0.0
    %25 = vst [vmem:[#allocation2 + $0x18] sm:$0xff] 0.0
  $region21: #{hrnet_v3_forward.25} parent=0 // pred_fallthru
    _
  %v26 = vld [vmem:[#allocation2] sm:$0xff]
  %v27 = vld [vmem:[#allocation2 + $0x8] sm:$0xff]
  %v28 = vld [vmem:[#allocation2 + $0x10] sm:$0xff]
  %v29 = vld [vmem:[#allocation2 + $0x18] sm:$0xff]
  %v30 = vld [vmem:[%s0] sm:$0xf]
  %v31 = vld [vmem:[%s0 + $0x4] sm:$0xf]
  %v32 = vld [vmem:[%s0 + $0x8] sm:$0xf]
  %v33 = vld [vmem:[%s0 + $0xc] sm:$0xf]
  %v34 = vld [vmem:[%s1] sm:$0xf]
  %v35 = vld [vmem:[%s1 + $0x4] sm:$0xf]
  %v36 = vld [vmem:[%s1 + $0x8] sm:$0xf]
  %v37 = vld [vmem:[%s1 + $0xc] sm:$0xf]
  %v38 = vld [vmem:[%s1 + $0x10] sm:$0xf]
  %v39 = vld [vmem:[%s1 + $0x14] sm:$0xf]
  %v40 = vld [vmem:[%s1 + $0x18] sm:$0xf]
  %v41 = vld [vmem:[%s1 + $0x1c] sm:$0xf]
  %v42 = vld [vmem:[%s1 + $0x20] sm:$0xf]
  %v43 = vld [vmem:[%s1 + $0x24] sm:$0xf]
  %v44 = vld [vmem:[%s1 + $0x28] sm:$0xf]
  %v45 = vld [vmem:[%s1 + $0x2c] sm:$0xf]
  %v46 = vld [vmem:[%s1 + $0x30] sm:$0xf]
  %v47 = vld [vmem:[%s1 + $0x34] sm:$0xf]
  %v48 = vld [vmem:[%s1 + $0x38] sm:$0xf]
  %v49 = vld [vmem:[%s1 + $0x3c] sm:$0xf]
  %v54 = vunpack.c.l.b16 %v30
  %v55 = vunpack.c.l.b16 %v31
  %v56 = vunpack.c.l.b16 %v32
  %v57 = vunpack.c.l.b16 %v33
  %v58 = vpack.c.b16 %v55, %v54
  %v59 = vpack.c.b16 %v57, %v56
  %v78 = vunpack.c.l.b16 %v34
  %v79 = vunpack.c.l.b16 %v35
  %v80 = vunpack.c.l.b16 %v36
  %v81 = vunpack.c.l.b16 %v37
  %v82 = vunpack.c.l.b16 %v38
  %v83 = vunpack.c.l.b16 %v39
  %v84 = vunpack.c.l.b16 %v40
  %v85 = vunpack.c.l.b16 %v41
  %v86 = vunpack.c.l.b16 %v42
  %v87 = vunpack.c.l.b16 %v43
  %v88 = vunpack.c.l.b16 %v44
  %v89 = vunpack.c.l.b16 %v45
  %v90 = vunpack.c.l.b16 %v46
  %v91 = vunpack.c.l.b16 %v47
  %v92 = vunpack.c.l.b16 %v48
  %v93 = vunpack.c.l.b16 %v49
  %v94 = vpack.c.b16 %v79, %v78
  %v95 = vpack.c.b16 %v81, %v80
  %v96 = vpack.c.b16 %v83, %v82
  %v97 = vpack.c.b16 %v85, %v84
  %v98 = vpack.c.b16 %v87, %v86
  %v99 = vpack.c.b16 %v89, %v88
  %v100 = vpack.c.b16 %v91, %v90
  %v101 = vpack.c.b16 %v93, %v92
  %110 = vmatprep.subr.bf16.mxu0 0
  %111 = vmatpush1.bf16.msra.mxu0 %v94
  %112 = vmatprep.subr.bf16.mxu0 0
  %113 = vmatpush1.bf16.msra.mxu0 %v95
  %114 = vmatprep.subr.bf16.mxu0 0
  %115 = vmatpush1.bf16.msra.mxu0 %v96
  %116 = vmatprep.subr.bf16.mxu0 0
  %117 = vmatpush1.bf16.msra.mxu0 %v97
  %118 = vmatprep.subr.bf16.mxu0 0
  %119 = vmatpush1.bf16.msra.mxu0 %v98
  %120 = vmatprep.subr.bf16.mxu0 0
  %121 = vmatpush1.bf16.msra.mxu0 %v99
  %122 = vmatprep.subr.bf16.mxu0 0
  %123 = vmatpush1.bf16.msra.mxu0 %v100
  %124 = vmatprep.subr.bf16.mxu0 0
  %125 = vmatpush1.bf16.msra.mxu0 %v101
  %126 = vmatprep.subr.bf16.mxu0 0
  %127 = vmatpush1.bf16.msra.mxu0 0
  %128 = vmatprep.subr.bf16.mxu0 0
  %129 = vmatpush1.bf16.msra.mxu0 0
  %130 = vmatprep.subr.bf16.mxu0 0
  %131 = vmatpush1.bf16.msra.mxu0 0
  %132 = vmatprep.subr.bf16.mxu0 0
  %133 = vmatpush1.bf16.msra.mxu0 0
  %134 = vmatprep.subr.bf16.mxu0 0
  %135 = vmatpush1.bf16.msra.mxu0 0
  %136 = vmatprep.subr.bf16.mxu0 0
  %137 = vmatpush1.bf16.msra.mxu0 0
  %138 = vmatprep.subr.bf16.mxu0 0
  %139 = vmatpush1.bf16.msra.mxu0 0
  %140 = vmatprep.subr.bf16.mxu0 0
  %141 = vmatpush1.bf16.msra.mxu0 0
  %142 = vmatprep.mubr.bf16.mxu0 0
  %143 = vmatmul.mubr.bf16.gmra.mrb[0].mxu0 %v58
  %v144 = vpop.f32.mrb[0].mxu0
  %v145 = vadd.f32 0.0, %v144
  %v146 = vpop.f32.mrb[0].mxu0
  %v147 = vpop.f32.mrb[0].mxu0
  %v148 = vadd.f32 0.0, %v147
  %v149 = vpop.f32.mrb[0].mxu0
  %150 = vmatprep.mubr.bf16.mxu0 0
  %151 = vmatmul.mubr.bf16.gmra.mrb[0].mxu0 %v59
  %v152 = vpop.f32.mrb[0].mxu0
  %v153 = vadd.f32 0.0, %v152
  %v154 = vpop.f32.mrb[0].mxu0
  %v155 = vpop.f32.mrb[0].mxu0
  %v156 = vadd.f32 0.0, %v155
  %v157 = vpop.f32.mrb[0].mxu0
  %158 = vdwg.mxu0
  %v159 = vadd.f32 %v26, %v145
  %v160 = vadd.f32 %v27, %v148
  %v161 = vadd.f32 %v28, %v153
  %v162 = vadd.f32 %v29, %v156
  %163 = vst [vmem:[#allocation2] sm:$0xff] %v159
  %164 = vst [vmem:[#allocation2 + $0x8] sm:$0xff] %v160
  %165 = vst [vmem:[#allocation2 + $0x10] sm:$0xff] %v161
  %166 = vst [vmem:[#allocation2 + $0x18] sm:$0xff] %v162
  // Predicated region
  $region22: #{hrnet_v3_forward.25} parent=0 // pred_check
    %p167 = pneg %p18
  $region23: #{hrnet_v3_forward.25} parent=0 // pred_check_branch
    %169 = sbr.rel (%p167) target = $region25
  $region24: #{hrnet_v3_forward.25} parent=0 // pred_region
    %v170 = vld [vmem:[#allocation2] sm:$0xff]
    %v171 = vld [vmem:[#allocation2 + $0x8] sm:$0xff]
    %v172 = vld [vmem:[#allocation2 + $0x10] sm:$0xff]
    %v173 = vld [vmem:[#allocation2 + $0x18] sm:$0xff]
    %v174 = vld [vmem:[%s2] sm:$0x1]
    %v176 = vlaneseq
    %v177 = vshrl.u32 %v176, 7
    %v178 = vsub.s32 0, %v177
    %v179 = vrot.slane %v174, %v178
    %v181 = vadd.f32 %v170, %v179
    %v182 = vadd.f32 %v171, %v179
    %v183 = vadd.f32 %v172, %v179
    %v184 = vadd.f32 %v173, %v179
    %v185 = vld [vmem:[%s3] sm:$0xff]
    %v186 = vld [vmem:[%s3 + $0x8] sm:$0xff]
    %v187 = vld [vmem:[%s3 + $0x10] sm:$0xff]
    %v188 = vld [vmem:[%s3 + $0x18] sm:$0xff]
    %v189 = vadd.f32 %v181, %v185
    %v190 = vadd.f32 %v182, %v186
    %v191 = vadd.f32 %v183, %v187
    %v192 = vadd.f32 %v184, %v188
    %v193 = vmax.f32 %v189, 0.0
    %v194 = vmax.f32 %v190, 0.0
    %v195 = vmax.f32 %v191, 0.0
    %v196 = vmax.f32 %v192, 0.0
    %197 = vst [vmem:[%s4] sm:$0xff] %v193
    %198 = vst [vmem:[%s4 + $0x8] sm:$0xff] %v194
    %199 = vst [vmem:[%s4 + $0x10] sm:$0xff] %v195
    %200 = vst [vmem:[%s4 + $0x18] sm:$0xff] %v196
  $region25: #{hrnet_v3_forward.25} parent=0 // pred_fallthru
    _
  // Predicated region
  $region26: #{hrnet_v3_forward.25} parent=0 // pred_check
    _
  $region27: #{hrnet_v3_forward.25} parent=0 // pred_check_branch
    %202 = sbr.rel (0) target = $region29
  $region28: #{hrnet_v3_forward.25} parent=0 // pred_region
    _
  $region29: #{hrnet_v3_forward.25} parent=0 // pred_fallthru
    _
  // Predicated region
  $region30: #{hrnet_v3_forward.25} parent=0 // pred_check
    _
  $region31: #{hrnet_v3_forward.25} parent=0 // pred_check_branch
    %204 = sbr.rel (0) target = $region33
  $region32: #{hrnet_v3_forward.25} parent=0 // pred_region
    _
  $region33: #{hrnet_v3_forward.25} parent=0 // pred_fallthru
    _

// kernel: hrnet_v3_forward.27
$region0: #{hrnet_v3_forward.27}
  #allocation0 [shape = 'u32[]', space=smem, size = 0x4, offset = 0x4, fixed_abs, tag = 'smem constant byte address 0x4 - core index']
  #allocation1 [shape = 'u32[144,128]{1,0:T(1,128)}', space=vmem, size = 0x12000, scoped, tag = 'internal scratch']
  #allocation2 [shape = 's32[1]{0}', space=sflag, size = 0x4, scoped, tag = 'scoped memory for hrnet_v3_forward.27']
  #allocation3 [shape = 'u8[512]{0}', space=smem, size = 0x200, scoped, tag = 'prefetched SMEM operand 0']
  #allocation4 [shape = 'u8[512]{0}', space=smem, size = 0x200, scoped, tag = 'prefetched SMEM operand 1']
  %s0 = inlined_call_operand.vmem [shape: s32[16], index: 0, kind: input, shape index: {}]
  %s1 = inlined_call_operand.vmem [shape: s32[16], index: 1, kind: input, shape index: {}]
  %s2 = inlined_call_operand.vmem [shape: f32[2,4,4,128], index: 2, kind: input, shape index: {}, may-alias: {2,3}]
  %s3 = inlined_call_operand.vmem [shape: f32[2,4,4,128], index: 3, kind: input, shape index: {}, may-alias: {2,3}]
  %s4 = inlined_call_operand.vmem [shape: f32[16,1,128], index: 4, kind: input, shape index: {}]
  %s5 = inlined_call_operand.vmem [shape: f32[16,4], index: 5, kind: input, shape index: {}]
  %s6 = inlined_call_operand.vmem [shape: f32[2,16,16,128], index: 6, kind: output, shape index: {}]
  %s7 = sld [smem:[#allocation0]]
  $region49: #{hrnet_v3_forward.27} parent=0
    _
  %s9 = ssub.s32 1, %s7
  %s10 = scalar_select 0, %s9, %s7
  %s11 = sshll.u32 %s0, 4
  %s12 = int_to_ptr.vmem [resolvable:$true] %s11
  %14 = dma.vmem_to_smem %s12, 16, [#allocation3], [#allocation2]
  %s15 = sshll.u32 %s1, 4
  %s16 = int_to_ptr.vmem [resolvable:$true] %s15
  %18 = dma.vmem_to_smem %s16, 16, [#allocation4], [#allocation2]
  %19 = dma.done [#allocation2], 32
  %20 = sfence
  loop: start=0, step=1, limit=34
  $region2: #{hrnet_v3_forward.27} parent=0 // loop_pre_header
    _
  $region3: #{hrnet_v3_forward.27} parent=0 // loop_header
    %s22 = sphi 0, %s26
    %p23 = scmp.ge.s32.totalorder %s22, 34
    %s29 = sphi 0, %s41
    %s30 = sphi 0, %s37
    %s31 = sphi 0, %s29
    %s32 = sphi 0, %s30
    %s33 = sphi 0, %s31
    %s34 = sphi 0, %s32
    %s48 = sphi 0, %s50
    %s51 = sphi 0, %s48
    %s52 = sphi 0, %s51
    %s68 = sphi 0, %s52
    %s78 = sphi 0, %s80
    %s81 = sphi 0, %s78
    %s82 = sphi 0, %s81
    %s98 = sphi 0, %s82
    %s104 = sphi 0, %s106
    %s107 = sphi 0, %s104
    %s108 = sphi 0, %s107
    %s124 = sphi 0, %s108
    %s128 = sphi 0, %s128
    %s130 = sphi 0, %s128
    %s131 = sphi 0, %s130
    %s145 = sphi 0, %s131
    %s153 = sphi 0, %s155
    %s156 = sphi 0, %s153
    %s157 = sphi 0, %s156
    %s173 = sphi 0, %s157
  $region4: #{hrnet_v3_forward.27} parent=0 // loop_header_branch
    %25 = sbr.rel (%p23) target = $region8
  $region5: #{hrnet_v3_forward.27} parent=0 // loop_body
    %s27 = ssub.s32 %s22, 1
    %s28 = ssub.s32 %s22, 2
    %s35 = sadd.s32 1, %s30
    %p36 = scmp.ge.s32.totalorder %s35, 16
    %s37 = scalar_select %p36, 0, %s35
    %s38 = sadd.s32 1, %s29
    %s39 = scalar_select %p36, %s38, %s29
    %p40 = scmp.ge.s32.totalorder %s39, 2
    %s41 = scalar_select %p40, 0, %s39
    %s42 = sld [smem:[#allocation3 + %s30]]
    %s43 = sld [smem:[#allocation3 + %s37]]
    %s44 = ssub.s32 %s29, %s41
    %s45 = ssub.s32 %s42, %s43
    %s46 = sor.u32 %s44, %s45
    %p47 = scmp.eq.s32.totalorder %s46, 0
    %s49 = sadd.s32 %s48, 1
    %s50 = scalar_select %p47, %s48, %s49
    %p53 = pneg %p47
    %p54 = scmp.eq.s32.totalorder %s22, 31
    %p55 = por %p53, %p54
    %p56 = scmp.ne.s32.totalorder %s48, %s51
    %p57 = scmp.eq.s32.totalorder %s22, 0
    %p58 = por %p56, %p57
    %p59 = scmp.ne.s32.totalorder %s48, %s51
    %p60 = scmp.eq.s32.totalorder %s27, 31
    %p61 = por %p59, %p60
    %p62 = scmp.ne.s32.totalorder %s51, %s52
    %p63 = scmp.eq.s32.totalorder %s27, 0
    %p64 = por %p62, %p63
    %p65 = scmp.ne.s32.totalorder %s51, %s52
    %p66 = scmp.eq.s32.totalorder %s28, 31
    %p67 = por %p65, %p66
    %p69 = scmp.ne.s32.totalorder %s52, %s68
    %p70 = scmp.eq.s32.totalorder %s28, 0
    %p71 = por %p69, %p70
    %s72 = sld [smem:[#allocation4 + %s30]]
    %s73 = sld [smem:[#allocation4 + %s37]]
    %s74 = ssub.s32 %s29, %s41
    %s75 = ssub.s32 %s72, %s73
    %s76 = sor.u32 %s74, %s75
    %p77 = scmp.eq.s32.totalorder %s76, 0
    %s79 = sadd.s32 %s78, 1
    %s80 = scalar_select %p77, %s78, %s79
    %p83 = pneg %p77
    %p84 = scmp.eq.s32.totalorder %s22, 31
    %p85 = por %p83, %p84
    %p86 = scmp.ne.s32.totalorder %s78, %s81
    %p87 = scmp.eq.s32.totalorder %s22, 0
    %p88 = por %p86, %p87
    %p89 = scmp.ne.s32.totalorder %s78, %s81
    %p90 = scmp.eq.s32.totalorder %s27, 31
    %p91 = por %p89, %p90
    %p92 = scmp.ne.s32.totalorder %s81, %s82
    %p93 = scmp.eq.s32.totalorder %s27, 0
    %p94 = por %p92, %p93
    %p95 = scmp.ne.s32.totalorder %s81, %s82
    %p96 = scmp.eq.s32.totalorder %s28, 31
    %p97 = por %p95, %p96
    %p99 = scmp.ne.s32.totalorder %s82, %s98
    %p100 = scmp.eq.s32.totalorder %s28, 0
    %p101 = por %p99, %p100
    %s102 = ssub.s32 %s30, %s37
    %p103 = scmp.eq.s32.totalorder %s102, 0
    %s105 = sadd.s32 %s104, 1
    %s106 = scalar_select %p103, %s104, %s105
    %p109 = pneg %p103
    %p110 = scmp.eq.s32.totalorder %s22, 31
    %p111 = por %p109, %p110
    %p112 = scmp.ne.s32.totalorder %s104, %s107
    %p113 = scmp.eq.s32.totalorder %s22, 0
    %p114 = por %p112, %p113
    %p115 = scmp.ne.s32.totalorder %s104, %s107
    %p116 = scmp.eq.s32.totalorder %s27, 31
    %p117 = por %p115, %p116
    %p118 = scmp.ne.s32.totalorder %s107, %s108
    %p119 = scmp.eq.s32.totalorder %s27, 0
    %p120 = por %p118, %p119
    %p121 = scmp.ne.s32.totalorder %s107, %s108
    %p122 = scmp.eq.s32.totalorder %s28, 31
    %p123 = por %p121, %p122
    %p125 = scmp.ne.s32.totalorder %s108, %s124
    %p126 = scmp.eq.s32.totalorder %s28, 0
    %p127 = por %p125, %p126
    %s129 = sadd.s32 %s128, 1
    %p132 = scmp.eq.s32.totalorder %s22, 31
    %p133 = scmp.ne.s32.totalorder %s128, %s130
    %p134 = scmp.eq.s32.totalorder %s22, 0
    %p135 = por %p133, %p134
    %p136 = scmp.ne.s32.totalorder %s128, %s130
    %p137 = scmp.eq.s32.totalorder %s27, 31
    %p138 = por %p136, %p137
    %p139 = scmp.ne.s32.totalorder %s130, %s131
    %p140 = scmp.eq.s32.totalorder %s27, 0
    %p141 = por %p139, %p140
    %p142 = scmp.ne.s32.totalorder %s130, %s131
    %p143 = scmp.eq.s32.totalorder %s28, 31
    %p144 = por %p142, %p143
    %p146 = scmp.ne.s32.totalorder %s131, %s145
    %p147 = scmp.eq.s32.totalorder %s28, 0
    %p148 = por %p146, %p147
    %s149 = ssub.s32 %s29, %s41
    %s150 = ssub.s32 %s30, %s37
    %s151 = sor.u32 %s149, %s150
    %p152 = scmp.eq.s32.totalorder %s151, 0
    %s154 = sadd.s32 %s153, 1
    %s155 = scalar_select %p152, %s153, %s154
    %p158 = pneg %p152
    %p159 = scmp.eq.s32.totalorder %s22, 31
    %p160 = por %p158, %p159
    %p161 = scmp.ne.s32.totalorder %s153, %s156
    %p162 = scmp.eq.s32.totalorder %s22, 0
    %p163 = por %p161, %p162
    %p164 = scmp.ne.s32.totalorder %s153, %s156
    %p165 = scmp.eq.s32.totalorder %s27, 31
    %p166 = por %p164, %p165
    %p167 = scmp.ne.s32.totalorder %s156, %s157
    %p168 = scmp.eq.s32.totalorder %s27, 0
    %p169 = por %p167, %p168
    %p170 = scmp.ne.s32.totalorder %s156, %s157
    %p171 = scmp.eq.s32.totalorder %s28, 31
    %p172 = por %p170, %p171
    %p174 = scmp.ne.s32.totalorder %s157, %s173
    %p175 = scmp.eq.s32.totalorder %s28, 0
    %p176 = por %p174, %p175
    %p177 = scmp.le.s32.totalorder 1, %s22
    %p178 = scmp.lt.s32.totalorder %s22, 33
    %p179 = pnand %p177, %p178
    %p180 = pneg %p179
    // Predicated region
    $region9: #{hrnet_v3_forward.27} parent=5 // pred_check
      _
    $region10: #{hrnet_v3_forward.27} parent=5 // pred_check_branch
      %182 = sbr.rel (%p179) target = $region12
    $region11: #{hrnet_v3_forward.27} parent=5 // pred_region
      %s183 = ssub.s32 %s22, 1
      // Predicated region
      $region13: #{hrnet_v3_forward.27} parent=11 // pred_check
        %p184 = pneg %p141
      $region14: #{hrnet_v3_forward.27} parent=11 // pred_check_branch
        %186 = sbr.rel (%p184) target = $region16
      $region15: #{hrnet_v3_forward.27} parent=11 // pred_region
        _
      $region16: #{hrnet_v3_forward.27} parent=11 // pred_fallthru
        _
    $region12: #{hrnet_v3_forward.27} parent=5 // pred_fallthru
      _
    %p187 = scmp.lt.s32.totalorder %s22, 32
    // Predicated region
    $region17: #{hrnet_v3_forward.27} parent=5 // pred_check
      %p188 = pneg %p187
    $region18: #{hrnet_v3_forward.27} parent=5 // pred_check_branch
      %190 = sbr.rel (%p188) target = $region20
    $region19: #{hrnet_v3_forward.27} parent=5 // pred_region
      // Predicated region
      $region21: #{hrnet_v3_forward.27} parent=19 // pred_check
        %p191 = pneg %p58
      $region22: #{hrnet_v3_forward.27} parent=19 // pred_check_branch
        %193 = sbr.rel (%p191) target = $region24
      $region23: #{hrnet_v3_forward.27} parent=19 // pred_region
        %s194 = sld [smem:[#allocation3 + %s30]]
        %p195 = scmp.lt.s32.totalorder %s29, 1
        %s196 = scalar_select %p195, %s29, 1
        %p197 = scmp.lt.s32.totalorder %s194, 3
        %s198 = scalar_select %p197, %s194, 3
        %s199 = smul.addr %s196, 4
        %s200 = sadd.s32 %s198, %s199
        %s201 = smul.addr %s200, 4
        %s202 = scalar_lea.vmem %s2, %s201
        %s203 = sld [smem:[#allocation3 + %s30]]
      $region24: #{hrnet_v3_forward.27} parent=19 // pred_fallthru
        _
      // Predicated region
      $region25: #{hrnet_v3_forward.27} parent=19 // pred_check
        %p204 = pneg %p88
      $region26: #{hrnet_v3_forward.27} parent=19 // pred_check_branch
        %206 = sbr.rel (%p204) target = $region28
      $region27: #{hrnet_v3_forward.27} parent=19 // pred_region
        %s207 = sld [smem:[#allocation4 + %s30]]
        %p208 = scmp.lt.s32.totalorder %s29, 1
        %s209 = scalar_select %p208, %s29, 1
        %p210 = scmp.lt.s32.totalorder %s207, 3
        %s211 = scalar_select %p210, %s207, 3
        %s212 = smul.addr %s209, 4
        %s213 = sadd.s32 %s211, %s212
        %s214 = smul.addr %s213, 4
        %s215 = scalar_lea.vmem %s3, %s214
        %s216 = sld [smem:[#allocation4 + %s30]]
      $region28: #{hrnet_v3_forward.27} parent=19 // pred_fallthru
        _
      // Predicated region
      $region29: #{hrnet_v3_forward.27} parent=19 // pred_check
        %p217 = pneg %p114
      $region30: #{hrnet_v3_forward.27} parent=19 // pred_check_branch
        %219 = sbr.rel (%p217) target = $region32
      $region31: #{hrnet_v3_forward.27} parent=19 // pred_region
        %p220 = scmp.lt.s32.totalorder %s30, 15
        %s221 = scalar_select %p220, %s30, 15
        %s222 = scalar_lea.vmem %s4, %s221
      $region32: #{hrnet_v3_forward.27} parent=19 // pred_fallthru
        _
    $region20: #{hrnet_v3_forward.27} parent=5 // pred_fallthru
      _
    %p223 = scmp.le.s32.totalorder 1, %s22
    %p224 = scmp.lt.s32.totalorder %s22, 33
    %p225 = pnand %p223, %p224
    %p226 = pneg %p225
    // Predicated region
    $region33: #{hrnet_v3_forward.27} parent=5 // pred_check
      _
    $region34: #{hrnet_v3_forward.27} parent=5 // pred_check_branch
      %228 = sbr.rel (%p225) target = $region36
    $region35: #{hrnet_v3_forward.27} parent=5 // pred_region
      %s229 = ssub.s32 %s22, 1
      %s230 = sld [smem:[#allocation3 + %s32]]
      %p231 = scmp.lt.s32.totalorder %s31, 1
      %s232 = scalar_select %p231, %s31, 1
      %p233 = scmp.lt.s32.totalorder %s230, 3
      %s234 = scalar_select %p233, %s230, 3
      %s235 = smul.addr %s232, 4
      %s236 = sadd.s32 %s234, %s235
      %s237 = smul.addr %s236, 4
      %s238 = scalar_lea.vmem %s2, %s237
      %p239 = pneg %p64
      %p240 = pneg %p61
      %s241 = sld [smem:[#allocation4 + %s32]]
      %p242 = scmp.lt.s32.totalorder %s31, 1
      %s243 = scalar_select %p242, %s31, 1
      %p244 = scmp.lt.s32.totalorder %s241, 3
      %s245 = scalar_select %p244, %s241, 3
      %s246 = smul.addr %s243, 4
      %s247 = sadd.s32 %s245, %s246
      %s248 = smul.addr %s247, 4
      %s249 = scalar_lea.vmem %s3, %s248
      %p250 = pneg %p94
      %p251 = pneg %p91
      %p252 = scmp.lt.s32.totalorder %s32, 15
      %s253 = scalar_select %p252, %s32, 15
      %s254 = scalar_lea.vmem %s4, %s253
      %p255 = pneg %p120
      %p256 = pneg %p117
      %p257 = pneg %p141
      %p258 = pneg %p138
      %p259 = pneg %p169
      %p260 = pneg %p166
      %p261 = scmp.lt.s32.totalorder %s31, 1
      %s262 = scalar_select %p261, %s31, 1
      %p263 = scmp.lt.s32.totalorder %s32, 15
      %s264 = scalar_select %p263, %s32, 15
      %s265 = smul.addr %s264, 2
      %s266 = smul.addr %s262, 32
      %s267 = sadd.s32 %s265, %s266
      %s268 = smul.addr %s267, 8
      %s269 = scalar_lea.vmem %s6, %s268
      %s270 = sld [smem:[#allocation3 + %s32]]
      %p271 = scmp.lt.s32.totalorder %s31, 1
      %s272 = scalar_select %p271, %s31, 1
      %p273 = scmp.lt.s32.totalorder %s270, 3
      %s274 = scalar_select %p273, %s270, 3
      %s275 = smul.addr %s272, 4
      %s276 = sadd.s32 %s274, %s275
      %s277 = smul.addr %s276, 4
      %s278 = scalar_lea.vmem %s2, %s277
      %s279 = sld [smem:[#allocation3 + %s32]]
      %s280 = sld [smem:[#allocation4 + %s32]]
      %p281 = scmp.lt.s32.totalorder %s31, 1
      %s282 = scalar_select %p281, %s31, 1
      %p283 = scmp.lt.s32.totalorder %s280, 3
      %s284 = scalar_select %p283, %s280, 3
      %s285 = smul.addr %s282, 4
      %s286 = sadd.s32 %s284, %s285
      %s287 = smul.addr %s286, 4
      %s288 = scalar_lea.vmem %s3, %s287
      %s289 = sld [smem:[#allocation4 + %s32]]
      %p290 = scmp.lt.s32.totalorder %s32, 15
      %s291 = scalar_select %p290, %s32, 15
      %s292 = scalar_lea.vmem %s4, %s291
      %p293 = scmp.lt.s32.totalorder %s31, 1
      %s294 = scalar_select %p293, %s31, 1
      %p295 = scmp.lt.s32.totalorder %s32, 15
      %s296 = scalar_select %p295, %s32, 15
      %s297 = smul.addr %s296, 2
      %s298 = smul.addr %s294, 32
      %s299 = sadd.s32 %s297, %s298
      %s300 = smul.addr %s299, 8
      %s301 = scalar_lea.vmem %s6, %s300
      %v302 = vld [vmem:[%s292] sm:$0x1]
      %v303 = vld [vmem:[%s278] sm:$0xf]
      %v304 = vsub.f32 1.0, %v302
      %v306 = vlaneseq
      %v307 = vshrl.u32 %v306, 7
      %v308 = vsub.s32 0, %v307
      %v309 = vrot.slane %v304, %v308
      %310 = vset.pattern.permute.xlu0 0
      %311 = vperm.xlu0 %310, %v309
      %v312 = vpop.permute.xlu0 %311
      %v314 = vmul.f32 %v303, %v312
      %v315 = vld [vmem:[%s288] sm:$0xf]
      %v317 = vlaneseq
      %v318 = vshrl.u32 %v317, 7
      %v319 = vsub.s32 0, %v318
      %v320 = vrot.slane %v302, %v319
      %321 = vset.pattern.permute.xlu0 0
      %322 = vperm.xlu0 %321, %v320
      %v323 = vpop.permute.xlu0 %322
      %v325 = vmul.f32 %v315, %v323
      %v326 = vadd.f32 %v314, %v325
      %v327 = vld [vmem:[%s5] sm:$0xff]
      %v328 = vld [vmem:[%s5 + $0x8] sm:$0xff]
      %vm329 = vcmask 31744
      %v331 = vsel %vm329, %v327, 0
      %v334 = vsel %vm329, %v328, 0
      %vm336 = vcmask 1043456
      %v338 = vsel %vm336, %v326, 0
      %340 = vmatprep.subr.mxu0 0.0
      %341 = vmatpush1.msra.mxu0 %v338
      %342 = vmatprep.subr.mxu0 0.0
      %343 = vmatpush1.msra.mxu0 0.0
      %344 = vmatprep.subr.mxu0 0.0
      %345 = vmatpush1.msra.mxu0 0.0
      %346 = vmatprep.subr.mxu0 0.0
      %347 = vmatpush1.msra.mxu0 0.0
      %348 = vmatprep.subr.mxu0 0.0
      %349 = vmatpush1.msra.mxu0 0.0
      %350 = vmatprep.subr.mxu0 0.0
      %351 = vmatpush1.msra.mxu0 0.0
      %352 = vmatprep.subr.mxu0 0.0
      %353 = vmatpush1.msra.mxu0 0.0
      %354 = vmatprep.subr.mxu0 0.0
      %355 = vmatpush1.msra.mxu0 0.0
      %356 = vmatprep.subr.mxu0 0.0
      %357 = vmatpush1.msra.mxu0 0.0
      %358 = vmatprep.subr.mxu0 0.0
      %359 = vmatpush1.msra.mxu0 0.0
      %360 = vmatprep.subr.mxu0 0.0
      %361 = vmatpush1.msra.mxu0 0.0
      %362 = vmatprep.subr.mxu0 0.0
      %363 = vmatpush1.msra.mxu0 0.0
      %364 = vmatprep.subr.mxu0 0.0
      %365 = vmatpush1.msra.mxu0 0.0
      %366 = vmatprep.subr.mxu0 0.0
      %367 = vmatpush1.msra.mxu0 0.0
      %368 = vmatprep.subr.mxu0 0.0
      %369 = vmatpush1.msra.mxu0 0.0
      %370 = vmatprep.subr.mxu0 0.0
      %371 = vmatpush1.msra.mxu0 0.0
      %372 = vmatprep.subr.mxu0 0.0
      %373 = vmatpush1.msra.mxu0 0.0
      %374 = vmatprep.subr.mxu0 0.0
      %375 = vmatpush1.msra.mxu0 0.0
      %376 = vmatprep.subr.mxu0 0.0
      %377 = vmatpush1.msra.mxu0 0.0
      %378 = vmatprep.subr.mxu0 0.0
      %379 = vmatpush1.msra.mxu0 0.0
      %380 = vmatprep.subr.mxu0 0.0
      %381 = vmatpush1.msra.mxu0 0.0
      %382 = vmatprep.subr.mxu0 0.0
      %383 = vmatpush1.msra.mxu0 0.0
      %384 = vmatprep.subr.mxu0 0.0
      %385 = vmatpush1.msra.mxu0 0.0
      %386 = vmatprep.subr.mxu0 0.0
      %387 = vmatpush1.msra.mxu0 0.0
      %388 = vmatprep.subr.mxu0 0.0
      %389 = vmatpush1.msra.mxu0 0.0
      %390 = vmatprep.subr.mxu0 0.0
      %391 = vmatpush1.msra.mxu0 0.0
      %392 = vmatprep.subr.mxu0 0.0
      %393 = vmatpush1.msra.mxu0 0.0
      %394 = vmatprep.subr.mxu0 0.0
      %395 = vmatpush1.msra.mxu0 0.0
      %396 = vmatprep.subr.mxu0 0.0
      %397 = vmatpush1.msra.mxu0 0.0
      %398 = vmatprep.subr.mxu0 0.0
      %399 = vmatpush1.msra.mxu0 0.0
      %400 = vmatprep.subr.mxu0 0.0
      %401 = vmatpush1.msra.mxu0 0.0
      %402 = vmatprep.subr.mxu0 0.0
      %403 = vmatpush1.msra.mxu0 0.0
      %404 = vmatprep.mubr.f32.mxu0 0.0
      %405 = vmatmul.mubr.f32.gmra.mrb[0].mxu0 %v331
      %v406 = vpop.f32.mrb[0].mxu0
      %v407 = vadd.f32 0.0, %v406
      %v408 = vpop.f32.mrb[0].mxu0
      %409 = vmatprep.mubr.f32.mxu0 0.0
      %410 = vmatmul.mubr.f32.gmra.mrb[0].mxu0 %v334
      %v411 = vpop.f32.mrb[0].mxu0
      %v412 = vadd.f32 0.0, %v411
      %v413 = vpop.f32.mrb[0].mxu0
      %414 = vdwg.mxu0
      %415 = vst [vmem:[%s301] sm:$0xff] %v407
      %416 = vst [vmem:[%s301 + $0x8] sm:$0xff] %v412
      %p417 = scmp.lt.s32.totalorder %s31, 1
      %s418 = scalar_select %p417, %s31, 1
      %p419 = scmp.lt.s32.totalorder %s32, 15
      %s420 = scalar_select %p419, %s32, 15
      %s421 = smul.addr %s420, 2
      %s422 = smul.addr %s418, 32
      %s423 = sadd.s32 %s421, %s422
      %s424 = smul.addr %s423, 8
      %s425 = scalar_lea.vmem %s6, %s424
      // Predicated region
      $region37: #{hrnet_v3_forward.27} parent=35 // pred_check
        %p426 = pneg %p166
      $region38: #{hrnet_v3_forward.27} parent=35 // pred_check_branch
        %428 = sbr.rel (%p426) target = $region40
      $region39: #{hrnet_v3_forward.27} parent=35 // pred_region
        _
      $region40: #{hrnet_v3_forward.27} parent=35 // pred_fallthru
        _
    $region36: #{hrnet_v3_forward.27} parent=5 // pred_fallthru
      _
    %p429 = scmp.le.s32.totalorder 2, %s22
    // Predicated region
    $region41: #{hrnet_v3_forward.27} parent=5 // pred_check
      %p430 = pneg %p429
    $region42: #{hrnet_v3_forward.27} parent=5 // pred_check_branch
      %432 = sbr.rel (%p430) target = $region44
    $region43: #{hrnet_v3_forward.27} parent=5 // pred_region
      %s433 = ssub.s32 %s22, 2
      // Predicated region
      $region45: #{hrnet_v3_forward.27} parent=43 // pred_check
        %p434 = pneg %p172
      $region46: #{hrnet_v3_forward.27} parent=43 // pred_check_branch
        %436 = sbr.rel (%p434) target = $region48
      $region47: #{hrnet_v3_forward.27} parent=43 // pred_region
        %p437 = scmp.lt.s32.totalorder %s33, 1
        %s438 = scalar_select %p437, %s33, 1
        %p439 = scmp.lt.s32.totalorder %s34, 15
        %s440 = scalar_select %p439, %s34, 15
        %s441 = smul.addr %s440, 2
        %s442 = smul.addr %s438, 32
        %s443 = sadd.s32 %s441, %s442
        %s444 = smul.addr %s443, 8
        %s445 = scalar_lea.vmem %s6, %s444
      $region48: #{hrnet_v3_forward.27} parent=43 // pred_fallthru
        _
    $region44: #{hrnet_v3_forward.27} parent=5 // pred_fallthru
      _
  $region6: #{hrnet_v3_forward.27} parent=0 // loop_footer
    %s26 = sadd.s32 1, %s22
  $region7: #{hrnet_v3_forward.27} parent=0 // loop_footer_branch
    %21 = sbr.rel target = $region3
  $region8: #{hrnet_v3_forward.27} parent=0 // loop_exit
    _

</llo_original>
